<compile_context>
chip_gen: v5e
topology: v5e:2x2
jax: 0.10.0
libtpu: 0.0.40
codegen_flags: <defaults>
</compile_context>

<pallas_src>
import functools

import jax
import jax.numpy as jnp
from jax.experimental import pallas as pl
from jax.experimental.pallas import tpu as pltpu


def _hardswish(x):
    return x * jnp.clip(x + 3.0, 0.0, 6.0) * (1.0 / 6.0)


def _hardsigmoid(x):
    return jnp.clip(x + 3.0, 0.0, 6.0) * (1.0 / 6.0)


def _dsconv_kernel(*refs, K, stride, H, W, H_out, W_out, row_chunk, use_se,
                   mxu_dtype, nchw_out):
    """One batch element per grid step.  Input tile is NHWC."""
    if use_se:
        (x_ref, dww_ref, dws_ref, dwb_ref,
         sew1_ref, seb1_ref, sew2_ref, seb2_ref,
         pww_ref, pws_ref, pwb_ref, o_ref, xp_ref, y_ref) = refs
    else:
        (x_ref, dww_ref, dws_ref, dwb_ref,
         pww_ref, pws_ref, pwb_ref, o_ref, xp_ref, y_ref) = refs
        sew1_ref = seb1_ref = sew2_ref = seb2_ref = None

    Cin = dww_ref.shape[-1]
    p = (K - 1) // 2
    Hp, Wp = H + 2 * p, W + 2 * p
    HWo = H_out * W_out

    # ---- 1) fused zero padding into the persistent VMEM scratch.
    # Halo strips are re-zeroed every step (cheap; megacore-safe -- a
    # pl.when(program_id == 0) hoist would skip initialisation on the second
    # core when the batch axis is sharded "parallel").
    if p > 0:
        xp_ref[pl.ds(0, p), :, :] = jnp.zeros((p, Wp, Cin), jnp.float32)
        xp_ref[pl.ds(p + H, p), :, :] = jnp.zeros((p, Wp, Cin), jnp.float32)
        xp_ref[pl.ds(p, H), pl.ds(0, p), :] = jnp.zeros((H, p, Cin), jnp.float32)
        xp_ref[pl.ds(p, H), pl.ds(p + W, p), :] = jnp.zeros((H, p, Cin), jnp.float32)
    xp_ref[pl.ds(p, H), pl.ds(p, W), :] = x_ref[...].astype(jnp.float32)

    # ---- 2) depthwise KxK conv, register-blocked over output-row chunks:
    # the chunk accumulator stays in vregs across all K*K taps; BN + hardswish
    # + MXU-dtype cast are applied once per chunk and stored once. ----
    pooled_sum = jnp.zeros((Cin,), jnp.float32) if use_se else None
    for i0 in range(0, H_out, row_chunk):
        rc = min(row_chunk, H_out - i0)
        acc = jnp.zeros((rc, W_out, Cin), jnp.float32)
        for kh in range(K):
            for kw in range(K):
                if stride == 1:
                    patch = xp_ref[pl.ds(i0 + kh, rc), pl.ds(kw, W_out), :]
                else:
                    # TODO(synk): de-interleave even/odd columns during the halo
                    # copy so stride-2 tap loads become contiguous slices.
                    patch = xp_ref[pl.ds(i0 * stride + kh, rc, stride),
                                   pl.ds(kw, W_out, stride), :]
                acc = acc + patch * dww_ref[kh, kw]
        y_chunk = _hardswish(acc * dws_ref[0] + dwb_ref[0])           # f32
        if use_se:
            pooled_sum = pooled_sum + jnp.sum(y_chunk, axis=(0, 1))   # (Cin,)
        y_ref[pl.ds(i0, rc), :, :] = y_chunk.astype(y_ref.dtype)

    # ---- 3) Squeeze-and-Excite on the VPU/XLU; the per-input-channel scale is
    # folded into the pointwise weight (Cin x Cout) instead of rescaling y. ----
    if use_se:
        pooled = (pooled_sum * (1.0 / HWo))[None, :]                  # (1, Cin)
        h = jnp.sum(sew1_ref[...] * pooled, axis=1)[None, :]          # (1, Cr)
        h = jnp.maximum(h + seb1_ref[...], 0.0)
        s = _hardsigmoid(jnp.sum(sew2_ref[...] * h, axis=1) + seb2_ref[0])  # (Cin,)
        pw_eff = (pww_ref[...].astype(jnp.float32) * s[:, None]).astype(mxu_dtype)
    else:
        pw_eff = pww_ref[...]

    # ---- 4) pointwise 1x1 conv on the MXU (f32 accumulate) + BN + hardswish ----
    # TODO(synk): for W_out not a multiple of 8 (7x7 stages) this collapse needs
    # sublane movement; a lane-packed dw stage would remove it entirely.
    flat = y_ref[...].reshape(HWo, Cin)
    out = jnp.dot(flat, pw_eff, preferred_element_type=jnp.float32)   # (HWo, Cout)
    out = _hardswish(out * pws_ref[...] + pwb_ref[...])

    # ---- 5) store ----
    if nchw_out:
        # (HWo, Cout) -> (Cout, HWo): lane-dense (HWo % 128 == 0 on this path)
        # and already NCHW-ordered, so the wrapper reshape is copy-free.
        o_ref[...] = out.T.astype(o_ref.dtype)
    else:
        # Lane-sparse HWo: store NHWC-flat; the wrapper does one XLA transpose.
        o_ref[...] = out.astype(o_ref.dtype)


def depth_sep_conv_block(x_nchw, params, *, stride, dw_kernel_size, use_se,
                         pw_kernel_size=1, eps=1e-5,
                         mxu_dtype=jnp.bfloat16, io_dtype=jnp.bfloat16):
    assert pw_kernel_size == 1, "LCNet uses pw_kernel_size=1"
    N, Cin, H, W = x_nchw.shape
    K = dw_kernel_size
    p = (K - 1) // 2
    H_out = (H + 2 * p - K) // stride + 1
    W_out = (W + 2 * p - K) // stride + 1
    HWo = H_out * W_out
    Hp, Wp = H + 2 * p, W + 2 * p
    nchw_out = (HWo % 128 == 0)

    # NCHW -> NHWC so channels sit on the 128-lane axis; bf16 I/O by default.
    # (In a full LCNet stack keep activations NHWC between blocks instead.)
    x = jnp.transpose(x_nchw, (0, 2, 3, 1)).astype(io_dtype)

    # Rearrange conv weights and fold eval-mode BatchNorm into scale/bias (glue).
    dw_w = jnp.transpose(params["dw_w"][:, 0], (1, 2, 0)).astype(jnp.float32)    # (K,K,Cin)
    dw_s = (params["dw_bn_gamma"] / jnp.sqrt(params["dw_bn_var"] + eps)).astype(jnp.float32)
    dw_b = (params["dw_bn_beta"] - params["dw_bn_mean"] * dw_s).astype(jnp.float32)
    pw_w = jnp.transpose(params["pw_w"][:, :, 0, 0], (1, 0)).astype(mxu_dtype)   # (Cin,Cout)
    pw_s = (params["pw_bn_gamma"] / jnp.sqrt(params["pw_bn_var"] + eps)).astype(jnp.float32)
    pw_b = (params["pw_bn_beta"] - params["pw_bn_mean"] * pw_s).astype(jnp.float32)
    Cout = pw_w.shape[1]

    def _full(shape):
        nd = len(shape)
        return pl.BlockSpec(shape, lambda n, _nd=nd: (0,) * _nd)

    operands = [x, dw_w, dw_s[None, :], dw_b[None, :]]
    in_specs = [
        pl.BlockSpec((None, H, W, Cin), lambda n: (n, 0, 0, 0)),
        _full((K, K, Cin)),
        _full((1, Cin)), _full((1, Cin)),            # dw BN scale / bias
    ]
    if use_se:
        se_w1 = params["se_w1"][:, :, 0, 0].astype(jnp.float32)                  # (Cr,Cin)
        se_w2 = params["se_w2"][:, :, 0, 0].astype(jnp.float32)                  # (Cin,Cr)
        se_b1 = params["se_b1"][None, :].astype(jnp.float32)                     # (1,Cr)
        se_b2 = params["se_b2"][None, :].astype(jnp.float32)                     # (1,Cin)
        Cr = se_w1.shape[0]
        operands += [se_w1, se_b1, se_w2, se_b2]
        in_specs += [_full((Cr, Cin)), _full((1, Cr)),
                     _full((Cin, Cr)), _full((1, Cin))]
    operands += [pw_w, pw_s[None, :], pw_b[None, :]]
    in_specs += [_full((Cin, Cout)), _full((1, Cout)), _full((1, Cout))]

    # Register-blocking: pick an output-row chunk so accumulator + patch stay in
    # vregs (~32 vregs budget) across the K*K taps.
    vregs_per_row = max(1, -(-W_out // 8)) * max(1, -(-Cin // 128))
    row_chunk = int(max(1, min(8, H_out, 32 // vregs_per_row)))

    if nchw_out:
        out_shape = jax.ShapeDtypeStruct((N, Cout, HWo), io_dtype)
        out_spec = pl.BlockSpec((None, Cout, HWo), lambda n: (n, 0, 0))
    else:
        out_shape = jax.ShapeDtypeStruct((N, HWo, Cout), io_dtype)
        out_spec = pl.BlockSpec((None, HWo, Cout), lambda n: (n, 0, 0))

    scratch_shapes = [
        pltpu.VMEM((Hp, Wp, Cin), jnp.float32),      # zero-padded input
        pltpu.VMEM((H_out, W_out, Cin), mxu_dtype),  # post-dw activation
    ]

    # VMEM budget: double-buffered I/O blocks + params (double-buffered) +
    # scratches + compiler headroom; cap at 3/4 of per-core VMEM capacity.
    io_bytes = jnp.dtype(io_dtype).itemsize
    param_bytes = sum(int(a.size) * jnp.dtype(a.dtype).itemsize for a in operands[1:])
    est = (2 * H * W * Cin * io_bytes
           + 2 * Cout * HWo * io_bytes
           + 2 * param_bytes
           + Hp * Wp * Cin * 4
           + HWo * Cin * jnp.dtype(mxu_dtype).itemsize
           + (16 << 20))
    try:
        cap = int(pltpu.get_tpu_info().vmem_capacity_bytes) * 3 // 4
    except Exception:
        cap = 48 << 20
    vmem_limit = int(min(max(est, 32 << 20), cap))

    kernel = functools.partial(_dsconv_kernel, K=K, stride=stride, H=H, W=W,
                               H_out=H_out, W_out=W_out, row_chunk=row_chunk,
                               use_se=use_se, mxu_dtype=mxu_dtype,
                               nchw_out=nchw_out)

    out = pl.pallas_call(
        kernel,
        out_shape=out_shape,
        grid=(N,),
        in_specs=in_specs,
        out_specs=out_spec,
        scratch_shapes=scratch_shapes,
        compiler_params=pltpu.CompilerParams(
            dimension_semantics=("parallel",),
            vmem_limit_bytes=vmem_limit),
    )(*operands)

    if nchw_out:
        # (N, Cout, H*W) -> (N, Cout, H, W): contiguity-preserving, copy-free.
        return out.reshape(N, Cout, H_out, W_out)
    # Lane-sparse fallback: one XLA transpose back to NCHW.
    return jnp.transpose(out.reshape(N, H_out, W_out, Cout), (0, 3, 1, 2))


# ---------------- pure-JAX reference (for correctness check) ----------------
def reference(x, params, *, stride, K, use_se, eps=1e-5):
    p = (K - 1) // 2
    dn = ("NCHW", "OIHW", "NCHW")

    def bn(y, g, b, m, v):
        s = g / jnp.sqrt(v + eps)
        return y * s[None, :, None, None] + (b - m * s)[None, :, None, None]

    y = jax.lax.conv_general_dilated(x, params["dw_w"], (stride, stride),
                                     [(p, p), (p, p)],
                                     feature_group_count=x.shape[1],
                                     dimension_numbers=dn)
    y = _hardswish(bn(y, params["dw_bn_gamma"], params["dw_bn_beta"],
                      params["dw_bn_mean"], params["dw_bn_var"]))
    if use_se:
        pooled = jnp.mean(y, axis=(2, 3), keepdims=True)
        h = jax.lax.conv_general_dilated(pooled, params["se_w1"], (1, 1),
                                         [(0, 0), (0, 0)], dimension_numbers=dn)
        h = jnp.maximum(h + params["se_b1"][None, :, None, None], 0.0)
        s = jax.lax.conv_general_dilated(h, params["se_w2"], (1, 1),
                                         [(0, 0), (0, 0)], dimension_numbers=dn)
        s = _hardsigmoid(s + params["se_b2"][None, :, None, None])
        y = y * s
    z = jax.lax.conv_general_dilated(y, params["pw_w"], (1, 1),
                                     [(0, 0), (0, 0)], dimension_numbers=dn)
    z = _hardswish(bn(z, params["pw_bn_gamma"], params["pw_bn_beta"],
                      params["pw_bn_mean"], params["pw_bn_var"]))
    return z


if __name__ == "__main__":
    # Small config: in=8, out=16, dw 3x3 stride 1, SE reduction 4.
    N, Cin, H, W = 2, 8, 16, 16
    Cout, K, red = 16, 3, 4
    Cr = Cin // red

    keys = jax.random.split(jax.random.PRNGKey(0), 16)
    f32 = jnp.float32
    params = {
        "dw_w": 0.2 * jax.random.normal(keys[0], (Cin, 1, K, K), f32),
        "dw_bn_gamma": 1.0 + 0.1 * jax.random.normal(keys[1], (Cin,), f32),
        "dw_bn_beta": 0.1 * jax.random.normal(keys[2], (Cin,), f32),
        "dw_bn_mean": 0.1 * jax.random.normal(keys[3], (Cin,), f32),
        "dw_bn_var": jax.random.uniform(keys[4], (Cin,), f32, 0.5, 1.5),
        "se_w1": 0.2 * jax.random.normal(keys[5], (Cr, Cin, 1, 1), f32),
        "se_b1": 0.1 * jax.random.normal(keys[6], (Cr,), f32),
        "se_w2": 0.2 * jax.random.normal(keys[7], (Cin, Cr, 1, 1), f32),
        "se_b2": 0.1 * jax.random.normal(keys[8], (Cin,), f32),
        "pw_w": 0.2 * jax.random.normal(keys[9], (Cout, Cin, 1, 1), f32),
        "pw_bn_gamma": 1.0 + 0.1 * jax.random.normal(keys[10], (Cout,), f32),
        "pw_bn_beta": 0.1 * jax.random.normal(keys[11], (Cout,), f32),
        "pw_bn_mean": 0.1 * jax.random.normal(keys[12], (Cout,), f32),
        "pw_bn_var": jax.random.uniform(keys[13], (Cout,), f32, 0.5, 1.5),
    }
    x = jax.random.normal(keys[14], (N, Cin, H, W), f32)

    configs = [
        # (use_se, stride, MXU dtype, I/O dtype, tolerance vs f32 reference)
        (True, 1, jnp.bfloat16, jnp.bfloat16, 1e-1),   # default fast path (bf16 MXU + bf16 I/O)
        (True, 1, jnp.float32, jnp.float32, 5e-4),     # strict f32 numerics check
        (False, 1, jnp.bfloat16, jnp.bfloat16, 1e-1),  # SE disabled: SE operands dropped entirely
    ]
    for use_se, stride, mdt, iodt, tol in configs:
        out = depth_sep_conv_block(x, params, stride=stride, dw_kernel_size=K,
                                   use_se=use_se, mxu_dtype=mdt, io_dtype=iodt)
        out = jax.block_until_ready(out)
        ref = reference(x, params, stride=stride, K=K, use_se=use_se)
        assert out.shape == ref.shape, (out.shape, ref.shape)
        err = float(jnp.max(jnp.abs(out.astype(jnp.float32) - ref)))
        assert err < tol, (use_se, stride, str(mdt), err)
    print("KERNEL_OK")
</pallas_src>

<mosaic_0001>
module attributes {stable_mosaic.version = 11 : i64} {
  func.func @_dsconv_kernel(%arg0: i32, %arg1: memref<1x16x16x8xbf16, #tpu.memory_space<vmem>>, %arg2: memref<3x3x8xf32, #tpu.memory_space<vmem>>, %arg3: memref<1x8xf32, #tpu.memory_space<vmem>>, %arg4: memref<1x8xf32, #tpu.memory_space<vmem>>, %arg5: memref<2x8xf32, #tpu.memory_space<vmem>>, %arg6: memref<1x2xf32, #tpu.memory_space<vmem>>, %arg7: memref<8x2xf32, #tpu.memory_space<vmem>>, %arg8: memref<1x8xf32, #tpu.memory_space<vmem>>, %arg9: memref<8x16xbf16, #tpu.memory_space<vmem>>, %arg10: memref<1x16xf32, #tpu.memory_space<vmem>>, %arg11: memref<1x16xf32, #tpu.memory_space<vmem>>, %arg12: memref<1x16x256xbf16, #tpu.memory_space<vmem>>, %arg13: memref<18x18x8xf32, #tpu.memory_space<vmem>>, %arg14: memref<16x16x8xbf16, #tpu.memory_space<vmem>>) attributes {dimension_semantics = [#tpu.dimension_semantics<parallel>], iteration_bounds = array<i64: 2>, scalar_prefetch = 0 : i64, scratch_operands = 2 : i64, tpu.core_type = #tpu.core_type<tc>, window_params = [{transform_indices = @transform_0, window_bounds = array<i64: 1, 16, 16, 8>}, {pipeline_mode = #tpu.pipeline_mode<synchronous>, transform_indices = @transform_1, window_bounds = array<i64: 3, 3, 8>}, {pipeline_mode = #tpu.pipeline_mode<synchronous>, transform_indices = @transform_2, window_bounds = array<i64: 1, 8>}, {pipeline_mode = #tpu.pipeline_mode<synchronous>, transform_indices = @transform_3, window_bounds = array<i64: 1, 8>}, {pipeline_mode = #tpu.pipeline_mode<synchronous>, transform_indices = @transform_4, window_bounds = array<i64: 2, 8>}, {pipeline_mode = #tpu.pipeline_mode<synchronous>, transform_indices = @transform_5, window_bounds = array<i64: 1, 2>}, {pipeline_mode = #tpu.pipeline_mode<synchronous>, transform_indices = @transform_6, window_bounds = array<i64: 8, 2>}, {pipeline_mode = #tpu.pipeline_mode<synchronous>, transform_indices = @transform_7, window_bounds = array<i64: 1, 8>}, {pipeline_mode = #tpu.pipeline_mode<synchronous>, transform_indices = @transform_8, window_bounds = array<i64: 8, 16>}, {pipeline_mode = #tpu.pipeline_mode<synchronous>, transform_indices = @transform_9, window_bounds = array<i64: 1, 16>}, {pipeline_mode = #tpu.pipeline_mode<synchronous>, transform_indices = @transform_10, window_bounds = array<i64: 1, 16>}, {transform_indices = @transform_11, window_bounds = array<i64: 1, 16, 256>}]} {
    %cst = arith.constant 0.000000e+00 : f32
    %0 = vector.broadcast %cst : f32 to vector<1x18x8xf32>
    %c0 = arith.constant 0 : index
    %c0_0 = arith.constant 0 : index
    %c0_1 = arith.constant 0 : index
    %1 = vector.load %arg13[%c0, %c0_0, %c0_1] : memref<18x18x8xf32, #tpu.memory_space<vmem>>, vector<1x18x8xf32>
    tpu.vector_store %arg13[%c0, %c0_0, %c0_1], %0 {strides = array<i32>} : memref<18x18x8xf32, #tpu.memory_space<vmem>>, vector<1x18x8xf32>,
    %cst_2 = arith.constant 0.000000e+00 : f32
    %2 = vector.broadcast %cst_2 : f32 to vector<1x18x8xf32>
    %c17 = arith.constant 17 : index
    %c0_3 = arith.constant 0 : index
    %c0_4 = arith.constant 0 : index
    %3 = vector.load %arg13[%c17, %c0_3, %c0_4] : memref<18x18x8xf32, #tpu.memory_space<vmem>>, vector<1x18x8xf32>
    tpu.vector_store %arg13[%c17, %c0_3, %c0_4], %2 {strides = array<i32>} : memref<18x18x8xf32, #tpu.memory_space<vmem>>, vector<1x18x8xf32>,
    %cst_5 = arith.constant 0.000000e+00 : f32
    %4 = vector.broadcast %cst_5 : f32 to vector<16x1x8xf32>
    %c1 = arith.constant 1 : index
    %c0_6 = arith.constant 0 : index
    %c0_7 = arith.constant 0 : index
    %5 = vector.load %arg13[%c1, %c0_6, %c0_7] : memref<18x18x8xf32, #tpu.memory_space<vmem>>, vector<16x1x8xf32>
    tpu.vector_store %arg13[%c1, %c0_6, %c0_7], %4 {strides = array<i32>} : memref<18x18x8xf32, #tpu.memory_space<vmem>>, vector<16x1x8xf32>,
    %cst_8 = arith.constant 0.000000e+00 : f32
    %6 = vector.broadcast %cst_8 : f32 to vector<16x1x8xf32>
    %c1_9 = arith.constant 1 : index
    %c17_10 = arith.constant 17 : index
    %c0_11 = arith.constant 0 : index
    %7 = vector.load %arg13[%c1_9, %c17_10, %c0_11] : memref<18x18x8xf32, #tpu.memory_space<vmem>>, vector<16x1x8xf32>
    tpu.vector_store %arg13[%c1_9, %c17_10, %c0_11], %6 {strides = array<i32>} : memref<18x18x8xf32, #tpu.memory_space<vmem>>, vector<16x1x8xf32>,
    %c0_12 = arith.constant 0 : index
    %c0_13 = arith.constant 0 : index
    %c0_14 = arith.constant 0 : index
    %c0_15 = arith.constant 0 : index
    %8 = vector.load %arg1[%c0_12, %c0_13, %c0_14, %c0_15] : memref<1x16x16x8xbf16, #tpu.memory_space<vmem>>, vector<1x16x16x8xbf16>
    %9 = vector.shape_cast %8 : vector<1x16x16x8xbf16> to vector<16x16x8xbf16>
    %10 = arith.extf %9 : vector<16x16x8xbf16> to vector<16x16x8xf32>
    %c1_16 = arith.constant 1 : index
    %c1_17 = arith.constant 1 : index
    %c0_18 = arith.constant 0 : index
    %11 = vector.load %arg13[%c1_16, %c1_17, %c0_18] : memref<18x18x8xf32, #tpu.memory_space<vmem>>, vector<16x16x8xf32>
    tpu.vector_store %arg13[%c1_16, %c1_17, %c0_18], %10 {strides = array<i32>} : memref<18x18x8xf32, #tpu.memory_space<vmem>>, vector<16x16x8xf32>,
    %cst_19 = arith.constant 0.000000e+00 : f32
    %12 = vector.broadcast %cst_19 : f32 to vector<8xf32>
    %cst_20 = arith.constant 0.000000e+00 : f32
    %13 = vector.broadcast %cst_20 : f32 to vector<8x16x8xf32>
    %c0_21 = arith.constant 0 : index
    %c0_22 = arith.constant 0 : index
    %c0_23 = arith.constant 0 : index
    %14 = vector.load %arg13[%c0_21, %c0_22, %c0_23] : memref<18x18x8xf32, #tpu.memory_space<vmem>>, vector<8x16x8xf32>
    %c0_24 = arith.constant 0 : index
    %c0_25 = arith.constant 0 : index
    %c0_26 = arith.constant 0 : index
    %15 = vector.load %arg2[%c0_24, %c0_25, %c0_26] : memref<3x3x8xf32, #tpu.memory_space<vmem>>, vector<1x1x8xf32>
    %16 = vector.shape_cast %15 : vector<1x1x8xf32> to vector<8xf32>
    %17 = vector.shape_cast %16 : vector<8xf32> to vector<1x1x8xf32>
    %18 = vector.broadcast %17 : vector<1x1x8xf32> to vector<8x16x8xf32>
    %19 = arith.mulf %14, %18 : vector<8x16x8xf32>
    %20 = arith.addf %13, %19 : vector<8x16x8xf32>
    %c0_27 = arith.constant 0 : index
    %c1_28 = arith.constant 1 : index
    %c0_29 = arith.constant 0 : index
    %21 = vector.load %arg13[%c0_27, %c1_28, %c0_29] : memref<18x18x8xf32, #tpu.memory_space<vmem>>, vector<8x16x8xf32>
    %c0_30 = arith.constant 0 : index
    %c1_31 = arith.constant 1 : index
    %c0_32 = arith.constant 0 : index
    %22 = vector.load %arg2[%c0_30, %c1_31, %c0_32] : memref<3x3x8xf32, #tpu.memory_space<vmem>>, vector<1x1x8xf32>
    %23 = vector.shape_cast %22 : vector<1x1x8xf32> to vector<8xf32>
    %24 = vector.shape_cast %23 : vector<8xf32> to vector<1x1x8xf32>
    %25 = vector.broadcast %24 : vector<1x1x8xf32> to vector<8x16x8xf32>
    %26 = arith.mulf %21, %25 : vector<8x16x8xf32>
    %27 = arith.addf %20, %26 : vector<8x16x8xf32>
    %c0_33 = arith.constant 0 : index
    %c2 = arith.constant 2 : index
    %c0_34 = arith.constant 0 : index
    %28 = vector.load %arg13[%c0_33, %c2, %c0_34] : memref<18x18x8xf32, #tpu.memory_space<vmem>>, vector<8x16x8xf32>
    %c0_35 = arith.constant 0 : index
    %c2_36 = arith.constant 2 : index
    %c0_37 = arith.constant 0 : index
    %29 = vector.load %arg2[%c0_35, %c2_36, %c0_37] : memref<3x3x8xf32, #tpu.memory_space<vmem>>, vector<1x1x8xf32>
    %30 = vector.shape_cast %29 : vector<1x1x8xf32> to vector<8xf32>
    %31 = vector.shape_cast %30 : vector<8xf32> to vector<1x1x8xf32>
    %32 = vector.broadcast %31 : vector<1x1x8xf32> to vector<8x16x8xf32>
    %33 = arith.mulf %28, %32 : vector<8x16x8xf32>
    %34 = arith.addf %27, %33 : vector<8x16x8xf32>
    %c1_38 = arith.constant 1 : index
    %c0_39 = arith.constant 0 : index
    %c0_40 = arith.constant 0 : index
    %35 = vector.load %arg13[%c1_38, %c0_39, %c0_40] : memref<18x18x8xf32, #tpu.memory_space<vmem>>, vector<8x16x8xf32>
    %c1_41 = arith.constant 1 : index
    %c0_42 = arith.constant 0 : index
    %c0_43 = arith.constant 0 : index
    %36 = vector.load %arg2[%c1_41, %c0_42, %c0_43] : memref<3x3x8xf32, #tpu.memory_space<vmem>>, vector<1x1x8xf32>
    %37 = vector.shape_cast %36 : vector<1x1x8xf32> to vector<8xf32>
    %38 = vector.shape_cast %37 : vector<8xf32> to vector<1x1x8xf32>
    %39 = vector.broadcast %38 : vector<1x1x8xf32> to vector<8x16x8xf32>
    %40 = arith.mulf %35, %39 : vector<8x16x8xf32>
    %41 = arith.addf %34, %40 : vector<8x16x8xf32>
    %c1_44 = arith.constant 1 : index
    %c1_45 = arith.constant 1 : index
    %c0_46 = arith.constant 0 : index
    %42 = vector.load %arg13[%c1_44, %c1_45, %c0_46] : memref<18x18x8xf32, #tpu.memory_space<vmem>>, vector<8x16x8xf32>
    %c1_47 = arith.constant 1 : index
    %c1_48 = arith.constant 1 : index
    %c0_49 = arith.constant 0 : index
    %43 = vector.load %arg2[%c1_47, %c1_48, %c0_49] : memref<3x3x8xf32, #tpu.memory_space<vmem>>, vector<1x1x8xf32>
    %44 = vector.shape_cast %43 : vector<1x1x8xf32> to vector<8xf32>
    %45 = vector.shape_cast %44 : vector<8xf32> to vector<1x1x8xf32>
    %46 = vector.broadcast %45 : vector<1x1x8xf32> to vector<8x16x8xf32>
    %47 = arith.mulf %42, %46 : vector<8x16x8xf32>
    %48 = arith.addf %41, %47 : vector<8x16x8xf32>
    %c1_50 = arith.constant 1 : index
    %c2_51 = arith.constant 2 : index
    %c0_52 = arith.constant 0 : index
    %49 = vector.load %arg13[%c1_50, %c2_51, %c0_52] : memref<18x18x8xf32, #tpu.memory_space<vmem>>, vector<8x16x8xf32>
    %c1_53 = arith.constant 1 : index
    %c2_54 = arith.constant 2 : index
    %c0_55 = arith.constant 0 : index
    %50 = vector.load %arg2[%c1_53, %c2_54, %c0_55] : memref<3x3x8xf32, #tpu.memory_space<vmem>>, vector<1x1x8xf32>
    %51 = vector.shape_cast %50 : vector<1x1x8xf32> to vector<8xf32>
    %52 = vector.shape_cast %51 : vector<8xf32> to vector<1x1x8xf32>
    %53 = vector.broadcast %52 : vector<1x1x8xf32> to vector<8x16x8xf32>
    %54 = arith.mulf %49, %53 : vector<8x16x8xf32>
    %55 = arith.addf %48, %54 : vector<8x16x8xf32>
    %c2_56 = arith.constant 2 : index
    %c0_57 = arith.constant 0 : index
    %c0_58 = arith.constant 0 : index
    %56 = vector.load %arg13[%c2_56, %c0_57, %c0_58] : memref<18x18x8xf32, #tpu.memory_space<vmem>>, vector<8x16x8xf32>
    %c2_59 = arith.constant 2 : index
    %c0_60 = arith.constant 0 : index
    %c0_61 = arith.constant 0 : index
    %57 = vector.load %arg2[%c2_59, %c0_60, %c0_61] : memref<3x3x8xf32, #tpu.memory_space<vmem>>, vector<1x1x8xf32>
    %58 = vector.shape_cast %57 : vector<1x1x8xf32> to vector<8xf32>
    %59 = vector.shape_cast %58 : vector<8xf32> to vector<1x1x8xf32>
    %60 = vector.broadcast %59 : vector<1x1x8xf32> to vector<8x16x8xf32>
    %61 = arith.mulf %56, %60 : vector<8x16x8xf32>
    %62 = arith.addf %55, %61 : vector<8x16x8xf32>
    %c2_62 = arith.constant 2 : index
    %c1_63 = arith.constant 1 : index
    %c0_64 = arith.constant 0 : index
    %63 = vector.load %arg13[%c2_62, %c1_63, %c0_64] : memref<18x18x8xf32, #tpu.memory_space<vmem>>, vector<8x16x8xf32>
    %c2_65 = arith.constant 2 : index
    %c1_66 = arith.constant 1 : index
    %c0_67 = arith.constant 0 : index
    %64 = vector.load %arg2[%c2_65, %c1_66, %c0_67] : memref<3x3x8xf32, #tpu.memory_space<vmem>>, vector<1x1x8xf32>
    %65 = vector.shape_cast %64 : vector<1x1x8xf32> to vector<8xf32>
    %66 = vector.shape_cast %65 : vector<8xf32> to vector<1x1x8xf32>
    %67 = vector.broadcast %66 : vector<1x1x8xf32> to vector<8x16x8xf32>
    %68 = arith.mulf %63, %67 : vector<8x16x8xf32>
    %69 = arith.addf %62, %68 : vector<8x16x8xf32>
    %c2_68 = arith.constant 2 : index
    %c2_69 = arith.constant 2 : index
    %c0_70 = arith.constant 0 : index
    %70 = vector.load %arg13[%c2_68, %c2_69, %c0_70] : memref<18x18x8xf32, #tpu.memory_space<vmem>>, vector<8x16x8xf32>
    %c2_71 = arith.constant 2 : index
    %c2_72 = arith.constant 2 : index
    %c0_73 = arith.constant 0 : index
    %71 = vector.load %arg2[%c2_71, %c2_72, %c0_73] : memref<3x3x8xf32, #tpu.memory_space<vmem>>, vector<1x1x8xf32>
    %72 = vector.shape_cast %71 : vector<1x1x8xf32> to vector<8xf32>
    %73 = vector.shape_cast %72 : vector<8xf32> to vector<1x1x8xf32>
    %74 = vector.broadcast %73 : vector<1x1x8xf32> to vector<8x16x8xf32>
    %75 = arith.mulf %70, %74 : vector<8x16x8xf32>
    %76 = arith.addf %69, %75 : vector<8x16x8xf32>
    %c0_74 = arith.constant 0 : index
    %c0_75 = arith.constant 0 : index
    %77 = vector.load %arg3[%c0_74, %c0_75] : memref<1x8xf32, #tpu.memory_space<vmem>>, vector<1x8xf32>
    %78 = vector.shape_cast %77 : vector<1x8xf32> to vector<8xf32>
    %79 = vector.shape_cast %78 : vector<8xf32> to vector<1x1x8xf32>
    %80 = vector.broadcast %79 : vector<1x1x8xf32> to vector<8x16x8xf32>
    %81 = arith.mulf %76, %80 : vector<8x16x8xf32>
    %c0_76 = arith.constant 0 : index
    %c0_77 = arith.constant 0 : index
    %82 = vector.load %arg4[%c0_76, %c0_77] : memref<1x8xf32, #tpu.memory_space<vmem>>, vector<1x8xf32>
    %83 = vector.shape_cast %82 : vector<1x8xf32> to vector<8xf32>
    %84 = vector.shape_cast %83 : vector<8xf32> to vector<1x1x8xf32>
    %85 = vector.broadcast %84 : vector<1x1x8xf32> to vector<8x16x8xf32>
    %86 = arith.addf %81, %85 : vector<8x16x8xf32>
    %cst_78 = arith.constant 3.000000e+00 : f32
    %87 = vector.broadcast %cst_78 : f32 to vector<8x16x8xf32>
    %88 = arith.addf %86, %87 : vector<8x16x8xf32>
    %cst_79 = arith.constant 0.000000e+00 : f32
    %cst_80 = arith.constant 6.000000e+00 : f32
    %89 = vector.broadcast %cst_79 : f32 to vector<8x16x8xf32>
    %90 = arith.maximumf %89, %88 : vector<8x16x8xf32>
    %91 = vector.broadcast %cst_80 : f32 to vector<8x16x8xf32>
    %92 = arith.minimumf %91, %90 : vector<8x16x8xf32>
    %93 = arith.mulf %86, %92 : vector<8x16x8xf32>
    %cst_81 = arith.constant 0.166666672 : f32
    %94 = vector.broadcast %cst_81 : f32 to vector<8x16x8xf32>
    %95 = arith.mulf %93, %94 : vector<8x16x8xf32>
    %cst_82 = arith.constant dense<0.000000e+00> : vector<8xf32>
    %96 = vector.multi_reduction <add>, %95, %cst_82 [0, 1] : vector<8x16x8xf32> to vector<8xf32>
    %97 = arith.addf %12, %96 : vector<8xf32>
    %98 = arith.truncf %95 : vector<8x16x8xf32> to vector<8x16x8xbf16>
    %c0_83 = arith.constant 0 : index
    %c0_84 = arith.constant 0 : index
    %c0_85 = arith.constant 0 : index
    %99 = vector.load %arg14[%c0_83, %c0_84, %c0_85] : memref<16x16x8xbf16, #tpu.memory_space<vmem>>, vector<8x16x8xbf16>
    tpu.vector_store %arg14[%c0_83, %c0_84, %c0_85], %98 {strides = array<i32>} : memref<16x16x8xbf16, #tpu.memory_space<vmem>>, vector<8x16x8xbf16>,
    %cst_86 = arith.constant 0.000000e+00 : f32
    %100 = vector.broadcast %cst_86 : f32 to vector<8x16x8xf32>
    %c8 = arith.constant 8 : index
    %c0_87 = arith.constant 0 : index
    %c0_88 = arith.constant 0 : index
    %101 = vector.load %arg13[%c8, %c0_87, %c0_88] : memref<18x18x8xf32, #tpu.memory_space<vmem>>, vector<8x16x8xf32>
    %c0_89 = arith.constant 0 : index
    %c0_90 = arith.constant 0 : index
    %c0_91 = arith.constant 0 : index
    %102 = vector.load %arg2[%c0_89, %c0_90, %c0_91] : memref<3x3x8xf32, #tpu.memory_space<vmem>>, vector<1x1x8xf32>
    %103 = vector.shape_cast %102 : vector<1x1x8xf32> to vector<8xf32>
    %104 = vector.shape_cast %103 : vector<8xf32> to vector<1x1x8xf32>
    %105 = vector.broadcast %104 : vector<1x1x8xf32> to vector<8x16x8xf32>
    %106 = arith.mulf %101, %105 : vector<8x16x8xf32>
    %107 = arith.addf %100, %106 : vector<8x16x8xf32>
    %c8_92 = arith.constant 8 : index
    %c1_93 = arith.constant 1 : index
    %c0_94 = arith.constant 0 : index
    %108 = vector.load %arg13[%c8_92, %c1_93, %c0_94] : memref<18x18x8xf32, #tpu.memory_space<vmem>>, vector<8x16x8xf32>
    %c0_95 = arith.constant 0 : index
    %c1_96 = arith.constant 1 : index
    %c0_97 = arith.constant 0 : index
    %109 = vector.load %arg2[%c0_95, %c1_96, %c0_97] : memref<3x3x8xf32, #tpu.memory_space<vmem>>, vector<1x1x8xf32>
    %110 = vector.shape_cast %109 : vector<1x1x8xf32> to vector<8xf32>
    %111 = vector.shape_cast %110 : vector<8xf32> to vector<1x1x8xf32>
    %112 = vector.broadcast %111 : vector<1x1x8xf32> to vector<8x16x8xf32>
    %113 = arith.mulf %108, %112 : vector<8x16x8xf32>
    %114 = arith.addf %107, %113 : vector<8x16x8xf32>
    %c8_98 = arith.constant 8 : index
    %c2_99 = arith.constant 2 : index
    %c0_100 = arith.constant 0 : index
    %115 = vector.load %arg13[%c8_98, %c2_99, %c0_100] : memref<18x18x8xf32, #tpu.memory_space<vmem>>, vector<8x16x8xf32>
    %c0_101 = arith.constant 0 : index
    %c2_102 = arith.constant 2 : index
    %c0_103 = arith.constant 0 : index
    %116 = vector.load %arg2[%c0_101, %c2_102, %c0_103] : memref<3x3x8xf32, #tpu.memory_space<vmem>>, vector<1x1x8xf32>
    %117 = vector.shape_cast %116 : vector<1x1x8xf32> to vector<8xf32>
    %118 = vector.shape_cast %117 : vector<8xf32> to vector<1x1x8xf32>
    %119 = vector.broadcast %118 : vector<1x1x8xf32> to vector<8x16x8xf32>
    %120 = arith.mulf %115, %119 : vector<8x16x8xf32>
    %121 = arith.addf %114, %120 : vector<8x16x8xf32>
    %c9 = arith.constant 9 : index
    %c0_104 = arith.constant 0 : index
    %c0_105 = arith.constant 0 : index
    %122 = vector.load %arg13[%c9, %c0_104, %c0_105] : memref<18x18x8xf32, #tpu.memory_space<vmem>>, vector<8x16x8xf32>
    %c1_106 = arith.constant 1 : index
    %c0_107 = arith.constant 0 : index
    %c0_108 = arith.constant 0 : index
    %123 = vector.load %arg2[%c1_106, %c0_107, %c0_108] : memref<3x3x8xf32, #tpu.memory_space<vmem>>, vector<1x1x8xf32>
    %124 = vector.shape_cast %123 : vector<1x1x8xf32> to vector<8xf32>
    %125 = vector.shape_cast %124 : vector<8xf32> to vector<1x1x8xf32>
    %126 = vector.broadcast %125 : vector<1x1x8xf32> to vector<8x16x8xf32>
    %127 = arith.mulf %122, %126 : vector<8x16x8xf32>
    %128 = arith.addf %121, %127 : vector<8x16x8xf32>
    %c9_109 = arith.constant 9 : index
    %c1_110 = arith.constant 1 : index
    %c0_111 = arith.constant 0 : index
    %129 = vector.load %arg13[%c9_109, %c1_110, %c0_111] : memref<18x18x8xf32, #tpu.memory_space<vmem>>, vector<8x16x8xf32>
    %c1_112 = arith.constant 1 : index
    %c1_113 = arith.constant 1 : index
    %c0_114 = arith.constant 0 : index
    %130 = vector.load %arg2[%c1_112, %c1_113, %c0_114] : memref<3x3x8xf32, #tpu.memory_space<vmem>>, vector<1x1x8xf32>
    %131 = vector.shape_cast %130 : vector<1x1x8xf32> to vector<8xf32>
    %132 = vector.shape_cast %131 : vector<8xf32> to vector<1x1x8xf32>
    %133 = vector.broadcast %132 : vector<1x1x8xf32> to vector<8x16x8xf32>
    %134 = arith.mulf %129, %133 : vector<8x16x8xf32>
    %135 = arith.addf %128, %134 : vector<8x16x8xf32>
    %c9_115 = arith.constant 9 : index
    %c2_116 = arith.constant 2 : index
    %c0_117 = arith.constant 0 : index
    %136 = vector.load %arg13[%c9_115, %c2_116, %c0_117] : memref<18x18x8xf32, #tpu.memory_space<vmem>>, vector<8x16x8xf32>
    %c1_118 = arith.constant 1 : index
    %c2_119 = arith.constant 2 : index
    %c0_120 = arith.constant 0 : index
    %137 = vector.load %arg2[%c1_118, %c2_119, %c0_120] : memref<3x3x8xf32, #tpu.memory_space<vmem>>, vector<1x1x8xf32>
    %138 = vector.shape_cast %137 : vector<1x1x8xf32> to vector<8xf32>
    %139 = vector.shape_cast %138 : vector<8xf32> to vector<1x1x8xf32>
    %140 = vector.broadcast %139 : vector<1x1x8xf32> to vector<8x16x8xf32>
    %141 = arith.mulf %136, %140 : vector<8x16x8xf32>
    %142 = arith.addf %135, %141 : vector<8x16x8xf32>
    %c10 = arith.constant 10 : index
    %c0_121 = arith.constant 0 : index
    %c0_122 = arith.constant 0 : index
    %143 = vector.load %arg13[%c10, %c0_121, %c0_122] : memref<18x18x8xf32, #tpu.memory_space<vmem>>, vector<8x16x8xf32>
    %c2_123 = arith.constant 2 : index
    %c0_124 = arith.constant 0 : index
    %c0_125 = arith.constant 0 : index
    %144 = vector.load %arg2[%c2_123, %c0_124, %c0_125] : memref<3x3x8xf32, #tpu.memory_space<vmem>>, vector<1x1x8xf32>
    %145 = vector.shape_cast %144 : vector<1x1x8xf32> to vector<8xf32>
    %146 = vector.shape_cast %145 : vector<8xf32> to vector<1x1x8xf32>
    %147 = vector.broadcast %146 : vector<1x1x8xf32> to vector<8x16x8xf32>
    %148 = arith.mulf %143, %147 : vector<8x16x8xf32>
    %149 = arith.addf %142, %148 : vector<8x16x8xf32>
    %c10_126 = arith.constant 10 : index
    %c1_127 = arith.constant 1 : index
    %c0_128 = arith.constant 0 : index
    %150 = vector.load %arg13[%c10_126, %c1_127, %c0_128] : memref<18x18x8xf32, #tpu.memory_space<vmem>>, vector<8x16x8xf32>
    %c2_129 = arith.constant 2 : index
    %c1_130 = arith.constant 1 : index
    %c0_131 = arith.constant 0 : index
    %151 = vector.load %arg2[%c2_129, %c1_130, %c0_131] : memref<3x3x8xf32, #tpu.memory_space<vmem>>, vector<1x1x8xf32>
    %152 = vector.shape_cast %151 : vector<1x1x8xf32> to vector<8xf32>
    %153 = vector.shape_cast %152 : vector<8xf32> to vector<1x1x8xf32>
    %154 = vector.broadcast %153 : vector<1x1x8xf32> to vector<8x16x8xf32>
    %155 = arith.mulf %150, %154 : vector<8x16x8xf32>
    %156 = arith.addf %149, %155 : vector<8x16x8xf32>
    %c10_132 = arith.constant 10 : index
    %c2_133 = arith.constant 2 : index
    %c0_134 = arith.constant 0 : index
    %157 = vector.load %arg13[%c10_132, %c2_133, %c0_134] : memref<18x18x8xf32, #tpu.memory_space<vmem>>, vector<8x16x8xf32>
    %c2_135 = arith.constant 2 : index
    %c2_136 = arith.constant 2 : index
    %c0_137 = arith.constant 0 : index
    %158 = vector.load %arg2[%c2_135, %c2_136, %c0_137] : memref<3x3x8xf32, #tpu.memory_space<vmem>>, vector<1x1x8xf32>
    %159 = vector.shape_cast %158 : vector<1x1x8xf32> to vector<8xf32>
    %160 = vector.shape_cast %159 : vector<8xf32> to vector<1x1x8xf32>
    %161 = vector.broadcast %160 : vector<1x1x8xf32> to vector<8x16x8xf32>
    %162 = arith.mulf %157, %161 : vector<8x16x8xf32>
    %163 = arith.addf %156, %162 : vector<8x16x8xf32>
    %c0_138 = arith.constant 0 : index
    %c0_139 = arith.constant 0 : index
    %164 = vector.load %arg3[%c0_138, %c0_139] : memref<1x8xf32, #tpu.memory_space<vmem>>, vector<1x8xf32>
    %165 = vector.shape_cast %164 : vector<1x8xf32> to vector<8xf32>
    %166 = vector.shape_cast %165 : vector<8xf32> to vector<1x1x8xf32>
    %167 = vector.broadcast %166 : vector<1x1x8xf32> to vector<8x16x8xf32>
    %168 = arith.mulf %163, %167 : vector<8x16x8xf32>
    %c0_140 = arith.constant 0 : index
    %c0_141 = arith.constant 0 : index
    %169 = vector.load %arg4[%c0_140, %c0_141] : memref<1x8xf32, #tpu.memory_space<vmem>>, vector<1x8xf32>
    %170 = vector.shape_cast %169 : vector<1x8xf32> to vector<8xf32>
    %171 = vector.shape_cast %170 : vector<8xf32> to vector<1x1x8xf32>
    %172 = vector.broadcast %171 : vector<1x1x8xf32> to vector<8x16x8xf32>
    %173 = arith.addf %168, %172 : vector<8x16x8xf32>
    %cst_142 = arith.constant 3.000000e+00 : f32
    %174 = vector.broadcast %cst_142 : f32 to vector<8x16x8xf32>
    %175 = arith.addf %173, %174 : vector<8x16x8xf32>
    %cst_143 = arith.constant 0.000000e+00 : f32
    %cst_144 = arith.constant 6.000000e+00 : f32
    %176 = vector.broadcast %cst_143 : f32 to vector<8x16x8xf32>
    %177 = arith.maximumf %176, %175 : vector<8x16x8xf32>
    %178 = vector.broadcast %cst_144 : f32 to vector<8x16x8xf32>
    %179 = arith.minimumf %178, %177 : vector<8x16x8xf32>
    %180 = arith.mulf %173, %179 : vector<8x16x8xf32>
    %cst_145 = arith.constant 0.166666672 : f32
    %181 = vector.broadcast %cst_145 : f32 to vector<8x16x8xf32>
    %182 = arith.mulf %180, %181 : vector<8x16x8xf32>
    %cst_146 = arith.constant dense<0.000000e+00> : vector<8xf32>
    %183 = vector.multi_reduction <add>, %182, %cst_146 [0, 1] : vector<8x16x8xf32> to vector<8xf32>
    %184 = arith.addf %97, %183 : vector<8xf32>
    %185 = arith.truncf %182 : vector<8x16x8xf32> to vector<8x16x8xbf16>
    %c8_147 = arith.constant 8 : index
    %c0_148 = arith.constant 0 : index
    %c0_149 = arith.constant 0 : index
    %186 = vector.load %arg14[%c8_147, %c0_148, %c0_149] : memref<16x16x8xbf16, #tpu.memory_space<vmem>>, vector<8x16x8xbf16>
    tpu.vector_store %arg14[%c8_147, %c0_148, %c0_149], %185 {strides = array<i32>} : memref<16x16x8xbf16, #tpu.memory_space<vmem>>, vector<8x16x8xbf16>,
    %cst_150 = arith.constant 3.906250e-03 : f32
    %187 = vector.broadcast %cst_150 : f32 to vector<8xf32>
    %188 = arith.mulf %184, %187 : vector<8xf32>
    %189 = vector.shape_cast %188 : vector<8xf32> to vector<1x8xf32>
    %c0_151 = arith.constant 0 : index
    %c0_152 = arith.constant 0 : index
    %190 = vector.load %arg5[%c0_151, %c0_152] : memref<2x8xf32, #tpu.memory_space<vmem>>, vector<2x8xf32>
    %191 = vector.broadcast %189 : vector<1x8xf32> to vector<2x8xf32>
    %192 = arith.mulf %190, %191 : vector<2x8xf32>
    %cst_153 = arith.constant dense<0.000000e+00> : vector<2xf32>
    %193 = vector.multi_reduction <add>, %192, %cst_153 [1] : vector<2x8xf32> to vector<2xf32>
    %194 = vector.shape_cast %193 : vector<2xf32> to vector<1x2xf32>
    %c0_154 = arith.constant 0 : index
    %c0_155 = arith.constant 0 : index
    %195 = vector.load %arg6[%c0_154, %c0_155] : memref<1x2xf32, #tpu.memory_space<vmem>>, vector<1x2xf32>
    %196 = arith.addf %194, %195 : vector<1x2xf32>
    %cst_156 = arith.constant 0.000000e+00 : f32
    %197 = vector.broadcast %cst_156 : f32 to vector<1x2xf32>
    %198 = arith.maximumf %196, %197 : vector<1x2xf32>
    %c0_157 = arith.constant 0 : index
    %c0_158 = arith.constant 0 : index
    %199 = vector.load %arg7[%c0_157, %c0_158] : memref<8x2xf32, #tpu.memory_space<vmem>>, vector<8x2xf32>
    %200 = vector.broadcast %198 : vector<1x2xf32> to vector<8x2xf32>
    %201 = arith.mulf %199, %200 : vector<8x2xf32>
    %cst_159 = arith.constant dense<0.000000e+00> : vector<8xf32>
    %202 = vector.multi_reduction <add>, %201, %cst_159 [1] : vector<8x2xf32> to vector<8xf32>
    %c0_160 = arith.constant 0 : index
    %c0_161 = arith.constant 0 : index
    %203 = vector.load %arg8[%c0_160, %c0_161] : memref<1x8xf32, #tpu.memory_space<vmem>>, vector<1x8xf32>
    %204 = vector.shape_cast %203 : vector<1x8xf32> to vector<8xf32>
    %205 = arith.addf %202, %204 : vector<8xf32>
    %cst_162 = arith.constant 3.000000e+00 : f32
    %206 = vector.broadcast %cst_162 : f32 to vector<8xf32>
    %207 = arith.addf %205, %206 : vector<8xf32>
    %cst_163 = arith.constant 0.000000e+00 : f32
    %cst_164 = arith.constant 6.000000e+00 : f32
    %208 = vector.broadcast %cst_163 : f32 to vector<8xf32>
    %209 = arith.maximumf %208, %207 : vector<8xf32>
    %210 = vector.broadcast %cst_164 : f32 to vector<8xf32>
    %211 = arith.minimumf %210, %209 : vector<8xf32>
    %cst_165 = arith.constant 0.166666672 : f32
    %212 = vector.broadcast %cst_165 : f32 to vector<8xf32>
    %213 = arith.mulf %211, %212 : vector<8xf32>
    %c0_166 = arith.constant 0 : index
    %c0_167 = arith.constant 0 : index
    %214 = vector.load %arg9[%c0_166, %c0_167] : memref<8x16xbf16, #tpu.memory_space<vmem>>, vector<8x16xbf16>
    %215 = arith.extf %214 : vector<8x16xbf16> to vector<8x16xf32>
    %216 = vector.shape_cast %213 : vector<8xf32> to vector<8x1xf32>
    %217 = vector.broadcast %216 : vector<8x1xf32> to vector<8x16xf32>
    %218 = arith.mulf %215, %217 : vector<8x16xf32>
    %219 = arith.truncf %218 : vector<8x16xf32> to vector<8x16xbf16>
    %c0_168 = arith.constant 0 : index
    %c0_169 = arith.constant 0 : index
    %c0_170 = arith.constant 0 : index
    %220 = vector.load %arg14[%c0_168, %c0_169, %c0_170] : memref<16x16x8xbf16, #tpu.memory_space<vmem>>, vector<16x16x8xbf16>
    %221 = vector.shape_cast %220 : vector<16x16x8xbf16> to vector<256x8xbf16>
    %cst_171 = arith.constant dense<0.000000e+00> : vector<256x16xf32>
    %222 = tpu.matmul %221, %219, %cst_171 {dimension_numbers = #tpu.dot_dimension_numbers<[1], [0], [0], [1], [0, 0, 1, 1], [], []>} : vector<256x8xbf16>, vector<8x16xbf16>, vector<256x16xf32> -> vector<256x16xf32>
    %c0_172 = arith.constant 0 : index
    %c0_173 = arith.constant 0 : index
    %223 = vector.load %arg10[%c0_172, %c0_173] : memref<1x16xf32, #tpu.memory_space<vmem>>, vector<1x16xf32>
    %224 = vector.broadcast %223 : vector<1x16xf32> to vector<256x16xf32>
    %225 = arith.mulf %222, %224 : vector<256x16xf32>
    %c0_174 = arith.constant 0 : index
    %c0_175 = arith.constant 0 : index
    %226 = vector.load %arg11[%c0_174, %c0_175] : memref<1x16xf32, #tpu.memory_space<vmem>>, vector<1x16xf32>
    %227 = vector.broadcast %226 : vector<1x16xf32> to vector<256x16xf32>
    %228 = arith.addf %225, %227 : vector<256x16xf32>
    %cst_176 = arith.constant 3.000000e+00 : f32
    %229 = vector.broadcast %cst_176 : f32 to vector<256x16xf32>
    %230 = arith.addf %228, %229 : vector<256x16xf32>
    %cst_177 = arith.constant 0.000000e+00 : f32
    %cst_178 = arith.constant 6.000000e+00 : f32
    %231 = vector.broadcast %cst_177 : f32 to vector<256x16xf32>
    %232 = arith.maximumf %231, %230 : vector<256x16xf32>
    %233 = vector.broadcast %cst_178 : f32 to vector<256x16xf32>
    %234 = arith.minimumf %233, %232 : vector<256x16xf32>
    %235 = arith.mulf %228, %234 : vector<256x16xf32>
    %cst_179 = arith.constant 0.166666672 : f32
    %236 = vector.broadcast %cst_179 : f32 to vector<256x16xf32>
    %237 = arith.mulf %235, %236 : vector<256x16xf32>
    %238 = tpu.transpose %237, [1, 0] : vector<256x16xf32> -> vector<16x256xf32>
    %239 = arith.truncf %238 : vector<16x256xf32> to vector<16x256xbf16>
    %c0_180 = arith.constant 0 : index
    %c0_181 = arith.constant 0 : index
    %c0_182 = arith.constant 0 : index
    %240 = vector.load %arg12[%c0_180, %c0_181, %c0_182] : memref<1x16x256xbf16, #tpu.memory_space<vmem>>, vector<1x16x256xbf16>
    %241 = vector.shape_cast %240 : vector<1x16x256xbf16> to vector<16x256xbf16>
    %242 = vector.shape_cast %239 : vector<16x256xbf16> to vector<1x16x256xbf16>
    tpu.vector_store %arg12[%c0_180, %c0_181, %c0_182], %242 {strides = array<i32>} : memref<1x16x256xbf16, #tpu.memory_space<vmem>>, vector<1x16x256xbf16>,
    return
  }
  func.func @transform_0(%arg0: i32) -> (i32, i32, i32, i32) {
    %c0_i32 = arith.constant 0 : i32
    %c0_i32_0 = arith.constant 0 : i32
    %c0_i32_1 = arith.constant 0 : i32
    %c0_i32_2 = arith.constant 0 : i32
    return %arg0, %c0_i32, %c0_i32_0, %c0_i32_1 : i32, i32, i32, i32
  }
  func.func @transform_1(%arg0: i32) -> (i32, i32, i32) {
    %c0_i32 = arith.constant 0 : i32
    %c0_i32_0 = arith.constant 0 : i32
    %c0_i32_1 = arith.constant 0 : i32
    %c0_i32_2 = arith.constant 0 : i32
    return %c0_i32, %c0_i32_0, %c0_i32_1 : i32, i32, i32
  }
  func.func @transform_2(%arg0: i32) -> (i32, i32) {
    %c0_i32 = arith.constant 0 : i32
    %c0_i32_0 = arith.constant 0 : i32
    %c0_i32_1 = arith.constant 0 : i32
    return %c0_i32, %c0_i32_0 : i32, i32
  }
  func.func @transform_3(%arg0: i32) -> (i32, i32) {
    %c0_i32 = arith.constant 0 : i32
    %c0_i32_0 = arith.constant 0 : i32
    %c0_i32_1 = arith.constant 0 : i32
    return %c0_i32, %c0_i32_0 : i32, i32
  }
  func.func @transform_4(%arg0: i32) -> (i32, i32) {
    %c0_i32 = arith.constant 0 : i32
    %c0_i32_0 = arith.constant 0 : i32
    %c0_i32_1 = arith.constant 0 : i32
    return %c0_i32, %c0_i32_0 : i32, i32
  }
  func.func @transform_5(%arg0: i32) -> (i32, i32) {
    %c0_i32 = arith.constant 0 : i32
    %c0_i32_0 = arith.constant 0 : i32
    %c0_i32_1 = arith.constant 0 : i32
    return %c0_i32, %c0_i32_0 : i32, i32
  }
  func.func @transform_6(%arg0: i32) -> (i32, i32) {
    %c0_i32 = arith.constant 0 : i32
    %c0_i32_0 = arith.constant 0 : i32
    %c0_i32_1 = arith.constant 0 : i32
    return %c0_i32, %c0_i32_0 : i32, i32
  }
  func.func @transform_7(%arg0: i32) -> (i32, i32) {
    %c0_i32 = arith.constant 0 : i32
    %c0_i32_0 = arith.constant 0 : i32
    %c0_i32_1 = arith.constant 0 : i32
    return %c0_i32, %c0_i32_0 : i32, i32
  }
  func.func @transform_8(%arg0: i32) -> (i32, i32) {
    %c0_i32 = arith.constant 0 : i32
    %c0_i32_0 = arith.constant 0 : i32
    %c0_i32_1 = arith.constant 0 : i32
    return %c0_i32, %c0_i32_0 : i32, i32
  }
  func.func @transform_9(%arg0: i32) -> (i32, i32) {
    %c0_i32 = arith.constant 0 : i32
    %c0_i32_0 = arith.constant 0 : i32
    %c0_i32_1 = arith.constant 0 : i32
    return %c0_i32, %c0_i32_0 : i32, i32
  }
  func.func @transform_10(%arg0: i32) -> (i32, i32) {
    %c0_i32 = arith.constant 0 : i32
    %c0_i32_0 = arith.constant 0 : i32
    %c0_i32_1 = arith.constant 0 : i32
    return %c0_i32, %c0_i32_0 : i32, i32
  }
  func.func @transform_11(%arg0: i32) -> (i32, i32, i32) {
    %c0_i32 = arith.constant 0 : i32
    %c0_i32_0 = arith.constant 0 : i32
    %c0_i32_1 = arith.constant 0 : i32
    return %arg0, %c0_i32, %c0_i32_0 : i32, i32, i32
  }
}

</mosaic_0001>

<llo_original>
// kernel: tpu_custom_call.1
$region0: #{tpu_custom_call.1}
  #allocation0 [shape = 'u32[]', space=smem, size = 0x4, offset = 0x4, fixed_abs, tag = 'smem constant byte address 0x4 - core index']
  #allocation1 [shape = 'u32[72,128]{1,0:T(1,128)}', space=vmem, size = 0x9000, scoped, tag = 'internal scratch']
  #allocation2 [shape = 'f32[18,18,8]{2,1,0:T(8,128)}', space=vmem, size = 0x36000, scoped, tag = 'scratch operand']
  #allocation3 [shape = 'bf16[16,16,8]{2,1,0:T(8,128)(2,1)}', space=vmem, size = 0x10000, scoped, tag = 'scratch operand']
  %s0 = inlined_call_operand.vmem [shape: bf16[2,16,16,8], index: 0, kind: input, shape index: {}]
  %s1 = inlined_call_operand.vmem [shape: f32[3,3,8], index: 1, kind: input, shape index: {}]
  %s2 = inlined_call_operand.vmem [shape: f32[1,8], index: 2, kind: input, shape index: {}]
  %s3 = inlined_call_operand.vmem [shape: f32[1,8], index: 3, kind: input, shape index: {}]
  %s4 = inlined_call_operand.vmem [shape: f32[2,8], index: 4, kind: input, shape index: {}]
  %s5 = inlined_call_operand.vmem [shape: f32[1,2], index: 5, kind: input, shape index: {}]
  %s6 = inlined_call_operand.vmem [shape: f32[8,2], index: 6, kind: input, shape index: {}]
  %s7 = inlined_call_operand.vmem [shape: f32[1,8], index: 7, kind: input, shape index: {}]
  %s8 = inlined_call_operand.vmem [shape: bf16[8,16], index: 8, kind: input, shape index: {}]
  %s9 = inlined_call_operand.vmem [shape: f32[1,16], index: 9, kind: input, shape index: {}]
  %s10 = inlined_call_operand.vmem [shape: f32[1,16], index: 10, kind: input, shape index: {}]
  %s11 = inlined_call_operand.hbm [shape: bf16[2,16,256], index: 11, kind: output, shape index: {}]
  %s12 = sld [smem:[#allocation0]]
  $region77: #{tpu_custom_call.1} parent=0
    _
  %s14 = ssub.s32 1, %s12
  %s15 = scalar_select 0, %s14, %s12
  $region1: #{tpu_custom_call.1} parent=0
    #allocation4 [shape = 'u8[16384]{0}', space=vmem, size = 0x4000, scoped, tag = 'output window, operand 0']
    #allocation5 [shape = 's32[2]{0}', space=sflag, size = 0x8, scoped, tag = 'scoped memory for tpu_custom_call.1']
    %16 = vsyncpa [#allocation5], 0
    %s17 = scalar_lea.sflag [#allocation5], 1
    %18 = vsyncpa %s17, 0
    loop: start=0, step=1, limit=4
    $region2: #{tpu_custom_call.1} parent=1 // loop_pre_header
      _
    $region3: #{tpu_custom_call.1} parent=1 // loop_header
      %s20 = sphi 0, %s24
      %p21 = scmp.ge.s32.totalorder %s20, 4
      %s30 = sphi 0, %s32
      %s33 = sphi 0, %s30
      %s34 = sphi 0, %s33
      %s50 = sphi 0, %s34
      %s54 = sphi 0, %s54
      %s56 = sphi 0, %s54
      %s57 = sphi 0, %s56
      %s71 = sphi 0, %s57
      %s75 = sphi 0, %s75
      %s77 = sphi 0, %s75
      %s78 = sphi 0, %s77
      %s92 = sphi 0, %s78
      %s96 = sphi 0, %s96
      %s98 = sphi 0, %s96
      %s99 = sphi 0, %s98
      %s113 = sphi 0, %s99
      %s117 = sphi 0, %s117
      %s119 = sphi 0, %s117
      %s120 = sphi 0, %s119
      %s134 = sphi 0, %s120
      %s138 = sphi 0, %s138
      %s140 = sphi 0, %s138
      %s141 = sphi 0, %s140
      %s155 = sphi 0, %s141
      %s159 = sphi 0, %s159
      %s161 = sphi 0, %s159
      %s162 = sphi 0, %s161
      %s176 = sphi 0, %s162
      %s180 = sphi 0, %s180
      %s182 = sphi 0, %s180
      %s183 = sphi 0, %s182
      %s197 = sphi 0, %s183
      %s201 = sphi 0, %s201
      %s203 = sphi 0, %s201
      %s204 = sphi 0, %s203
      %s218 = sphi 0, %s204
      %s222 = sphi 0, %s222
      %s224 = sphi 0, %s222
      %s225 = sphi 0, %s224
      %s239 = sphi 0, %s225
      %s243 = sphi 0, %s243
      %s245 = sphi 0, %s243
      %s246 = sphi 0, %s245
      %s260 = sphi 0, %s246
      %s266 = sphi 0, %s268
      %s269 = sphi 0, %s266
      %s270 = sphi 0, %s269
      %s286 = sphi 0, %s270
    $region4: #{tpu_custom_call.1} parent=1 // loop_header_branch
      %23 = sbr.rel (%p21) target = $region8
    $region5: #{tpu_custom_call.1} parent=1 // loop_body
      %s25 = ssub.s32 %s20, 1
      %s26 = ssub.s32 %s20, 2
      %s27 = sadd.s32 %s20, 1
      %s28 = ssub.s32 %s20, %s27
      %p29 = scmp.eq.s32.totalorder %s28, 0
      %s31 = sadd.s32 %s30, 1
      %s32 = scalar_select %p29, %s30, %s31
      %p35 = pneg %p29
      %p36 = scmp.eq.s32.totalorder %s20, 1
      %p37 = por %p35, %p36
      %p38 = scmp.ne.s32.totalorder %s30, %s33
      %p39 = scmp.eq.s32.totalorder %s20, 0
      %p40 = por %p38, %p39
      %p41 = scmp.ne.s32.totalorder %s30, %s33
      %p42 = scmp.eq.s32.totalorder %s25, 1
      %p43 = por %p41, %p42
      %p44 = scmp.ne.s32.totalorder %s33, %s34
      %p45 = scmp.eq.s32.totalorder %s25, 0
      %p46 = por %p44, %p45
      %p47 = scmp.ne.s32.totalorder %s33, %s34
      %p48 = scmp.eq.s32.totalorder %s26, 1
      %p49 = por %p47, %p48
      %p51 = scmp.ne.s32.totalorder %s34, %s50
      %p52 = scmp.eq.s32.totalorder %s26, 0
      %p53 = por %p51, %p52
      %s55 = sadd.s32 %s54, 1
      %p58 = scmp.eq.s32.totalorder %s20, 1
      %p59 = scmp.ne.s32.totalorder %s54, %s56
      %p60 = scmp.eq.s32.totalorder %s20, 0
      %p61 = por %p59, %p60
      %p62 = scmp.ne.s32.totalorder %s54, %s56
      %p63 = scmp.eq.s32.totalorder %s25, 1
      %p64 = por %p62, %p63
      %p65 = scmp.ne.s32.totalorder %s56, %s57
      %p66 = scmp.eq.s32.totalorder %s25, 0
      %p67 = por %p65, %p66
      %p68 = scmp.ne.s32.totalorder %s56, %s57
      %p69 = scmp.eq.s32.totalorder %s26, 1
      %p70 = por %p68, %p69
      %p72 = scmp.ne.s32.totalorder %s57, %s71
      %p73 = scmp.eq.s32.totalorder %s26, 0
      %p74 = por %p72, %p73
      %s76 = sadd.s32 %s75, 1
      %p79 = scmp.eq.s32.totalorder %s20, 1
      %p80 = scmp.ne.s32.totalorder %s75, %s77
      %p81 = scmp.eq.s32.totalorder %s20, 0
      %p82 = por %p80, %p81
      %p83 = scmp.ne.s32.totalorder %s75, %s77
      %p84 = scmp.eq.s32.totalorder %s25, 1
      %p85 = por %p83, %p84
      %p86 = scmp.ne.s32.totalorder %s77, %s78
      %p87 = scmp.eq.s32.totalorder %s25, 0
      %p88 = por %p86, %p87
      %p89 = scmp.ne.s32.totalorder %s77, %s78
      %p90 = scmp.eq.s32.totalorder %s26, 1
      %p91 = por %p89, %p90
      %p93 = scmp.ne.s32.totalorder %s78, %s92
      %p94 = scmp.eq.s32.totalorder %s26, 0
      %p95 = por %p93, %p94
      %s97 = sadd.s32 %s96, 1
      %p100 = scmp.eq.s32.totalorder %s20, 1
      %p101 = scmp.ne.s32.totalorder %s96, %s98
      %p102 = scmp.eq.s32.totalorder %s20, 0
      %p103 = por %p101, %p102
      %p104 = scmp.ne.s32.totalorder %s96, %s98
      %p105 = scmp.eq.s32.totalorder %s25, 1
      %p106 = por %p104, %p105
      %p107 = scmp.ne.s32.totalorder %s98, %s99
      %p108 = scmp.eq.s32.totalorder %s25, 0
      %p109 = por %p107, %p108
      %p110 = scmp.ne.s32.totalorder %s98, %s99
      %p111 = scmp.eq.s32.totalorder %s26, 1
      %p112 = por %p110, %p111
      %p114 = scmp.ne.s32.totalorder %s99, %s113
      %p115 = scmp.eq.s32.totalorder %s26, 0
      %p116 = por %p114, %p115
      %s118 = sadd.s32 %s117, 1
      %p121 = scmp.eq.s32.totalorder %s20, 1
      %p122 = scmp.ne.s32.totalorder %s117, %s119
      %p123 = scmp.eq.s32.totalorder %s20, 0
      %p124 = por %p122, %p123
      %p125 = scmp.ne.s32.totalorder %s117, %s119
      %p126 = scmp.eq.s32.totalorder %s25, 1
      %p127 = por %p125, %p126
      %p128 = scmp.ne.s32.totalorder %s119, %s120
      %p129 = scmp.eq.s32.totalorder %s25, 0
      %p130 = por %p128, %p129
      %p131 = scmp.ne.s32.totalorder %s119, %s120
      %p132 = scmp.eq.s32.totalorder %s26, 1
      %p133 = por %p131, %p132
      %p135 = scmp.ne.s32.totalorder %s120, %s134
      %p136 = scmp.eq.s32.totalorder %s26, 0
      %p137 = por %p135, %p136
      %s139 = sadd.s32 %s138, 1
      %p142 = scmp.eq.s32.totalorder %s20, 1
      %p143 = scmp.ne.s32.totalorder %s138, %s140
      %p144 = scmp.eq.s32.totalorder %s20, 0
      %p145 = por %p143, %p144
      %p146 = scmp.ne.s32.totalorder %s138, %s140
      %p147 = scmp.eq.s32.totalorder %s25, 1
      %p148 = por %p146, %p147
      %p149 = scmp.ne.s32.totalorder %s140, %s141
      %p150 = scmp.eq.s32.totalorder %s25, 0
      %p151 = por %p149, %p150
      %p152 = scmp.ne.s32.totalorder %s140, %s141
      %p153 = scmp.eq.s32.totalorder %s26, 1
      %p154 = por %p152, %p153
      %p156 = scmp.ne.s32.totalorder %s141, %s155
      %p157 = scmp.eq.s32.totalorder %s26, 0
      %p158 = por %p156, %p157
      %s160 = sadd.s32 %s159, 1
      %p163 = scmp.eq.s32.totalorder %s20, 1
      %p164 = scmp.ne.s32.totalorder %s159, %s161
      %p165 = scmp.eq.s32.totalorder %s20, 0
      %p166 = por %p164, %p165
      %p167 = scmp.ne.s32.totalorder %s159, %s161
      %p168 = scmp.eq.s32.totalorder %s25, 1
      %p169 = por %p167, %p168
      %p170 = scmp.ne.s32.totalorder %s161, %s162
      %p171 = scmp.eq.s32.totalorder %s25, 0
      %p172 = por %p170, %p171
      %p173 = scmp.ne.s32.totalorder %s161, %s162
      %p174 = scmp.eq.s32.totalorder %s26, 1
      %p175 = por %p173, %p174
      %p177 = scmp.ne.s32.totalorder %s162, %s176
      %p178 = scmp.eq.s32.totalorder %s26, 0
      %p179 = por %p177, %p178
      %s181 = sadd.s32 %s180, 1
      %p184 = scmp.eq.s32.totalorder %s20, 1
      %p185 = scmp.ne.s32.totalorder %s180, %s182
      %p186 = scmp.eq.s32.totalorder %s20, 0
      %p187 = por %p185, %p186
      %p188 = scmp.ne.s32.totalorder %s180, %s182
      %p189 = scmp.eq.s32.totalorder %s25, 1
      %p190 = por %p188, %p189
      %p191 = scmp.ne.s32.totalorder %s182, %s183
      %p192 = scmp.eq.s32.totalorder %s25, 0
      %p193 = por %p191, %p192
      %p194 = scmp.ne.s32.totalorder %s182, %s183
      %p195 = scmp.eq.s32.totalorder %s26, 1
      %p196 = por %p194, %p195
      %p198 = scmp.ne.s32.totalorder %s183, %s197
      %p199 = scmp.eq.s32.totalorder %s26, 0
      %p200 = por %p198, %p199
      %s202 = sadd.s32 %s201, 1
      %p205 = scmp.eq.s32.totalorder %s20, 1
      %p206 = scmp.ne.s32.totalorder %s201, %s203
      %p207 = scmp.eq.s32.totalorder %s20, 0
      %p208 = por %p206, %p207
      %p209 = scmp.ne.s32.totalorder %s201, %s203
      %p210 = scmp.eq.s32.totalorder %s25, 1
      %p211 = por %p209, %p210
      %p212 = scmp.ne.s32.totalorder %s203, %s204
      %p213 = scmp.eq.s32.totalorder %s25, 0
      %p214 = por %p212, %p213
      %p215 = scmp.ne.s32.totalorder %s203, %s204
      %p216 = scmp.eq.s32.totalorder %s26, 1
      %p217 = por %p215, %p216
      %p219 = scmp.ne.s32.totalorder %s204, %s218
      %p220 = scmp.eq.s32.totalorder %s26, 0
      %p221 = por %p219, %p220
      %s223 = sadd.s32 %s222, 1
      %p226 = scmp.eq.s32.totalorder %s20, 1
      %p227 = scmp.ne.s32.totalorder %s222, %s224
      %p228 = scmp.eq.s32.totalorder %s20, 0
      %p229 = por %p227, %p228
      %p230 = scmp.ne.s32.totalorder %s222, %s224
      %p231 = scmp.eq.s32.totalorder %s25, 1
      %p232 = por %p230, %p231
      %p233 = scmp.ne.s32.totalorder %s224, %s225
      %p234 = scmp.eq.s32.totalorder %s25, 0
      %p235 = por %p233, %p234
      %p236 = scmp.ne.s32.totalorder %s224, %s225
      %p237 = scmp.eq.s32.totalorder %s26, 1
      %p238 = por %p236, %p237
      %p240 = scmp.ne.s32.totalorder %s225, %s239
      %p241 = scmp.eq.s32.totalorder %s26, 0
      %p242 = por %p240, %p241
      %s244 = sadd.s32 %s243, 1
      %p247 = scmp.eq.s32.totalorder %s20, 1
      %p248 = scmp.ne.s32.totalorder %s243, %s245
      %p249 = scmp.eq.s32.totalorder %s20, 0
      %p250 = por %p248, %p249
      %p251 = scmp.ne.s32.totalorder %s243, %s245
      %p252 = scmp.eq.s32.totalorder %s25, 1
      %p253 = por %p251, %p252
      %p254 = scmp.ne.s32.totalorder %s245, %s246
      %p255 = scmp.eq.s32.totalorder %s25, 0
      %p256 = por %p254, %p255
      %p257 = scmp.ne.s32.totalorder %s245, %s246
      %p258 = scmp.eq.s32.totalorder %s26, 1
      %p259 = por %p257, %p258
      %p261 = scmp.ne.s32.totalorder %s246, %s260
      %p262 = scmp.eq.s32.totalorder %s26, 0
      %p263 = por %p261, %p262
      %s264 = ssub.s32 %s20, %s27
      %p265 = scmp.eq.s32.totalorder %s264, 0
      %s267 = sadd.s32 %s266, 1
      %s268 = scalar_select %p265, %s266, %s267
      %p271 = pneg %p265
      %p272 = scmp.eq.s32.totalorder %s20, 1
      %p273 = por %p271, %p272
      %p274 = scmp.ne.s32.totalorder %s266, %s269
      %p275 = scmp.eq.s32.totalorder %s20, 0
      %p276 = por %p274, %p275
      %p277 = scmp.ne.s32.totalorder %s266, %s269
      %p278 = scmp.eq.s32.totalorder %s25, 1
      %p279 = por %p277, %p278
      %p280 = scmp.ne.s32.totalorder %s269, %s270
      %p281 = scmp.eq.s32.totalorder %s25, 0
      %p282 = por %p280, %p281
      %p283 = scmp.ne.s32.totalorder %s269, %s270
      %p284 = scmp.eq.s32.totalorder %s26, 1
      %p285 = por %p283, %p284
      %p287 = scmp.ne.s32.totalorder %s270, %s286
      %p288 = scmp.eq.s32.totalorder %s26, 0
      %p289 = por %p287, %p288
      %p290 = scmp.le.s32.totalorder 1, %s20
      %p291 = scmp.lt.s32.totalorder %s20, 3
      %p292 = pnand %p290, %p291
      %p293 = pneg %p292
      // Predicated region
      $region9: #{tpu_custom_call.1} parent=5 // pred_check
        _
      $region10: #{tpu_custom_call.1} parent=5 // pred_check_branch
        %295 = sbr.rel (%p292) target = $region12
      $region11: #{tpu_custom_call.1} parent=5 // pred_region
        %s296 = ssub.s32 %s20, 1
        // Predicated region
        $region13: #{tpu_custom_call.1} parent=11 // pred_check
          %p297 = pneg %p67
        $region14: #{tpu_custom_call.1} parent=11 // pred_check_branch
          %299 = sbr.rel (%p297) target = $region16
        $region15: #{tpu_custom_call.1} parent=11 // pred_region
          _
        $region16: #{tpu_custom_call.1} parent=11 // pred_fallthru
          _
        // Predicated region
        $region17: #{tpu_custom_call.1} parent=11 // pred_check
          %p300 = pneg %p88
        $region18: #{tpu_custom_call.1} parent=11 // pred_check_branch
          %302 = sbr.rel (%p300) target = $region20
        $region19: #{tpu_custom_call.1} parent=11 // pred_region
          _
        $region20: #{tpu_custom_call.1} parent=11 // pred_fallthru
          _
        // Predicated region
        $region21: #{tpu_custom_call.1} parent=11 // pred_check
          %p303 = pneg %p109
        $region22: #{tpu_custom_call.1} parent=11 // pred_check_branch
          %305 = sbr.rel (%p303) target = $region24
        $region23: #{tpu_custom_call.1} parent=11 // pred_region
          _
        $region24: #{tpu_custom_call.1} parent=11 // pred_fallthru
          _
        // Predicated region
        $region25: #{tpu_custom_call.1} parent=11 // pred_check
          %p306 = pneg %p130
        $region26: #{tpu_custom_call.1} parent=11 // pred_check_branch
          %308 = sbr.rel (%p306) target = $region28
        $region27: #{tpu_custom_call.1} parent=11 // pred_region
          _
        $region28: #{tpu_custom_call.1} parent=11 // pred_fallthru
          _
        // Predicated region
        $region29: #{tpu_custom_call.1} parent=11 // pred_check
          %p309 = pneg %p151
        $region30: #{tpu_custom_call.1} parent=11 // pred_check_branch
          %311 = sbr.rel (%p309) target = $region32
        $region31: #{tpu_custom_call.1} parent=11 // pred_region
          _
        $region32: #{tpu_custom_call.1} parent=11 // pred_fallthru
          _
        // Predicated region
        $region33: #{tpu_custom_call.1} parent=11 // pred_check
          %p312 = pneg %p172
        $region34: #{tpu_custom_call.1} parent=11 // pred_check_branch
          %314 = sbr.rel (%p312) target = $region36
        $region35: #{tpu_custom_call.1} parent=11 // pred_region
          _
        $region36: #{tpu_custom_call.1} parent=11 // pred_fallthru
          _
        // Predicated region
        $region37: #{tpu_custom_call.1} parent=11 // pred_check
          %p315 = pneg %p193
        $region38: #{tpu_custom_call.1} parent=11 // pred_check_branch
          %317 = sbr.rel (%p315) target = $region40
        $region39: #{tpu_custom_call.1} parent=11 // pred_region
          _
        $region40: #{tpu_custom_call.1} parent=11 // pred_fallthru
          _
        // Predicated region
        $region41: #{tpu_custom_call.1} parent=11 // pred_check
          %p318 = pneg %p214
        $region42: #{tpu_custom_call.1} parent=11 // pred_check_branch
          %320 = sbr.rel (%p318) target = $region44
        $region43: #{tpu_custom_call.1} parent=11 // pred_region
          _
        $region44: #{tpu_custom_call.1} parent=11 // pred_fallthru
          _
        // Predicated region
        $region45: #{tpu_custom_call.1} parent=11 // pred_check
          %p321 = pneg %p235
        $region46: #{tpu_custom_call.1} parent=11 // pred_check_branch
          %323 = sbr.rel (%p321) target = $region48
        $region47: #{tpu_custom_call.1} parent=11 // pred_region
          _
        $region48: #{tpu_custom_call.1} parent=11 // pred_fallthru
          _
        // Predicated region
        $region49: #{tpu_custom_call.1} parent=11 // pred_check
          %p324 = pneg %p256
        $region50: #{tpu_custom_call.1} parent=11 // pred_check_branch
          %326 = sbr.rel (%p324) target = $region52
        $region51: #{tpu_custom_call.1} parent=11 // pred_region
          _
        $region52: #{tpu_custom_call.1} parent=11 // pred_fallthru
          _
      $region12: #{tpu_custom_call.1} parent=5 // pred_fallthru
        _
      %p327 = scmp.lt.s32.totalorder %s20, 2
      // Predicated region
      $region53: #{tpu_custom_call.1} parent=5 // pred_check
        %p328 = pneg %p327
      $region54: #{tpu_custom_call.1} parent=5 // pred_check_branch
        %330 = sbr.rel (%p328) target = $region56
      $region55: #{tpu_custom_call.1} parent=5 // pred_region
        // Predicated region
        $region57: #{tpu_custom_call.1} parent=55 // pred_check
          %p331 = pneg %p40
        $region58: #{tpu_custom_call.1} parent=55 // pred_check_branch
          %333 = sbr.rel (%p331) target = $region60
        $region59: #{tpu_custom_call.1} parent=55 // pred_region
          %p334 = scmp.lt.s32.totalorder %s20, 1
          %s335 = scalar_select %p334, %s20, 1
          %s336 = smul.addr %s335, 32
          %s337 = smul.addr %s336, 4
          %s338 = scalar_lea.vmem %s0, %s337
        $region60: #{tpu_custom_call.1} parent=55 // pred_fallthru
          _
      $region56: #{tpu_custom_call.1} parent=5 // pred_fallthru
        _
      %p339 = scmp.le.s32.totalorder 1, %s20
      %p340 = scmp.lt.s32.totalorder %s20, 3
      %p341 = pnand %p339, %p340
      %p342 = pneg %p341
      // Predicated region
      $region61: #{tpu_custom_call.1} parent=5 // pred_check
        _
      $region62: #{tpu_custom_call.1} parent=5 // pred_check_branch
        %344 = sbr.rel (%p341) target = $region64
      $region63: #{tpu_custom_call.1} parent=5 // pred_region
        %s345 = ssub.s32 %s20, 1
        %p346 = scmp.lt.s32.totalorder %s25, 1
        %s347 = scalar_select %p346, %s25, 1
        %s348 = smul.addr %s347, 32
        %s349 = smul.addr %s348, 4
        %s350 = scalar_lea.vmem %s0, %s349
        %p351 = pneg %p46
        %p352 = pneg %p43
        %p353 = pneg %p67
        %p354 = pneg %p64
        %p355 = pneg %p88
        %p356 = pneg %p85
        %p357 = pneg %p109
        %p358 = pneg %p106
        %p359 = pneg %p130
        %p360 = pneg %p127
        %p361 = pneg %p151
        %p362 = pneg %p148
        %p363 = pneg %p172
        %p364 = pneg %p169
        %p365 = pneg %p193
        %p366 = pneg %p190
        %p367 = pneg %p214
        %p368 = pneg %p211
        %p369 = pneg %p235
        %p370 = pneg %p232
        %p371 = pneg %p256
        %p372 = pneg %p253
        %p373 = pneg %p282
        %p374 = pneg %p279
        %s375 = sand.u32 %s269, 1
        %s376 = scalar_lea.sflag [#allocation5], %s375
        %s377 = sand.u32 %s269, 1
        %s378 = smul.addr %s377, 16
        %s379 = scalar_lea.vmem [#allocation4], %s378
        %p380 = scmp.lt.s32.totalorder %s25, 1
        %s381 = scalar_select %p380, %s25, 1
        %s382 = smul.addr %s381, 32
        %s383 = smul.addr %s382, 4
        %s384 = scalar_lea.vmem %s0, %s383
        %vm386 = vcmask 64512
        %387 = vst.msk [vmem:[#allocation2] sm:$0xff] %vm386, 0.0
        %388 = vst.msk [vmem:[#allocation2 + $0x8] sm:$0xff] %vm386, 0.0
        %vm389 = vcmask 58368
        %390 = vst.msk [vmem:[#allocation2 + $0x10] sm:$0x3] %vm389, 0.0
        %s391 = scalar_lea.vmem [#allocation2], 408
        %392 = vst.msk [vmem:[%s391] sm:$0xff] %vm386, 0.0
        %393 = vst.msk [vmem:[%s391 + $0x8] sm:$0xff] %vm386, 0.0
        %394 = vst.msk [vmem:[%s391 + $0x10] sm:$0x3] %vm389, 0.0
        %s395 = scalar_lea.vmem [#allocation2], 24
        %vm396 = vcmask 57344
        %397 = vst.msk [vmem:[%s395] sm:$0x1] %vm396, 0.0
        %398 = vst.msk [vmem:[%s395 + $0x18] sm:$0x1] %vm396, 0.0
        %399 = vst.msk [vmem:[%s395 + $0x30] sm:$0x1] %vm396, 0.0
        %400 = vst.msk [vmem:[%s395 + $0x48] sm:$0x1] %vm396, 0.0
        %401 = vst.msk [vmem:[%s395 + $0x60] sm:$0x1] %vm396, 0.0
        %402 = vst.msk [vmem:[%s395 + $0x78] sm:$0x1] %vm396, 0.0
        %403 = vst.msk [vmem:[%s395 + $0x90] sm:$0x1] %vm396, 0.0
        %404 = vst.msk [vmem:[%s395 + $0xa8] sm:$0x1] %vm396, 0.0
        %405 = vst.msk [vmem:[%s395 + $0xc0] sm:$0x1] %vm396, 0.0
        %406 = vst.msk [vmem:[%s395 + $0xd8] sm:$0x1] %vm396, 0.0
        %407 = vst.msk [vmem:[%s395 + $0xf0] sm:$0x1] %vm396, 0.0
        %408 = vst.msk [vmem:[%s395 + $0x108] sm:$0x1] %vm396, 0.0
        %409 = vst.msk [vmem:[%s395 + $0x120] sm:$0x1] %vm396, 0.0
        %410 = vst.msk [vmem:[%s395 + $0x138] sm:$0x1] %vm396, 0.0
        %411 = vst.msk [vmem:[%s395 + $0x150] sm:$0x1] %vm396, 0.0
        %412 = vst.msk [vmem:[%s395 + $0x168] sm:$0x1] %vm396, 0.0
        %413 = vst.msk [vmem:[%s395 + $0x11] sm:$0x1] %vm396, 0.0
        %414 = vst.msk [vmem:[%s395 + $0x29] sm:$0x1] %vm396, 0.0
        %415 = vst.msk [vmem:[%s395 + $0x41] sm:$0x1] %vm396, 0.0
        %416 = vst.msk [vmem:[%s395 + $0x59] sm:$0x1] %vm396, 0.0
        %417 = vst.msk [vmem:[%s395 + $0x71] sm:$0x1] %vm396, 0.0
        %418 = vst.msk [vmem:[%s395 + $0x89] sm:$0x1] %vm396, 0.0
        %419 = vst.msk [vmem:[%s395 + $0xa1] sm:$0x1] %vm396, 0.0
        %420 = vst.msk [vmem:[%s395 + $0xb9] sm:$0x1] %vm396, 0.0
        %421 = vst.msk [vmem:[%s395 + $0xd1] sm:$0x1] %vm396, 0.0
        %422 = vst.msk [vmem:[%s395 + $0xe9] sm:$0x1] %vm396, 0.0
        %423 = vst.msk [vmem:[%s395 + $0x101] sm:$0x1] %vm396, 0.0
        %424 = vst.msk [vmem:[%s395 + $0x119] sm:$0x1] %vm396, 0.0
        %425 = vst.msk [vmem:[%s395 + $0x131] sm:$0x1] %vm396, 0.0
        %426 = vst.msk [vmem:[%s395 + $0x149] sm:$0x1] %vm396, 0.0
        %427 = vst.msk [vmem:[%s395 + $0x161] sm:$0x1] %vm396, 0.0
        %428 = vst.msk [vmem:[%s395 + $0x179] sm:$0x1] %vm396, 0.0
        %v429 = vld [vmem:[%s384] sm:$0xf]
        %v430 = vld [vmem:[%s384 + $0x4] sm:$0xf]
        %v431 = vld [vmem:[%s384 + $0x8] sm:$0xf]
        %v432 = vld [vmem:[%s384 + $0xc] sm:$0xf]
        %v433 = vld [vmem:[%s384 + $0x10] sm:$0xf]
        %v434 = vld [vmem:[%s384 + $0x14] sm:$0xf]
        %v435 = vld [vmem:[%s384 + $0x18] sm:$0xf]
        %v436 = vld [vmem:[%s384 + $0x1c] sm:$0xf]
        %v437 = vld [vmem:[%s384 + $0x20] sm:$0xf]
        %v438 = vld [vmem:[%s384 + $0x24] sm:$0xf]
        %v439 = vld [vmem:[%s384 + $0x28] sm:$0xf]
        %v440 = vld [vmem:[%s384 + $0x2c] sm:$0xf]
        %v441 = vld [vmem:[%s384 + $0x30] sm:$0xf]
        %v442 = vld [vmem:[%s384 + $0x34] sm:$0xf]
        %v443 = vld [vmem:[%s384 + $0x38] sm:$0xf]
        %v444 = vld [vmem:[%s384 + $0x3c] sm:$0xf]
        %v445 = vld [vmem:[%s384 + $0x40] sm:$0xf]
        %v446 = vld [vmem:[%s384 + $0x44] sm:$0xf]
        %v447 = vld [vmem:[%s384 + $0x48] sm:$0xf]
        %v448 = vld [vmem:[%s384 + $0x4c] sm:$0xf]
        %v449 = vld [vmem:[%s384 + $0x50] sm:$0xf]
        %v450 = vld [vmem:[%s384 + $0x54] sm:$0xf]
        %v451 = vld [vmem:[%s384 + $0x58] sm:$0xf]
        %v452 = vld [vmem:[%s384 + $0x5c] sm:$0xf]
        %v453 = vld [vmem:[%s384 + $0x60] sm:$0xf]
        %v454 = vld [vmem:[%s384 + $0x64] sm:$0xf]
        %v455 = vld [vmem:[%s384 + $0x68] sm:$0xf]
        %v456 = vld [vmem:[%s384 + $0x6c] sm:$0xf]
        %v457 = vld [vmem:[%s384 + $0x70] sm:$0xf]
        %v458 = vld [vmem:[%s384 + $0x74] sm:$0xf]
        %v459 = vld [vmem:[%s384 + $0x78] sm:$0xf]
        %v460 = vld [vmem:[%s384 + $0x7c] sm:$0xf]
        %v461 = vunpack.c.l.bf16 %v429
        %v462 = vunpack.c.l.bf16 %v430
        %v463 = vunpack.c.l.bf16 %v431
        %v464 = vunpack.c.l.bf16 %v432
        %v465 = vunpack.c.l.bf16 %v433
        %v466 = vunpack.c.l.bf16 %v434
        %v467 = vunpack.c.l.bf16 %v435
        %v468 = vunpack.c.l.bf16 %v436
        %v469 = vunpack.c.l.bf16 %v437
        %v470 = vunpack.c.l.bf16 %v438
        %v471 = vunpack.c.l.bf16 %v439
        %v472 = vunpack.c.l.bf16 %v440
        %v473 = vunpack.c.l.bf16 %v441
        %v474 = vunpack.c.l.bf16 %v442
        %v475 = vunpack.c.l.bf16 %v443
        %v476 = vunpack.c.l.bf16 %v444
        %v477 = vunpack.c.l.bf16 %v445
        %v478 = vunpack.c.l.bf16 %v446
        %v479 = vunpack.c.l.bf16 %v447
        %v480 = vunpack.c.l.bf16 %v448
        %v481 = vunpack.c.l.bf16 %v449
        %v482 = vunpack.c.l.bf16 %v450
        %v483 = vunpack.c.l.bf16 %v451
        %v484 = vunpack.c.l.bf16 %v452
        %v485 = vunpack.c.l.bf16 %v453
        %v486 = vunpack.c.l.bf16 %v454
        %v487 = vunpack.c.l.bf16 %v455
        %v488 = vunpack.c.l.bf16 %v456
        %v489 = vunpack.c.l.bf16 %v457
        %v490 = vunpack.c.l.bf16 %v458
        %v491 = vunpack.c.l.bf16 %v459
        %v492 = vunpack.c.l.bf16 %v460
        %493 = vst.msk [vmem:[%s395 + $0x1] sm:$0xff] %vm386, %v461
        %494 = vst.msk [vmem:[%s395 + $0x9] sm:$0xff] %vm386, %v462
        %495 = vst.msk [vmem:[%s395 + $0x19] sm:$0xff] %vm386, %v463
        %496 = vst.msk [vmem:[%s395 + $0x21] sm:$0xff] %vm386, %v464
        %497 = vst.msk [vmem:[%s395 + $0x31] sm:$0xff] %vm386, %v465
        %498 = vst.msk [vmem:[%s395 + $0x39] sm:$0xff] %vm386, %v466
        %499 = vst.msk [vmem:[%s395 + $0x49] sm:$0xff] %vm386, %v467
        %500 = vst.msk [vmem:[%s395 + $0x51] sm:$0xff] %vm386, %v468
        %501 = vst.msk [vmem:[%s395 + $0x61] sm:$0xff] %vm386, %v469
        %502 = vst.msk [vmem:[%s395 + $0x69] sm:$0xff] %vm386, %v470
        %503 = vst.msk [vmem:[%s395 + $0x79] sm:$0xff] %vm386, %v471
        %504 = vst.msk [vmem:[%s395 + $0x81] sm:$0xff] %vm386, %v472
        %505 = vst.msk [vmem:[%s395 + $0x91] sm:$0xff] %vm386, %v473
        %506 = vst.msk [vmem:[%s395 + $0x99] sm:$0xff] %vm386, %v474
        %507 = vst.msk [vmem:[%s395 + $0xa9] sm:$0xff] %vm386, %v475
        %508 = vst.msk [vmem:[%s395 + $0xb1] sm:$0xff] %vm386, %v476
        %509 = vst.msk [vmem:[%s395 + $0xc1] sm:$0xff] %vm386, %v477
        %510 = vst.msk [vmem:[%s395 + $0xc9] sm:$0xff] %vm386, %v478
        %511 = vst.msk [vmem:[%s395 + $0xd9] sm:$0xff] %vm386, %v479
        %512 = vst.msk [vmem:[%s395 + $0xe1] sm:$0xff] %vm386, %v480
        %513 = vst.msk [vmem:[%s395 + $0xf1] sm:$0xff] %vm386, %v481
        %514 = vst.msk [vmem:[%s395 + $0xf9] sm:$0xff] %vm386, %v482
        %515 = vst.msk [vmem:[%s395 + $0x109] sm:$0xff] %vm386, %v483
        %516 = vst.msk [vmem:[%s395 + $0x111] sm:$0xff] %vm386, %v484
        %517 = vst.msk [vmem:[%s395 + $0x121] sm:$0xff] %vm386, %v485
        %518 = vst.msk [vmem:[%s395 + $0x129] sm:$0xff] %vm386, %v486
        %519 = vst.msk [vmem:[%s395 + $0x139] sm:$0xff] %vm386, %v487
        %520 = vst.msk [vmem:[%s395 + $0x141] sm:$0xff] %vm386, %v488
        %521 = vst.msk [vmem:[%s395 + $0x151] sm:$0xff] %vm386, %v489
        %522 = vst.msk [vmem:[%s395 + $0x159] sm:$0xff] %vm386, %v490
        %523 = vst.msk [vmem:[%s395 + $0x169] sm:$0xff] %vm386, %v491
        %524 = vst.msk [vmem:[%s395 + $0x171] sm:$0xff] %vm386, %v492
        %v525 = vld [vmem:[#allocation2] sm:$0xff]
        %v526 = vld [vmem:[#allocation2 + $0x8] sm:$0xff]
        %v527 = vld [vmem:[#allocation2 + $0x18] sm:$0xff]
        %v528 = vld [vmem:[#allocation2 + $0x20] sm:$0xff]
        %v529 = vld [vmem:[#allocation2 + $0x30] sm:$0xff]
        %v530 = vld [vmem:[#allocation2 + $0x38] sm:$0xff]
        %v531 = vld [vmem:[#allocation2 + $0x48] sm:$0xff]
        %v532 = vld [vmem:[#allocation2 + $0x50] sm:$0xff]
        %v533 = vld [vmem:[#allocation2 + $0x60] sm:$0xff]
        %v534 = vld [vmem:[#allocation2 + $0x68] sm:$0xff]
        %v535 = vld [vmem:[#allocation2 + $0x78] sm:$0xff]
        %v536 = vld [vmem:[#allocation2 + $0x80] sm:$0xff]
        %v537 = vld [vmem:[#allocation2 + $0x90] sm:$0xff]
        %v538 = vld [vmem:[#allocation2 + $0x98] sm:$0xff]
        %v539 = vld [vmem:[#allocation2 + $0xa8] sm:$0xff]
        %v540 = vld [vmem:[#allocation2 + $0xb0] sm:$0xff]
        %v541 = vld [vmem:[%s1] sm:$0x1]
        %v542 = vperm.slane %v541, 0
        %v543 = vmul.f32 %v525, %v542
        %v544 = vmul.f32 %v526, %v542
        %v545 = vmul.f32 %v527, %v542
        %v546 = vmul.f32 %v528, %v542
        %v547 = vmul.f32 %v529, %v542
        %v548 = vmul.f32 %v530, %v542
        %v549 = vmul.f32 %v531, %v542
        %v550 = vmul.f32 %v532, %v542
        %v551 = vmul.f32 %v533, %v542
        %v552 = vmul.f32 %v534, %v542
        %v553 = vmul.f32 %v535, %v542
        %v554 = vmul.f32 %v536, %v542
        %v555 = vmul.f32 %v537, %v542
        %v556 = vmul.f32 %v538, %v542
        %v557 = vmul.f32 %v539, %v542
        %v558 = vmul.f32 %v540, %v542
        %v559 = vadd.f32 %v543, 0.0
        %v560 = vadd.f32 %v544, 0.0
        %v561 = vadd.f32 %v545, 0.0
        %v562 = vadd.f32 %v546, 0.0
        %v563 = vadd.f32 %v547, 0.0
        %v564 = vadd.f32 %v548, 0.0
        %v565 = vadd.f32 %v549, 0.0
        %v566 = vadd.f32 %v550, 0.0
        %v567 = vadd.f32 %v551, 0.0
        %v568 = vadd.f32 %v552, 0.0
        %v569 = vadd.f32 %v553, 0.0
        %v570 = vadd.f32 %v554, 0.0
        %v571 = vadd.f32 %v555, 0.0
        %v572 = vadd.f32 %v556, 0.0
        %v573 = vadd.f32 %v557, 0.0
        %v574 = vadd.f32 %v558, 0.0
        %v575 = vld [vmem:[#allocation2 + $0x1] sm:$0xff]
        %v576 = vld [vmem:[#allocation2 + $0x9] sm:$0xff]
        %v577 = vld [vmem:[#allocation2 + $0x19] sm:$0xff]
        %v578 = vld [vmem:[#allocation2 + $0x21] sm:$0xff]
        %v579 = vld [vmem:[#allocation2 + $0x31] sm:$0xff]
        %v580 = vld [vmem:[#allocation2 + $0x39] sm:$0xff]
        %v581 = vld [vmem:[#allocation2 + $0x49] sm:$0xff]
        %v582 = vld [vmem:[#allocation2 + $0x51] sm:$0xff]
        %v583 = vld [vmem:[#allocation2 + $0x61] sm:$0xff]
        %v584 = vld [vmem:[#allocation2 + $0x69] sm:$0xff]
        %v585 = vld [vmem:[#allocation2 + $0x79] sm:$0xff]
        %v586 = vld [vmem:[#allocation2 + $0x81] sm:$0xff]
        %v587 = vld [vmem:[#allocation2 + $0x91] sm:$0xff]
        %v588 = vld [vmem:[#allocation2 + $0x99] sm:$0xff]
        %v589 = vld [vmem:[#allocation2 + $0xa9] sm:$0xff]
        %v590 = vld [vmem:[#allocation2 + $0xb1] sm:$0xff]
        %v591 = vld [vmem:[%s1 + $0x1] sm:$0x1]
        %v592 = vperm.slane %v591, 0
        %v593 = vmul.f32 %v575, %v592
        %v594 = vmul.f32 %v576, %v592
        %v595 = vmul.f32 %v577, %v592
        %v596 = vmul.f32 %v578, %v592
        %v597 = vmul.f32 %v579, %v592
        %v598 = vmul.f32 %v580, %v592
        %v599 = vmul.f32 %v581, %v592
        %v600 = vmul.f32 %v582, %v592
        %v601 = vmul.f32 %v583, %v592
        %v602 = vmul.f32 %v584, %v592
        %v603 = vmul.f32 %v585, %v592
        %v604 = vmul.f32 %v586, %v592
        %v605 = vmul.f32 %v587, %v592
        %v606 = vmul.f32 %v588, %v592
        %v607 = vmul.f32 %v589, %v592
        %v608 = vmul.f32 %v590, %v592
        %v609 = vadd.f32 %v559, %v593
        %v610 = vadd.f32 %v560, %v594
        %v611 = vadd.f32 %v561, %v595
        %v612 = vadd.f32 %v562, %v596
        %v613 = vadd.f32 %v563, %v597
        %v614 = vadd.f32 %v564, %v598
        %v615 = vadd.f32 %v565, %v599
        %v616 = vadd.f32 %v566, %v600
        %v617 = vadd.f32 %v567, %v601
        %v618 = vadd.f32 %v568, %v602
        %v619 = vadd.f32 %v569, %v603
        %v620 = vadd.f32 %v570, %v604
        %v621 = vadd.f32 %v571, %v605
        %v622 = vadd.f32 %v572, %v606
        %v623 = vadd.f32 %v573, %v607
        %v624 = vadd.f32 %v574, %v608
        %v625 = vld [vmem:[#allocation2 + $0x2] sm:$0xff]
        %v626 = vld [vmem:[#allocation2 + $0xa] sm:$0xff]
        %v627 = vld [vmem:[#allocation2 + $0x1a] sm:$0xff]
        %v628 = vld [vmem:[#allocation2 + $0x22] sm:$0xff]
        %v629 = vld [vmem:[#allocation2 + $0x32] sm:$0xff]
        %v630 = vld [vmem:[#allocation2 + $0x3a] sm:$0xff]
        %v631 = vld [vmem:[#allocation2 + $0x4a] sm:$0xff]
        %v632 = vld [vmem:[#allocation2 + $0x52] sm:$0xff]
        %v633 = vld [vmem:[#allocation2 + $0x62] sm:$0xff]
        %v634 = vld [vmem:[#allocation2 + $0x6a] sm:$0xff]
        %v635 = vld [vmem:[#allocation2 + $0x7a] sm:$0xff]
        %v636 = vld [vmem:[#allocation2 + $0x82] sm:$0xff]
        %v637 = vld [vmem:[#allocation2 + $0x92] sm:$0xff]
        %v638 = vld [vmem:[#allocation2 + $0x9a] sm:$0xff]
        %v639 = vld [vmem:[#allocation2 + $0xaa] sm:$0xff]
        %v640 = vld [vmem:[#allocation2 + $0xb2] sm:$0xff]
        %v641 = vld [vmem:[%s1 + $0x2] sm:$0x1]
        %v642 = vperm.slane %v641, 0
        %v643 = vmul.f32 %v625, %v642
        %v644 = vmul.f32 %v626, %v642
        %v645 = vmul.f32 %v627, %v642
        %v646 = vmul.f32 %v628, %v642
        %v647 = vmul.f32 %v629, %v642
        %v648 = vmul.f32 %v630, %v642
        %v649 = vmul.f32 %v631, %v642
        %v650 = vmul.f32 %v632, %v642
        %v651 = vmul.f32 %v633, %v642
        %v652 = vmul.f32 %v634, %v642
        %v653 = vmul.f32 %v635, %v642
        %v654 = vmul.f32 %v636, %v642
        %v655 = vmul.f32 %v637, %v642
        %v656 = vmul.f32 %v638, %v642
        %v657 = vmul.f32 %v639, %v642
        %v658 = vmul.f32 %v640, %v642
        %v659 = vadd.f32 %v609, %v643
        %v660 = vadd.f32 %v610, %v644
        %v661 = vadd.f32 %v611, %v645
        %v662 = vadd.f32 %v612, %v646
        %v663 = vadd.f32 %v613, %v647
        %v664 = vadd.f32 %v614, %v648
        %v665 = vadd.f32 %v615, %v649
        %v666 = vadd.f32 %v616, %v650
        %v667 = vadd.f32 %v617, %v651
        %v668 = vadd.f32 %v618, %v652
        %v669 = vadd.f32 %v619, %v653
        %v670 = vadd.f32 %v620, %v654
        %v671 = vadd.f32 %v621, %v655
        %v672 = vadd.f32 %v622, %v656
        %v673 = vadd.f32 %v623, %v657
        %v674 = vadd.f32 %v624, %v658
        %v675 = vld [vmem:[%s395] sm:$0xff]
        %v676 = vld [vmem:[%s395 + $0x8] sm:$0xff]
        %v677 = vld [vmem:[%s395 + $0x18] sm:$0xff]
        %v678 = vld [vmem:[%s395 + $0x20] sm:$0xff]
        %v679 = vld [vmem:[%s395 + $0x30] sm:$0xff]
        %v680 = vld [vmem:[%s395 + $0x38] sm:$0xff]
        %v681 = vld [vmem:[%s395 + $0x48] sm:$0xff]
        %v682 = vld [vmem:[%s395 + $0x50] sm:$0xff]
        %v683 = vld [vmem:[%s395 + $0x60] sm:$0xff]
        %v684 = vld [vmem:[%s395 + $0x68] sm:$0xff]
        %v685 = vld [vmem:[%s395 + $0x78] sm:$0xff]
        %v686 = vld [vmem:[%s395 + $0x80] sm:$0xff]
        %v687 = vld [vmem:[%s395 + $0x90] sm:$0xff]
        %v688 = vld [vmem:[%s395 + $0x98] sm:$0xff]
        %v689 = vld [vmem:[%s395 + $0xa8] sm:$0xff]
        %v690 = vld [vmem:[%s395 + $0xb0] sm:$0xff]
        %s691 = scalar_lea.vmem %s1, 4
        %v692 = vld [vmem:[%s691] sm:$0x1]
        %v693 = vperm.slane %v692, 0
        %v694 = vmul.f32 %v675, %v693
        %v695 = vmul.f32 %v676, %v693
        %v696 = vmul.f32 %v677, %v693
        %v697 = vmul.f32 %v678, %v693
        %v698 = vmul.f32 %v679, %v693
        %v699 = vmul.f32 %v680, %v693
        %v700 = vmul.f32 %v681, %v693
        %v701 = vmul.f32 %v682, %v693
        %v702 = vmul.f32 %v683, %v693
        %v703 = vmul.f32 %v684, %v693
        %v704 = vmul.f32 %v685, %v693
        %v705 = vmul.f32 %v686, %v693
        %v706 = vmul.f32 %v687, %v693
        %v707 = vmul.f32 %v688, %v693
        %v708 = vmul.f32 %v689, %v693
        %v709 = vmul.f32 %v690, %v693
        %v710 = vadd.f32 %v659, %v694
        %v711 = vadd.f32 %v660, %v695
        %v712 = vadd.f32 %v661, %v696
        %v713 = vadd.f32 %v662, %v697
        %v714 = vadd.f32 %v663, %v698
        %v715 = vadd.f32 %v664, %v699
        %v716 = vadd.f32 %v665, %v700
        %v717 = vadd.f32 %v666, %v701
        %v718 = vadd.f32 %v667, %v702
        %v719 = vadd.f32 %v668, %v703
        %v720 = vadd.f32 %v669, %v704
        %v721 = vadd.f32 %v670, %v705
        %v722 = vadd.f32 %v671, %v706
        %v723 = vadd.f32 %v672, %v707
        %v724 = vadd.f32 %v673, %v708
        %v725 = vadd.f32 %v674, %v709
        %v726 = vld [vmem:[%s395 + $0x1] sm:$0xff]
        %v727 = vld [vmem:[%s395 + $0x9] sm:$0xff]
        %v728 = vld [vmem:[%s395 + $0x19] sm:$0xff]
        %v729 = vld [vmem:[%s395 + $0x21] sm:$0xff]
        %v730 = vld [vmem:[%s395 + $0x31] sm:$0xff]
        %v731 = vld [vmem:[%s395 + $0x39] sm:$0xff]
        %v732 = vld [vmem:[%s395 + $0x49] sm:$0xff]
        %v733 = vld [vmem:[%s395 + $0x51] sm:$0xff]
        %v734 = vld [vmem:[%s395 + $0x61] sm:$0xff]
        %v735 = vld [vmem:[%s395 + $0x69] sm:$0xff]
        %v736 = vld [vmem:[%s395 + $0x79] sm:$0xff]
        %v737 = vld [vmem:[%s395 + $0x81] sm:$0xff]
        %v738 = vld [vmem:[%s395 + $0x91] sm:$0xff]
        %v739 = vld [vmem:[%s395 + $0x99] sm:$0xff]
        %v740 = vld [vmem:[%s395 + $0xa9] sm:$0xff]
        %v741 = vld [vmem:[%s395 + $0xb1] sm:$0xff]
        %v742 = vld [vmem:[%s691 + $0x1] sm:$0x1]
        %v743 = vperm.slane %v742, 0
        %v744 = vmul.f32 %v726, %v743
        %v745 = vmul.f32 %v727, %v743
        %v746 = vmul.f32 %v728, %v743
        %v747 = vmul.f32 %v729, %v743
        %v748 = vmul.f32 %v730, %v743
        %v749 = vmul.f32 %v731, %v743
        %v750 = vmul.f32 %v732, %v743
        %v751 = vmul.f32 %v733, %v743
        %v752 = vmul.f32 %v734, %v743
        %v753 = vmul.f32 %v735, %v743
        %v754 = vmul.f32 %v736, %v743
        %v755 = vmul.f32 %v737, %v743
        %v756 = vmul.f32 %v738, %v743
        %v757 = vmul.f32 %v739, %v743
        %v758 = vmul.f32 %v740, %v743
        %v759 = vmul.f32 %v741, %v743
        %v760 = vadd.f32 %v710, %v744
        %v761 = vadd.f32 %v711, %v745
        %v762 = vadd.f32 %v712, %v746
        %v763 = vadd.f32 %v713, %v747
        %v764 = vadd.f32 %v714, %v748
        %v765 = vadd.f32 %v715, %v749
        %v766 = vadd.f32 %v716, %v750
        %v767 = vadd.f32 %v717, %v751
        %v768 = vadd.f32 %v718, %v752
        %v769 = vadd.f32 %v719, %v753
        %v770 = vadd.f32 %v720, %v754
        %v771 = vadd.f32 %v721, %v755
        %v772 = vadd.f32 %v722, %v756
        %v773 = vadd.f32 %v723, %v757
        %v774 = vadd.f32 %v724, %v758
        %v775 = vadd.f32 %v725, %v759
        %v776 = vld [vmem:[%s395 + $0x2] sm:$0xff]
        %v777 = vld [vmem:[%s395 + $0xa] sm:$0xff]
        %v778 = vld [vmem:[%s395 + $0x1a] sm:$0xff]
        %v779 = vld [vmem:[%s395 + $0x22] sm:$0xff]
        %v780 = vld [vmem:[%s395 + $0x32] sm:$0xff]
        %v781 = vld [vmem:[%s395 + $0x3a] sm:$0xff]
        %v782 = vld [vmem:[%s395 + $0x4a] sm:$0xff]
        %v783 = vld [vmem:[%s395 + $0x52] sm:$0xff]
        %v784 = vld [vmem:[%s395 + $0x62] sm:$0xff]
        %v785 = vld [vmem:[%s395 + $0x6a] sm:$0xff]
        %v786 = vld [vmem:[%s395 + $0x7a] sm:$0xff]
        %v787 = vld [vmem:[%s395 + $0x82] sm:$0xff]
        %v788 = vld [vmem:[%s395 + $0x92] sm:$0xff]
        %v789 = vld [vmem:[%s395 + $0x9a] sm:$0xff]
        %v790 = vld [vmem:[%s395 + $0xaa] sm:$0xff]
        %v791 = vld [vmem:[%s395 + $0xb2] sm:$0xff]
        %v792 = vld [vmem:[%s691 + $0x2] sm:$0x1]
        %v793 = vperm.slane %v792, 0
        %v794 = vmul.f32 %v776, %v793
        %v795 = vmul.f32 %v777, %v793
        %v796 = vmul.f32 %v778, %v793
        %v797 = vmul.f32 %v779, %v793
        %v798 = vmul.f32 %v780, %v793
        %v799 = vmul.f32 %v781, %v793
        %v800 = vmul.f32 %v782, %v793
        %v801 = vmul.f32 %v783, %v793
        %v802 = vmul.f32 %v784, %v793
        %v803 = vmul.f32 %v785, %v793
        %v804 = vmul.f32 %v786, %v793
        %v805 = vmul.f32 %v787, %v793
        %v806 = vmul.f32 %v788, %v793
        %v807 = vmul.f32 %v789, %v793
        %v808 = vmul.f32 %v790, %v793
        %v809 = vmul.f32 %v791, %v793
        %v810 = vadd.f32 %v760, %v794
        %v811 = vadd.f32 %v761, %v795
        %v812 = vadd.f32 %v762, %v796
        %v813 = vadd.f32 %v763, %v797
        %v814 = vadd.f32 %v764, %v798
        %v815 = vadd.f32 %v765, %v799
        %v816 = vadd.f32 %v766, %v800
        %v817 = vadd.f32 %v767, %v801
        %v818 = vadd.f32 %v768, %v802
        %v819 = vadd.f32 %v769, %v803
        %v820 = vadd.f32 %v770, %v804
        %v821 = vadd.f32 %v771, %v805
        %v822 = vadd.f32 %v772, %v806
        %v823 = vadd.f32 %v773, %v807
        %v824 = vadd.f32 %v774, %v808
        %v825 = vadd.f32 %v775, %v809
        %s826 = scalar_lea.vmem [#allocation2], 48
        %v827 = vld [vmem:[%s826] sm:$0xff]
        %v828 = vld [vmem:[%s826 + $0x8] sm:$0xff]
        %v829 = vld [vmem:[%s826 + $0x18] sm:$0xff]
        %v830 = vld [vmem:[%s826 + $0x20] sm:$0xff]
        %v831 = vld [vmem:[%s826 + $0x30] sm:$0xff]
        %v832 = vld [vmem:[%s826 + $0x38] sm:$0xff]
        %v833 = vld [vmem:[%s826 + $0x48] sm:$0xff]
        %v834 = vld [vmem:[%s826 + $0x50] sm:$0xff]
        %v835 = vld [vmem:[%s826 + $0x60] sm:$0xff]
        %v836 = vld [vmem:[%s826 + $0x68] sm:$0xff]
        %v837 = vld [vmem:[%s826 + $0x78] sm:$0xff]
        %v838 = vld [vmem:[%s826 + $0x80] sm:$0xff]
        %v839 = vld [vmem:[%s826 + $0x90] sm:$0xff]
        %v840 = vld [vmem:[%s826 + $0x98] sm:$0xff]
        %v841 = vld [vmem:[%s826 + $0xa8] sm:$0xff]
        %v842 = vld [vmem:[%s826 + $0xb0] sm:$0xff]
        %s843 = scalar_lea.vmem %s1, 8
        %v844 = vld [vmem:[%s843] sm:$0x1]
        %v845 = vperm.slane %v844, 0
        %v846 = vmul.f32 %v827, %v845
        %v847 = vmul.f32 %v828, %v845
        %v848 = vmul.f32 %v829, %v845
        %v849 = vmul.f32 %v830, %v845
        %v850 = vmul.f32 %v831, %v845
        %v851 = vmul.f32 %v832, %v845
        %v852 = vmul.f32 %v833, %v845
        %v853 = vmul.f32 %v834, %v845
        %v854 = vmul.f32 %v835, %v845
        %v855 = vmul.f32 %v836, %v845
        %v856 = vmul.f32 %v837, %v845
        %v857 = vmul.f32 %v838, %v845
        %v858 = vmul.f32 %v839, %v845
        %v859 = vmul.f32 %v840, %v845
        %v860 = vmul.f32 %v841, %v845
        %v861 = vmul.f32 %v842, %v845
        %v862 = vadd.f32 %v810, %v846
        %v863 = vadd.f32 %v811, %v847
        %v864 = vadd.f32 %v812, %v848
        %v865 = vadd.f32 %v813, %v849
        %v866 = vadd.f32 %v814, %v850
        %v867 = vadd.f32 %v815, %v851
        %v868 = vadd.f32 %v816, %v852
        %v869 = vadd.f32 %v817, %v853
        %v870 = vadd.f32 %v818, %v854
        %v871 = vadd.f32 %v819, %v855
        %v872 = vadd.f32 %v820, %v856
        %v873 = vadd.f32 %v821, %v857
        %v874 = vadd.f32 %v822, %v858
        %v875 = vadd.f32 %v823, %v859
        %v876 = vadd.f32 %v824, %v860
        %v877 = vadd.f32 %v825, %v861
        %v878 = vld [vmem:[%s826 + $0x1] sm:$0xff]
        %v879 = vld [vmem:[%s826 + $0x9] sm:$0xff]
        %v880 = vld [vmem:[%s826 + $0x19] sm:$0xff]
        %v881 = vld [vmem:[%s826 + $0x21] sm:$0xff]
        %v882 = vld [vmem:[%s826 + $0x31] sm:$0xff]
        %v883 = vld [vmem:[%s826 + $0x39] sm:$0xff]
        %v884 = vld [vmem:[%s826 + $0x49] sm:$0xff]
        %v885 = vld [vmem:[%s826 + $0x51] sm:$0xff]
        %v886 = vld [vmem:[%s826 + $0x61] sm:$0xff]
        %v887 = vld [vmem:[%s826 + $0x69] sm:$0xff]
        %v888 = vld [vmem:[%s826 + $0x79] sm:$0xff]
        %v889 = vld [vmem:[%s826 + $0x81] sm:$0xff]
        %v890 = vld [vmem:[%s826 + $0x91] sm:$0xff]
        %v891 = vld [vmem:[%s826 + $0x99] sm:$0xff]
        %v892 = vld [vmem:[%s826 + $0xa9] sm:$0xff]
        %v893 = vld [vmem:[%s826 + $0xb1] sm:$0xff]
        %v894 = vld [vmem:[%s843 + $0x1] sm:$0x1]
        %v895 = vperm.slane %v894, 0
        %v896 = vmul.f32 %v878, %v895
        %v897 = vmul.f32 %v879, %v895
        %v898 = vmul.f32 %v880, %v895
        %v899 = vmul.f32 %v881, %v895
        %v900 = vmul.f32 %v882, %v895
        %v901 = vmul.f32 %v883, %v895
        %v902 = vmul.f32 %v884, %v895
        %v903 = vmul.f32 %v885, %v895
        %v904 = vmul.f32 %v886, %v895
        %v905 = vmul.f32 %v887, %v895
        %v906 = vmul.f32 %v888, %v895
        %v907 = vmul.f32 %v889, %v895
        %v908 = vmul.f32 %v890, %v895
        %v909 = vmul.f32 %v891, %v895
        %v910 = vmul.f32 %v892, %v895
        %v911 = vmul.f32 %v893, %v895
        %v912 = vadd.f32 %v862, %v896
        %v913 = vadd.f32 %v863, %v897
        %v914 = vadd.f32 %v864, %v898
        %v915 = vadd.f32 %v865, %v899
        %v916 = vadd.f32 %v866, %v900
        %v917 = vadd.f32 %v867, %v901
        %v918 = vadd.f32 %v868, %v902
        %v919 = vadd.f32 %v869, %v903
        %v920 = vadd.f32 %v870, %v904
        %v921 = vadd.f32 %v871, %v905
        %v922 = vadd.f32 %v872, %v906
        %v923 = vadd.f32 %v873, %v907
        %v924 = vadd.f32 %v874, %v908
        %v925 = vadd.f32 %v875, %v909
        %v926 = vadd.f32 %v876, %v910
        %v927 = vadd.f32 %v877, %v911
        %v928 = vld [vmem:[%s826 + $0x2] sm:$0xff]
        %v929 = vld [vmem:[%s826 + $0xa] sm:$0xff]
        %v930 = vld [vmem:[%s826 + $0x1a] sm:$0xff]
        %v931 = vld [vmem:[%s826 + $0x22] sm:$0xff]
        %v932 = vld [vmem:[%s826 + $0x32] sm:$0xff]
        %v933 = vld [vmem:[%s826 + $0x3a] sm:$0xff]
        %v934 = vld [vmem:[%s826 + $0x4a] sm:$0xff]
        %v935 = vld [vmem:[%s826 + $0x52] sm:$0xff]
        %v936 = vld [vmem:[%s826 + $0x62] sm:$0xff]
        %v937 = vld [vmem:[%s826 + $0x6a] sm:$0xff]
        %v938 = vld [vmem:[%s826 + $0x7a] sm:$0xff]
        %v939 = vld [vmem:[%s826 + $0x82] sm:$0xff]
        %v940 = vld [vmem:[%s826 + $0x92] sm:$0xff]
        %v941 = vld [vmem:[%s826 + $0x9a] sm:$0xff]
        %v942 = vld [vmem:[%s826 + $0xaa] sm:$0xff]
        %v943 = vld [vmem:[%s826 + $0xb2] sm:$0xff]
        %v944 = vld [vmem:[%s843 + $0x2] sm:$0x1]
        %v945 = vperm.slane %v944, 0
        %v946 = vmul.f32 %v928, %v945
        %v947 = vmul.f32 %v929, %v945
        %v948 = vmul.f32 %v930, %v945
        %v949 = vmul.f32 %v931, %v945
        %v950 = vmul.f32 %v932, %v945
        %v951 = vmul.f32 %v933, %v945
        %v952 = vmul.f32 %v934, %v945
        %v953 = vmul.f32 %v935, %v945
        %v954 = vmul.f32 %v936, %v945
        %v955 = vmul.f32 %v937, %v945
        %v956 = vmul.f32 %v938, %v945
        %v957 = vmul.f32 %v939, %v945
        %v958 = vmul.f32 %v940, %v945
        %v959 = vmul.f32 %v941, %v945
        %v960 = vmul.f32 %v942, %v945
        %v961 = vmul.f32 %v943, %v945
        %v962 = vadd.f32 %v912, %v946
        %v963 = vadd.f32 %v913, %v947
        %v964 = vadd.f32 %v914, %v948
        %v965 = vadd.f32 %v915, %v949
        %v966 = vadd.f32 %v916, %v950
        %v967 = vadd.f32 %v917, %v951
        %v968 = vadd.f32 %v918, %v952
        %v969 = vadd.f32 %v919, %v953
        %v970 = vadd.f32 %v920, %v954
        %v971 = vadd.f32 %v921, %v955
        %v972 = vadd.f32 %v922, %v956
        %v973 = vadd.f32 %v923, %v957
        %v974 = vadd.f32 %v924, %v958
        %v975 = vadd.f32 %v925, %v959
        %v976 = vadd.f32 %v926, %v960
        %v977 = vadd.f32 %v927, %v961
        %v978 = vld [vmem:[%s2] sm:$0x1]
        %v980 = vperm.slane %v978, 0
        %v982 = vmul.f32 %v962, %v980
        %v983 = vmul.f32 %v963, %v980
        %v984 = vmul.f32 %v964, %v980
        %v985 = vmul.f32 %v965, %v980
        %v986 = vmul.f32 %v966, %v980
        %v987 = vmul.f32 %v967, %v980
        %v988 = vmul.f32 %v968, %v980
        %v989 = vmul.f32 %v969, %v980
        %v990 = vmul.f32 %v970, %v980
        %v991 = vmul.f32 %v971, %v980
        %v992 = vmul.f32 %v972, %v980
        %v993 = vmul.f32 %v973, %v980
        %v994 = vmul.f32 %v974, %v980
        %v995 = vmul.f32 %v975, %v980
        %v996 = vmul.f32 %v976, %v980
        %v997 = vmul.f32 %v977, %v980
        %v998 = vld [vmem:[%s3] sm:$0x1]
        %v1000 = vperm.slane %v998, 0
        %v1002 = vadd.f32 %v982, %v1000
        %v1003 = vadd.f32 %v983, %v1000
        %v1004 = vadd.f32 %v984, %v1000
        %v1005 = vadd.f32 %v985, %v1000
        %v1006 = vadd.f32 %v986, %v1000
        %v1007 = vadd.f32 %v987, %v1000
        %v1008 = vadd.f32 %v988, %v1000
        %v1009 = vadd.f32 %v989, %v1000
        %v1010 = vadd.f32 %v990, %v1000
        %v1011 = vadd.f32 %v991, %v1000
        %v1012 = vadd.f32 %v992, %v1000
        %v1013 = vadd.f32 %v993, %v1000
        %v1014 = vadd.f32 %v994, %v1000
        %v1015 = vadd.f32 %v995, %v1000
        %v1016 = vadd.f32 %v996, %v1000
        %v1017 = vadd.f32 %v997, %v1000
        %v1018 = vadd.f32 %v1002, 3.0
        %v1019 = vadd.f32 %v1003, 3.0
        %v1020 = vadd.f32 %v1004, 3.0
        %v1021 = vadd.f32 %v1005, 3.0
        %v1022 = vadd.f32 %v1006, 3.0
        %v1023 = vadd.f32 %v1007, 3.0
        %v1024 = vadd.f32 %v1008, 3.0
        %v1025 = vadd.f32 %v1009, 3.0
        %v1026 = vadd.f32 %v1010, 3.0
        %v1027 = vadd.f32 %v1011, 3.0
        %v1028 = vadd.f32 %v1012, 3.0
        %v1029 = vadd.f32 %v1013, 3.0
        %v1030 = vadd.f32 %v1014, 3.0
        %v1031 = vadd.f32 %v1015, 3.0
        %v1032 = vadd.f32 %v1016, 3.0
        %v1033 = vadd.f32 %v1017, 3.0
        %v1034 = vmax.f32 %v1018, 0.0
        %v1035 = vmax.f32 %v1019, 0.0
        %v1036 = vmax.f32 %v1020, 0.0
        %v1037 = vmax.f32 %v1021, 0.0
        %v1038 = vmax.f32 %v1022, 0.0
        %v1039 = vmax.f32 %v1023, 0.0
        %v1040 = vmax.f32 %v1024, 0.0
        %v1041 = vmax.f32 %v1025, 0.0
        %v1042 = vmax.f32 %v1026, 0.0
        %v1043 = vmax.f32 %v1027, 0.0
        %v1044 = vmax.f32 %v1028, 0.0
        %v1045 = vmax.f32 %v1029, 0.0
        %v1046 = vmax.f32 %v1030, 0.0
        %v1047 = vmax.f32 %v1031, 0.0
        %v1048 = vmax.f32 %v1032, 0.0
        %v1049 = vmax.f32 %v1033, 0.0
        %v1050 = vmin.f32 %v1034, 6.0
        %v1051 = vmin.f32 %v1035, 6.0
        %v1052 = vmin.f32 %v1036, 6.0
        %v1053 = vmin.f32 %v1037, 6.0
        %v1054 = vmin.f32 %v1038, 6.0
        %v1055 = vmin.f32 %v1039, 6.0
        %v1056 = vmin.f32 %v1040, 6.0
        %v1057 = vmin.f32 %v1041, 6.0
        %v1058 = vmin.f32 %v1042, 6.0
        %v1059 = vmin.f32 %v1043, 6.0
        %v1060 = vmin.f32 %v1044, 6.0
        %v1061 = vmin.f32 %v1045, 6.0
        %v1062 = vmin.f32 %v1046, 6.0
        %v1063 = vmin.f32 %v1047, 6.0
        %v1064 = vmin.f32 %v1048, 6.0
        %v1065 = vmin.f32 %v1049, 6.0
        %v1066 = vmul.f32 %v1002, %v1050
        %v1067 = vmul.f32 %v1003, %v1051
        %v1068 = vmul.f32 %v1004, %v1052
        %v1069 = vmul.f32 %v1005, %v1053
        %v1070 = vmul.f32 %v1006, %v1054
        %v1071 = vmul.f32 %v1007, %v1055
        %v1072 = vmul.f32 %v1008, %v1056
        %v1073 = vmul.f32 %v1009, %v1057
        %v1074 = vmul.f32 %v1010, %v1058
        %v1075 = vmul.f32 %v1011, %v1059
        %v1076 = vmul.f32 %v1012, %v1060
        %v1077 = vmul.f32 %v1013, %v1061
        %v1078 = vmul.f32 %v1014, %v1062
        %v1079 = vmul.f32 %v1015, %v1063
        %v1080 = vmul.f32 %v1016, %v1064
        %v1081 = vmul.f32 %v1017, %v1065
        %v1082 = vmul.f32 %v1066, 0.16666667
        %v1083 = vmul.f32 %v1067, 0.16666667
        %v1084 = vmul.f32 %v1068, 0.16666667
        %v1085 = vmul.f32 %v1069, 0.16666667
        %v1086 = vmul.f32 %v1070, 0.16666667
        %v1087 = vmul.f32 %v1071, 0.16666667
        %v1088 = vmul.f32 %v1072, 0.16666667
        %v1089 = vmul.f32 %v1073, 0.16666667
        %v1090 = vmul.f32 %v1074, 0.16666667
        %v1091 = vmul.f32 %v1075, 0.16666667
        %v1092 = vmul.f32 %v1076, 0.16666667
        %v1093 = vmul.f32 %v1077, 0.16666667
        %v1094 = vmul.f32 %v1078, 0.16666667
        %v1095 = vmul.f32 %v1079, 0.16666667
        %v1096 = vmul.f32 %v1080, 0.16666667
        %v1097 = vmul.f32 %v1081, 0.16666667
        %v1098 = vsel %vm386, %v1082, 0.0
        %v1099 = vsel %vm386, %v1083, 0.0
        %v1100 = vadd.f32 %v1098, %v1099
        %v1101 = vsel %vm386, %v1084, 0.0
        %v1102 = vadd.f32 %v1100, %v1101
        %v1103 = vsel %vm386, %v1085, 0.0
        %v1104 = vadd.f32 %v1102, %v1103
        %v1105 = vsel %vm386, %v1086, 0.0
        %v1106 = vadd.f32 %v1104, %v1105
        %v1107 = vsel %vm386, %v1087, 0.0
        %v1108 = vadd.f32 %v1106, %v1107
        %v1109 = vsel %vm386, %v1088, 0.0
        %v1110 = vadd.f32 %v1108, %v1109
        %v1111 = vsel %vm386, %v1089, 0.0
        %v1112 = vadd.f32 %v1110, %v1111
        %v1113 = vsel %vm386, %v1090, 0.0
        %v1114 = vadd.f32 %v1112, %v1113
        %v1115 = vsel %vm386, %v1091, 0.0
        %v1116 = vadd.f32 %v1114, %v1115
        %v1117 = vsel %vm386, %v1092, 0.0
        %v1118 = vadd.f32 %v1116, %v1117
        %v1119 = vsel %vm386, %v1093, 0.0
        %v1120 = vadd.f32 %v1118, %v1119
        %v1121 = vsel %vm386, %v1094, 0.0
        %v1122 = vadd.f32 %v1120, %v1121
        %v1123 = vsel %vm386, %v1095, 0.0
        %v1124 = vadd.f32 %v1122, %v1123
        %v1125 = vsel %vm386, %v1096, 0.0
        %v1126 = vadd.f32 %v1124, %v1125
        %v1127 = vsel %vm386, %v1097, 0.0
        %v1128 = vadd.f32 %v1126, %v1127
        %v1129 = vrot.slane %v1128, 4
        %v1130 = vadd.f32 %v1128, %v1129
        %v1131 = vrot.slane %v1130, 2
        %v1132 = vadd.f32 %v1130, %v1131
        %v1133 = vrot.slane %v1132, 1
        %v1134 = vadd.f32 %v1132, %v1133
        %v1135 = vadd.f32 %v1134, 0.0
        %v1136 = vpack.c.bf16 %v1082, %v1082
        %v1137 = vpack.c.bf16 %v1083, %v1083
        %v1138 = vpack.c.bf16 %v1084, %v1084
        %v1139 = vpack.c.bf16 %v1085, %v1085
        %v1140 = vpack.c.bf16 %v1086, %v1086
        %v1141 = vpack.c.bf16 %v1087, %v1087
        %v1142 = vpack.c.bf16 %v1088, %v1088
        %v1143 = vpack.c.bf16 %v1089, %v1089
        %v1144 = vpack.c.bf16 %v1090, %v1090
        %v1145 = vpack.c.bf16 %v1091, %v1091
        %v1146 = vpack.c.bf16 %v1092, %v1092
        %v1147 = vpack.c.bf16 %v1093, %v1093
        %v1148 = vpack.c.bf16 %v1094, %v1094
        %v1149 = vpack.c.bf16 %v1095, %v1095
        %v1150 = vpack.c.bf16 %v1096, %v1096
        %v1151 = vpack.c.bf16 %v1097, %v1097
        %vm1152 = vcmask 60416
        %1153 = vst.msk [vmem:[#allocation3] sm:$0xf] %vm1152, %v1136
        %1154 = vst.msk [vmem:[#allocation3 + $0x4] sm:$0xf] %vm1152, %v1137
        %1155 = vst.msk [vmem:[#allocation3 + $0x8] sm:$0xf] %vm1152, %v1138
        %1156 = vst.msk [vmem:[#allocation3 + $0xc] sm:$0xf] %vm1152, %v1139
        %1157 = vst.msk [vmem:[#allocation3 + $0x10] sm:$0xf] %vm1152, %v1140
        %1158 = vst.msk [vmem:[#allocation3 + $0x14] sm:$0xf] %vm1152, %v1141
        %1159 = vst.msk [vmem:[#allocation3 + $0x18] sm:$0xf] %vm1152, %v1142
        %1160 = vst.msk [vmem:[#allocation3 + $0x1c] sm:$0xf] %vm1152, %v1143
        %1161 = vst.msk [vmem:[#allocation3 + $0x20] sm:$0xf] %vm1152, %v1144
        %1162 = vst.msk [vmem:[#allocation3 + $0x24] sm:$0xf] %vm1152, %v1145
        %1163 = vst.msk [vmem:[#allocation3 + $0x28] sm:$0xf] %vm1152, %v1146
        %1164 = vst.msk [vmem:[#allocation3 + $0x2c] sm:$0xf] %vm1152, %v1147
        %1165 = vst.msk [vmem:[#allocation3 + $0x30] sm:$0xf] %vm1152, %v1148
        %1166 = vst.msk [vmem:[#allocation3 + $0x34] sm:$0xf] %vm1152, %v1149
        %1167 = vst.msk [vmem:[#allocation3 + $0x38] sm:$0xf] %vm1152, %v1150
        %1168 = vst.msk [vmem:[#allocation3 + $0x3c] sm:$0xf] %vm1152, %v1151
        %s1169 = scalar_lea.vmem [#allocation2], 192
        %v1170 = vld [vmem:[%s1169] sm:$0xff]
        %v1171 = vld [vmem:[%s1169 + $0x8] sm:$0xff]
        %v1172 = vld [vmem:[%s1169 + $0x18] sm:$0xff]
        %v1173 = vld [vmem:[%s1169 + $0x20] sm:$0xff]
        %v1174 = vld [vmem:[%s1169 + $0x30] sm:$0xff]
        %v1175 = vld [vmem:[%s1169 + $0x38] sm:$0xff]
        %v1176 = vld [vmem:[%s1169 + $0x48] sm:$0xff]
        %v1177 = vld [vmem:[%s1169 + $0x50] sm:$0xff]
        %v1178 = vld [vmem:[%s1169 + $0x60] sm:$0xff]
        %v1179 = vld [vmem:[%s1169 + $0x68] sm:$0xff]
        %v1180 = vld [vmem:[%s1169 + $0x78] sm:$0xff]
        %v1181 = vld [vmem:[%s1169 + $0x80] sm:$0xff]
        %v1182 = vld [vmem:[%s1169 + $0x90] sm:$0xff]
        %v1183 = vld [vmem:[%s1169 + $0x98] sm:$0xff]
        %v1184 = vld [vmem:[%s1169 + $0xa8] sm:$0xff]
        %v1185 = vld [vmem:[%s1169 + $0xb0] sm:$0xff]
        %v1186 = vld [vmem:[%s1] sm:$0x1]
        %v1187 = vperm.slane %v1186, 0
        %v1188 = vmul.f32 %v1170, %v1187
        %v1189 = vmul.f32 %v1171, %v1187
        %v1190 = vmul.f32 %v1172, %v1187
        %v1191 = vmul.f32 %v1173, %v1187
        %v1192 = vmul.f32 %v1174, %v1187
        %v1193 = vmul.f32 %v1175, %v1187
        %v1194 = vmul.f32 %v1176, %v1187
        %v1195 = vmul.f32 %v1177, %v1187
        %v1196 = vmul.f32 %v1178, %v1187
        %v1197 = vmul.f32 %v1179, %v1187
        %v1198 = vmul.f32 %v1180, %v1187
        %v1199 = vmul.f32 %v1181, %v1187
        %v1200 = vmul.f32 %v1182, %v1187
        %v1201 = vmul.f32 %v1183, %v1187
        %v1202 = vmul.f32 %v1184, %v1187
        %v1203 = vmul.f32 %v1185, %v1187
        %v1204 = vadd.f32 %v1188, 0.0
        %v1205 = vadd.f32 %v1189, 0.0
        %v1206 = vadd.f32 %v1190, 0.0
        %v1207 = vadd.f32 %v1191, 0.0
        %v1208 = vadd.f32 %v1192, 0.0
        %v1209 = vadd.f32 %v1193, 0.0
        %v1210 = vadd.f32 %v1194, 0.0
        %v1211 = vadd.f32 %v1195, 0.0
        %v1212 = vadd.f32 %v1196, 0.0
        %v1213 = vadd.f32 %v1197, 0.0
        %v1214 = vadd.f32 %v1198, 0.0
        %v1215 = vadd.f32 %v1199, 0.0
        %v1216 = vadd.f32 %v1200, 0.0
        %v1217 = vadd.f32 %v1201, 0.0
        %v1218 = vadd.f32 %v1202, 0.0
        %v1219 = vadd.f32 %v1203, 0.0
        %v1220 = vld [vmem:[%s1169 + $0x1] sm:$0xff]
        %v1221 = vld [vmem:[%s1169 + $0x9] sm:$0xff]
        %v1222 = vld [vmem:[%s1169 + $0x19] sm:$0xff]
        %v1223 = vld [vmem:[%s1169 + $0x21] sm:$0xff]
        %v1224 = vld [vmem:[%s1169 + $0x31] sm:$0xff]
        %v1225 = vld [vmem:[%s1169 + $0x39] sm:$0xff]
        %v1226 = vld [vmem:[%s1169 + $0x49] sm:$0xff]
        %v1227 = vld [vmem:[%s1169 + $0x51] sm:$0xff]
        %v1228 = vld [vmem:[%s1169 + $0x61] sm:$0xff]
        %v1229 = vld [vmem:[%s1169 + $0x69] sm:$0xff]
        %v1230 = vld [vmem:[%s1169 + $0x79] sm:$0xff]
        %v1231 = vld [vmem:[%s1169 + $0x81] sm:$0xff]
        %v1232 = vld [vmem:[%s1169 + $0x91] sm:$0xff]
        %v1233 = vld [vmem:[%s1169 + $0x99] sm:$0xff]
        %v1234 = vld [vmem:[%s1169 + $0xa9] sm:$0xff]
        %v1235 = vld [vmem:[%s1169 + $0xb1] sm:$0xff]
        %v1236 = vld [vmem:[%s1 + $0x1] sm:$0x1]
        %v1237 = vperm.slane %v1236, 0
        %v1238 = vmul.f32 %v1220, %v1237
        %v1239 = vmul.f32 %v1221, %v1237
        %v1240 = vmul.f32 %v1222, %v1237
        %v1241 = vmul.f32 %v1223, %v1237
        %v1242 = vmul.f32 %v1224, %v1237
        %v1243 = vmul.f32 %v1225, %v1237
        %v1244 = vmul.f32 %v1226, %v1237
        %v1245 = vmul.f32 %v1227, %v1237
        %v1246 = vmul.f32 %v1228, %v1237
        %v1247 = vmul.f32 %v1229, %v1237
        %v1248 = vmul.f32 %v1230, %v1237
        %v1249 = vmul.f32 %v1231, %v1237
        %v1250 = vmul.f32 %v1232, %v1237
        %v1251 = vmul.f32 %v1233, %v1237
        %v1252 = vmul.f32 %v1234, %v1237
        %v1253 = vmul.f32 %v1235, %v1237
        %v1254 = vadd.f32 %v1204, %v1238
        %v1255 = vadd.f32 %v1205, %v1239
        %v1256 = vadd.f32 %v1206, %v1240
        %v1257 = vadd.f32 %v1207, %v1241
        %v1258 = vadd.f32 %v1208, %v1242
        %v1259 = vadd.f32 %v1209, %v1243
        %v1260 = vadd.f32 %v1210, %v1244
        %v1261 = vadd.f32 %v1211, %v1245
        %v1262 = vadd.f32 %v1212, %v1246
        %v1263 = vadd.f32 %v1213, %v1247
        %v1264 = vadd.f32 %v1214, %v1248
        %v1265 = vadd.f32 %v1215, %v1249
        %v1266 = vadd.f32 %v1216, %v1250
        %v1267 = vadd.f32 %v1217, %v1251
        %v1268 = vadd.f32 %v1218, %v1252
        %v1269 = vadd.f32 %v1219, %v1253
        %v1270 = vld [vmem:[%s1169 + $0x2] sm:$0xff]
        %v1271 = vld [vmem:[%s1169 + $0xa] sm:$0xff]
        %v1272 = vld [vmem:[%s1169 + $0x1a] sm:$0xff]
        %v1273 = vld [vmem:[%s1169 + $0x22] sm:$0xff]
        %v1274 = vld [vmem:[%s1169 + $0x32] sm:$0xff]
        %v1275 = vld [vmem:[%s1169 + $0x3a] sm:$0xff]
        %v1276 = vld [vmem:[%s1169 + $0x4a] sm:$0xff]
        %v1277 = vld [vmem:[%s1169 + $0x52] sm:$0xff]
        %v1278 = vld [vmem:[%s1169 + $0x62] sm:$0xff]
        %v1279 = vld [vmem:[%s1169 + $0x6a] sm:$0xff]
        %v1280 = vld [vmem:[%s1169 + $0x7a] sm:$0xff]
        %v1281 = vld [vmem:[%s1169 + $0x82] sm:$0xff]
        %v1282 = vld [vmem:[%s1169 + $0x92] sm:$0xff]
        %v1283 = vld [vmem:[%s1169 + $0x9a] sm:$0xff]
        %v1284 = vld [vmem:[%s1169 + $0xaa] sm:$0xff]
        %v1285 = vld [vmem:[%s1169 + $0xb2] sm:$0xff]
        %v1286 = vld [vmem:[%s1 + $0x2] sm:$0x1]
        %v1287 = vperm.slane %v1286, 0
        %v1288 = vmul.f32 %v1270, %v1287
        %v1289 = vmul.f32 %v1271, %v1287
        %v1290 = vmul.f32 %v1272, %v1287
        %v1291 = vmul.f32 %v1273, %v1287
        %v1292 = vmul.f32 %v1274, %v1287
        %v1293 = vmul.f32 %v1275, %v1287
        %v1294 = vmul.f32 %v1276, %v1287
        %v1295 = vmul.f32 %v1277, %v1287
        %v1296 = vmul.f32 %v1278, %v1287
        %v1297 = vmul.f32 %v1279, %v1287
        %v1298 = vmul.f32 %v1280, %v1287
        %v1299 = vmul.f32 %v1281, %v1287
        %v1300 = vmul.f32 %v1282, %v1287
        %v1301 = vmul.f32 %v1283, %v1287
        %v1302 = vmul.f32 %v1284, %v1287
        %v1303 = vmul.f32 %v1285, %v1287
        %v1304 = vadd.f32 %v1254, %v1288
        %v1305 = vadd.f32 %v1255, %v1289
        %v1306 = vadd.f32 %v1256, %v1290
        %v1307 = vadd.f32 %v1257, %v1291
        %v1308 = vadd.f32 %v1258, %v1292
        %v1309 = vadd.f32 %v1259, %v1293
        %v1310 = vadd.f32 %v1260, %v1294
        %v1311 = vadd.f32 %v1261, %v1295
        %v1312 = vadd.f32 %v1262, %v1296
        %v1313 = vadd.f32 %v1263, %v1297
        %v1314 = vadd.f32 %v1264, %v1298
        %v1315 = vadd.f32 %v1265, %v1299
        %v1316 = vadd.f32 %v1266, %v1300
        %v1317 = vadd.f32 %v1267, %v1301
        %v1318 = vadd.f32 %v1268, %v1302
        %v1319 = vadd.f32 %v1269, %v1303
        %s1320 = scalar_lea.vmem [#allocation2], 216
        %v1321 = vld [vmem:[%s1320] sm:$0xff]
        %v1322 = vld [vmem:[%s1320 + $0x8] sm:$0xff]
        %v1323 = vld [vmem:[%s1320 + $0x18] sm:$0xff]
        %v1324 = vld [vmem:[%s1320 + $0x20] sm:$0xff]
        %v1325 = vld [vmem:[%s1320 + $0x30] sm:$0xff]
        %v1326 = vld [vmem:[%s1320 + $0x38] sm:$0xff]
        %v1327 = vld [vmem:[%s1320 + $0x48] sm:$0xff]
        %v1328 = vld [vmem:[%s1320 + $0x50] sm:$0xff]
        %v1329 = vld [vmem:[%s1320 + $0x60] sm:$0xff]
        %v1330 = vld [vmem:[%s1320 + $0x68] sm:$0xff]
        %v1331 = vld [vmem:[%s1320 + $0x78] sm:$0xff]
        %v1332 = vld [vmem:[%s1320 + $0x80] sm:$0xff]
        %v1333 = vld [vmem:[%s1320 + $0x90] sm:$0xff]
        %v1334 = vld [vmem:[%s1320 + $0x98] sm:$0xff]
        %v1335 = vld [vmem:[%s1320 + $0xa8] sm:$0xff]
        %v1336 = vld [vmem:[%s1320 + $0xb0] sm:$0xff]
        %v1337 = vld [vmem:[%s691] sm:$0x1]
        %v1338 = vperm.slane %v1337, 0
        %v1339 = vmul.f32 %v1321, %v1338
        %v1340 = vmul.f32 %v1322, %v1338
        %v1341 = vmul.f32 %v1323, %v1338
        %v1342 = vmul.f32 %v1324, %v1338
        %v1343 = vmul.f32 %v1325, %v1338
        %v1344 = vmul.f32 %v1326, %v1338
        %v1345 = vmul.f32 %v1327, %v1338
        %v1346 = vmul.f32 %v1328, %v1338
        %v1347 = vmul.f32 %v1329, %v1338
        %v1348 = vmul.f32 %v1330, %v1338
        %v1349 = vmul.f32 %v1331, %v1338
        %v1350 = vmul.f32 %v1332, %v1338
        %v1351 = vmul.f32 %v1333, %v1338
        %v1352 = vmul.f32 %v1334, %v1338
        %v1353 = vmul.f32 %v1335, %v1338
        %v1354 = vmul.f32 %v1336, %v1338
        %v1355 = vadd.f32 %v1304, %v1339
        %v1356 = vadd.f32 %v1305, %v1340
        %v1357 = vadd.f32 %v1306, %v1341
        %v1358 = vadd.f32 %v1307, %v1342
        %v1359 = vadd.f32 %v1308, %v1343
        %v1360 = vadd.f32 %v1309, %v1344
        %v1361 = vadd.f32 %v1310, %v1345
        %v1362 = vadd.f32 %v1311, %v1346
        %v1363 = vadd.f32 %v1312, %v1347
        %v1364 = vadd.f32 %v1313, %v1348
        %v1365 = vadd.f32 %v1314, %v1349
        %v1366 = vadd.f32 %v1315, %v1350
        %v1367 = vadd.f32 %v1316, %v1351
        %v1368 = vadd.f32 %v1317, %v1352
        %v1369 = vadd.f32 %v1318, %v1353
        %v1370 = vadd.f32 %v1319, %v1354
        %v1371 = vld [vmem:[%s1320 + $0x1] sm:$0xff]
        %v1372 = vld [vmem:[%s1320 + $0x9] sm:$0xff]
        %v1373 = vld [vmem:[%s1320 + $0x19] sm:$0xff]
        %v1374 = vld [vmem:[%s1320 + $0x21] sm:$0xff]
        %v1375 = vld [vmem:[%s1320 + $0x31] sm:$0xff]
        %v1376 = vld [vmem:[%s1320 + $0x39] sm:$0xff]
        %v1377 = vld [vmem:[%s1320 + $0x49] sm:$0xff]
        %v1378 = vld [vmem:[%s1320 + $0x51] sm:$0xff]
        %v1379 = vld [vmem:[%s1320 + $0x61] sm:$0xff]
        %v1380 = vld [vmem:[%s1320 + $0x69] sm:$0xff]
        %v1381 = vld [vmem:[%s1320 + $0x79] sm:$0xff]
        %v1382 = vld [vmem:[%s1320 + $0x81] sm:$0xff]
        %v1383 = vld [vmem:[%s1320 + $0x91] sm:$0xff]
        %v1384 = vld [vmem:[%s1320 + $0x99] sm:$0xff]
        %v1385 = vld [vmem:[%s1320 + $0xa9] sm:$0xff]
        %v1386 = vld [vmem:[%s1320 + $0xb1] sm:$0xff]
        %v1387 = vld [vmem:[%s691 + $0x1] sm:$0x1]
        %v1388 = vperm.slane %v1387, 0
        %v1389 = vmul.f32 %v1371, %v1388
        %v1390 = vmul.f32 %v1372, %v1388
        %v1391 = vmul.f32 %v1373, %v1388
        %v1392 = vmul.f32 %v1374, %v1388
        %v1393 = vmul.f32 %v1375, %v1388
        %v1394 = vmul.f32 %v1376, %v1388
        %v1395 = vmul.f32 %v1377, %v1388
        %v1396 = vmul.f32 %v1378, %v1388
        %v1397 = vmul.f32 %v1379, %v1388
        %v1398 = vmul.f32 %v1380, %v1388
        %v1399 = vmul.f32 %v1381, %v1388
        %v1400 = vmul.f32 %v1382, %v1388
        %v1401 = vmul.f32 %v1383, %v1388
        %v1402 = vmul.f32 %v1384, %v1388
        %v1403 = vmul.f32 %v1385, %v1388
        %v1404 = vmul.f32 %v1386, %v1388
        %v1405 = vadd.f32 %v1355, %v1389
        %v1406 = vadd.f32 %v1356, %v1390
        %v1407 = vadd.f32 %v1357, %v1391
        %v1408 = vadd.f32 %v1358, %v1392
        %v1409 = vadd.f32 %v1359, %v1393
        %v1410 = vadd.f32 %v1360, %v1394
        %v1411 = vadd.f32 %v1361, %v1395
        %v1412 = vadd.f32 %v1362, %v1396
        %v1413 = vadd.f32 %v1363, %v1397
        %v1414 = vadd.f32 %v1364, %v1398
        %v1415 = vadd.f32 %v1365, %v1399
        %v1416 = vadd.f32 %v1366, %v1400
        %v1417 = vadd.f32 %v1367, %v1401
        %v1418 = vadd.f32 %v1368, %v1402
        %v1419 = vadd.f32 %v1369, %v1403
        %v1420 = vadd.f32 %v1370, %v1404
        %v1421 = vld [vmem:[%s1320 + $0x2] sm:$0xff]
        %v1422 = vld [vmem:[%s1320 + $0xa] sm:$0xff]
        %v1423 = vld [vmem:[%s1320 + $0x1a] sm:$0xff]
        %v1424 = vld [vmem:[%s1320 + $0x22] sm:$0xff]
        %v1425 = vld [vmem:[%s1320 + $0x32] sm:$0xff]
        %v1426 = vld [vmem:[%s1320 + $0x3a] sm:$0xff]
        %v1427 = vld [vmem:[%s1320 + $0x4a] sm:$0xff]
        %v1428 = vld [vmem:[%s1320 + $0x52] sm:$0xff]
        %v1429 = vld [vmem:[%s1320 + $0x62] sm:$0xff]
        %v1430 = vld [vmem:[%s1320 + $0x6a] sm:$0xff]
        %v1431 = vld [vmem:[%s1320 + $0x7a] sm:$0xff]
        %v1432 = vld [vmem:[%s1320 + $0x82] sm:$0xff]
        %v1433 = vld [vmem:[%s1320 + $0x92] sm:$0xff]
        %v1434 = vld [vmem:[%s1320 + $0x9a] sm:$0xff]
        %v1435 = vld [vmem:[%s1320 + $0xaa] sm:$0xff]
        %v1436 = vld [vmem:[%s1320 + $0xb2] sm:$0xff]
        %v1437 = vld [vmem:[%s691 + $0x2] sm:$0x1]
        %v1438 = vperm.slane %v1437, 0
        %v1439 = vmul.f32 %v1421, %v1438
        %v1440 = vmul.f32 %v1422, %v1438
        %v1441 = vmul.f32 %v1423, %v1438
        %v1442 = vmul.f32 %v1424, %v1438
        %v1443 = vmul.f32 %v1425, %v1438
        %v1444 = vmul.f32 %v1426, %v1438
        %v1445 = vmul.f32 %v1427, %v1438
        %v1446 = vmul.f32 %v1428, %v1438
        %v1447 = vmul.f32 %v1429, %v1438
        %v1448 = vmul.f32 %v1430, %v1438
        %v1449 = vmul.f32 %v1431, %v1438
        %v1450 = vmul.f32 %v1432, %v1438
        %v1451 = vmul.f32 %v1433, %v1438
        %v1452 = vmul.f32 %v1434, %v1438
        %v1453 = vmul.f32 %v1435, %v1438
        %v1454 = vmul.f32 %v1436, %v1438
        %v1455 = vadd.f32 %v1405, %v1439
        %v1456 = vadd.f32 %v1406, %v1440
        %v1457 = vadd.f32 %v1407, %v1441
        %v1458 = vadd.f32 %v1408, %v1442
        %v1459 = vadd.f32 %v1409, %v1443
        %v1460 = vadd.f32 %v1410, %v1444
        %v1461 = vadd.f32 %v1411, %v1445
        %v1462 = vadd.f32 %v1412, %v1446
        %v1463 = vadd.f32 %v1413, %v1447
        %v1464 = vadd.f32 %v1414, %v1448
        %v1465 = vadd.f32 %v1415, %v1449
        %v1466 = vadd.f32 %v1416, %v1450
        %v1467 = vadd.f32 %v1417, %v1451
        %v1468 = vadd.f32 %v1418, %v1452
        %v1469 = vadd.f32 %v1419, %v1453
        %v1470 = vadd.f32 %v1420, %v1454
        %s1471 = scalar_lea.vmem [#allocation2], 240
        %v1472 = vld [vmem:[%s1471] sm:$0xff]
        %v1473 = vld [vmem:[%s1471 + $0x8] sm:$0xff]
        %v1474 = vld [vmem:[%s1471 + $0x18] sm:$0xff]
        %v1475 = vld [vmem:[%s1471 + $0x20] sm:$0xff]
        %v1476 = vld [vmem:[%s1471 + $0x30] sm:$0xff]
        %v1477 = vld [vmem:[%s1471 + $0x38] sm:$0xff]
        %v1478 = vld [vmem:[%s1471 + $0x48] sm:$0xff]
        %v1479 = vld [vmem:[%s1471 + $0x50] sm:$0xff]
        %v1480 = vld [vmem:[%s1471 + $0x60] sm:$0xff]
        %v1481 = vld [vmem:[%s1471 + $0x68] sm:$0xff]
        %v1482 = vld [vmem:[%s1471 + $0x78] sm:$0xff]
        %v1483 = vld [vmem:[%s1471 + $0x80] sm:$0xff]
        %v1484 = vld [vmem:[%s1471 + $0x90] sm:$0xff]
        %v1485 = vld [vmem:[%s1471 + $0x98] sm:$0xff]
        %v1486 = vld [vmem:[%s1471 + $0xa8] sm:$0xff]
        %v1487 = vld [vmem:[%s1471 + $0xb0] sm:$0xff]
        %v1488 = vld [vmem:[%s843] sm:$0x1]
        %v1489 = vperm.slane %v1488, 0
        %v1490 = vmul.f32 %v1472, %v1489
        %v1491 = vmul.f32 %v1473, %v1489
        %v1492 = vmul.f32 %v1474, %v1489
        %v1493 = vmul.f32 %v1475, %v1489
        %v1494 = vmul.f32 %v1476, %v1489
        %v1495 = vmul.f32 %v1477, %v1489
        %v1496 = vmul.f32 %v1478, %v1489
        %v1497 = vmul.f32 %v1479, %v1489
        %v1498 = vmul.f32 %v1480, %v1489
        %v1499 = vmul.f32 %v1481, %v1489
        %v1500 = vmul.f32 %v1482, %v1489
        %v1501 = vmul.f32 %v1483, %v1489
        %v1502 = vmul.f32 %v1484, %v1489
        %v1503 = vmul.f32 %v1485, %v1489
        %v1504 = vmul.f32 %v1486, %v1489
        %v1505 = vmul.f32 %v1487, %v1489
        %v1506 = vadd.f32 %v1455, %v1490
        %v1507 = vadd.f32 %v1456, %v1491
        %v1508 = vadd.f32 %v1457, %v1492
        %v1509 = vadd.f32 %v1458, %v1493
        %v1510 = vadd.f32 %v1459, %v1494
        %v1511 = vadd.f32 %v1460, %v1495
        %v1512 = vadd.f32 %v1461, %v1496
        %v1513 = vadd.f32 %v1462, %v1497
        %v1514 = vadd.f32 %v1463, %v1498
        %v1515 = vadd.f32 %v1464, %v1499
        %v1516 = vadd.f32 %v1465, %v1500
        %v1517 = vadd.f32 %v1466, %v1501
        %v1518 = vadd.f32 %v1467, %v1502
        %v1519 = vadd.f32 %v1468, %v1503
        %v1520 = vadd.f32 %v1469, %v1504
        %v1521 = vadd.f32 %v1470, %v1505
        %v1522 = vld [vmem:[%s1471 + $0x1] sm:$0xff]
        %v1523 = vld [vmem:[%s1471 + $0x9] sm:$0xff]
        %v1524 = vld [vmem:[%s1471 + $0x19] sm:$0xff]
        %v1525 = vld [vmem:[%s1471 + $0x21] sm:$0xff]
        %v1526 = vld [vmem:[%s1471 + $0x31] sm:$0xff]
        %v1527 = vld [vmem:[%s1471 + $0x39] sm:$0xff]
        %v1528 = vld [vmem:[%s1471 + $0x49] sm:$0xff]
        %v1529 = vld [vmem:[%s1471 + $0x51] sm:$0xff]
        %v1530 = vld [vmem:[%s1471 + $0x61] sm:$0xff]
        %v1531 = vld [vmem:[%s1471 + $0x69] sm:$0xff]
        %v1532 = vld [vmem:[%s1471 + $0x79] sm:$0xff]
        %v1533 = vld [vmem:[%s1471 + $0x81] sm:$0xff]
        %v1534 = vld [vmem:[%s1471 + $0x91] sm:$0xff]
        %v1535 = vld [vmem:[%s1471 + $0x99] sm:$0xff]
        %v1536 = vld [vmem:[%s1471 + $0xa9] sm:$0xff]
        %v1537 = vld [vmem:[%s1471 + $0xb1] sm:$0xff]
        %v1538 = vld [vmem:[%s843 + $0x1] sm:$0x1]
        %v1539 = vperm.slane %v1538, 0
        %v1540 = vmul.f32 %v1522, %v1539
        %v1541 = vmul.f32 %v1523, %v1539
        %v1542 = vmul.f32 %v1524, %v1539
        %v1543 = vmul.f32 %v1525, %v1539
        %v1544 = vmul.f32 %v1526, %v1539
        %v1545 = vmul.f32 %v1527, %v1539
        %v1546 = vmul.f32 %v1528, %v1539
        %v1547 = vmul.f32 %v1529, %v1539
        %v1548 = vmul.f32 %v1530, %v1539
        %v1549 = vmul.f32 %v1531, %v1539
        %v1550 = vmul.f32 %v1532, %v1539
        %v1551 = vmul.f32 %v1533, %v1539
        %v1552 = vmul.f32 %v1534, %v1539
        %v1553 = vmul.f32 %v1535, %v1539
        %v1554 = vmul.f32 %v1536, %v1539
        %v1555 = vmul.f32 %v1537, %v1539
        %v1556 = vadd.f32 %v1506, %v1540
        %v1557 = vadd.f32 %v1507, %v1541
        %v1558 = vadd.f32 %v1508, %v1542
        %v1559 = vadd.f32 %v1509, %v1543
        %v1560 = vadd.f32 %v1510, %v1544
        %v1561 = vadd.f32 %v1511, %v1545
        %v1562 = vadd.f32 %v1512, %v1546
        %v1563 = vadd.f32 %v1513, %v1547
        %v1564 = vadd.f32 %v1514, %v1548
        %v1565 = vadd.f32 %v1515, %v1549
        %v1566 = vadd.f32 %v1516, %v1550
        %v1567 = vadd.f32 %v1517, %v1551
        %v1568 = vadd.f32 %v1518, %v1552
        %v1569 = vadd.f32 %v1519, %v1553
        %v1570 = vadd.f32 %v1520, %v1554
        %v1571 = vadd.f32 %v1521, %v1555
        %v1572 = vld [vmem:[%s1471 + $0x2] sm:$0xff]
        %v1573 = vld [vmem:[%s1471 + $0xa] sm:$0xff]
        %v1574 = vld [vmem:[%s1471 + $0x1a] sm:$0xff]
        %v1575 = vld [vmem:[%s1471 + $0x22] sm:$0xff]
        %v1576 = vld [vmem:[%s1471 + $0x32] sm:$0xff]
        %v1577 = vld [vmem:[%s1471 + $0x3a] sm:$0xff]
        %v1578 = vld [vmem:[%s1471 + $0x4a] sm:$0xff]
        %v1579 = vld [vmem:[%s1471 + $0x52] sm:$0xff]
        %v1580 = vld [vmem:[%s1471 + $0x62] sm:$0xff]
        %v1581 = vld [vmem:[%s1471 + $0x6a] sm:$0xff]
        %v1582 = vld [vmem:[%s1471 + $0x7a] sm:$0xff]
        %v1583 = vld [vmem:[%s1471 + $0x82] sm:$0xff]
        %v1584 = vld [vmem:[%s1471 + $0x92] sm:$0xff]
        %v1585 = vld [vmem:[%s1471 + $0x9a] sm:$0xff]
        %v1586 = vld [vmem:[%s1471 + $0xaa] sm:$0xff]
        %v1587 = vld [vmem:[%s1471 + $0xb2] sm:$0xff]
        %v1588 = vld [vmem:[%s843 + $0x2] sm:$0x1]
        %v1589 = vperm.slane %v1588, 0
        %v1590 = vmul.f32 %v1572, %v1589
        %v1591 = vmul.f32 %v1573, %v1589
        %v1592 = vmul.f32 %v1574, %v1589
        %v1593 = vmul.f32 %v1575, %v1589
        %v1594 = vmul.f32 %v1576, %v1589
        %v1595 = vmul.f32 %v1577, %v1589
        %v1596 = vmul.f32 %v1578, %v1589
        %v1597 = vmul.f32 %v1579, %v1589
        %v1598 = vmul.f32 %v1580, %v1589
        %v1599 = vmul.f32 %v1581, %v1589
        %v1600 = vmul.f32 %v1582, %v1589
        %v1601 = vmul.f32 %v1583, %v1589
        %v1602 = vmul.f32 %v1584, %v1589
        %v1603 = vmul.f32 %v1585, %v1589
        %v1604 = vmul.f32 %v1586, %v1589
        %v1605 = vmul.f32 %v1587, %v1589
        %v1606 = vadd.f32 %v1556, %v1590
        %v1607 = vadd.f32 %v1557, %v1591
        %v1608 = vadd.f32 %v1558, %v1592
        %v1609 = vadd.f32 %v1559, %v1593
        %v1610 = vadd.f32 %v1560, %v1594
        %v1611 = vadd.f32 %v1561, %v1595
        %v1612 = vadd.f32 %v1562, %v1596
        %v1613 = vadd.f32 %v1563, %v1597
        %v1614 = vadd.f32 %v1564, %v1598
        %v1615 = vadd.f32 %v1565, %v1599
        %v1616 = vadd.f32 %v1566, %v1600
        %v1617 = vadd.f32 %v1567, %v1601
        %v1618 = vadd.f32 %v1568, %v1602
        %v1619 = vadd.f32 %v1569, %v1603
        %v1620 = vadd.f32 %v1570, %v1604
        %v1621 = vadd.f32 %v1571, %v1605
        %v1622 = vld [vmem:[%s2] sm:$0x1]
        %v1624 = vperm.slane %v1622, 0
        %v1626 = vmul.f32 %v1606, %v1624
        %v1627 = vmul.f32 %v1607, %v1624
        %v1628 = vmul.f32 %v1608, %v1624
        %v1629 = vmul.f32 %v1609, %v1624
        %v1630 = vmul.f32 %v1610, %v1624
        %v1631 = vmul.f32 %v1611, %v1624
        %v1632 = vmul.f32 %v1612, %v1624
        %v1633 = vmul.f32 %v1613, %v1624
        %v1634 = vmul.f32 %v1614, %v1624
        %v1635 = vmul.f32 %v1615, %v1624
        %v1636 = vmul.f32 %v1616, %v1624
        %v1637 = vmul.f32 %v1617, %v1624
        %v1638 = vmul.f32 %v1618, %v1624
        %v1639 = vmul.f32 %v1619, %v1624
        %v1640 = vmul.f32 %v1620, %v1624
        %v1641 = vmul.f32 %v1621, %v1624
        %v1642 = vld [vmem:[%s3] sm:$0x1]
        %v1644 = vperm.slane %v1642, 0
        %v1646 = vadd.f32 %v1626, %v1644
        %v1647 = vadd.f32 %v1627, %v1644
        %v1648 = vadd.f32 %v1628, %v1644
        %v1649 = vadd.f32 %v1629, %v1644
        %v1650 = vadd.f32 %v1630, %v1644
        %v1651 = vadd.f32 %v1631, %v1644
        %v1652 = vadd.f32 %v1632, %v1644
        %v1653 = vadd.f32 %v1633, %v1644
        %v1654 = vadd.f32 %v1634, %v1644
        %v1655 = vadd.f32 %v1635, %v1644
        %v1656 = vadd.f32 %v1636, %v1644
        %v1657 = vadd.f32 %v1637, %v1644
        %v1658 = vadd.f32 %v1638, %v1644
        %v1659 = vadd.f32 %v1639, %v1644
        %v1660 = vadd.f32 %v1640, %v1644
        %v1661 = vadd.f32 %v1641, %v1644
        %v1662 = vadd.f32 %v1646, 3.0
        %v1663 = vadd.f32 %v1647, 3.0
        %v1664 = vadd.f32 %v1648, 3.0
        %v1665 = vadd.f32 %v1649, 3.0
        %v1666 = vadd.f32 %v1650, 3.0
        %v1667 = vadd.f32 %v1651, 3.0
        %v1668 = vadd.f32 %v1652, 3.0
        %v1669 = vadd.f32 %v1653, 3.0
        %v1670 = vadd.f32 %v1654, 3.0
        %v1671 = vadd.f32 %v1655, 3.0
        %v1672 = vadd.f32 %v1656, 3.0
        %v1673 = vadd.f32 %v1657, 3.0
        %v1674 = vadd.f32 %v1658, 3.0
        %v1675 = vadd.f32 %v1659, 3.0
        %v1676 = vadd.f32 %v1660, 3.0
        %v1677 = vadd.f32 %v1661, 3.0
        %v1678 = vmax.f32 %v1662, 0.0
        %v1679 = vmax.f32 %v1663, 0.0
        %v1680 = vmax.f32 %v1664, 0.0
        %v1681 = vmax.f32 %v1665, 0.0
        %v1682 = vmax.f32 %v1666, 0.0
        %v1683 = vmax.f32 %v1667, 0.0
        %v1684 = vmax.f32 %v1668, 0.0
        %v1685 = vmax.f32 %v1669, 0.0
        %v1686 = vmax.f32 %v1670, 0.0
        %v1687 = vmax.f32 %v1671, 0.0
        %v1688 = vmax.f32 %v1672, 0.0
        %v1689 = vmax.f32 %v1673, 0.0
        %v1690 = vmax.f32 %v1674, 0.0
        %v1691 = vmax.f32 %v1675, 0.0
        %v1692 = vmax.f32 %v1676, 0.0
        %v1693 = vmax.f32 %v1677, 0.0
        %v1694 = vmin.f32 %v1678, 6.0
        %v1695 = vmin.f32 %v1679, 6.0
        %v1696 = vmin.f32 %v1680, 6.0
        %v1697 = vmin.f32 %v1681, 6.0
        %v1698 = vmin.f32 %v1682, 6.0
        %v1699 = vmin.f32 %v1683, 6.0
        %v1700 = vmin.f32 %v1684, 6.0
        %v1701 = vmin.f32 %v1685, 6.0
        %v1702 = vmin.f32 %v1686, 6.0
        %v1703 = vmin.f32 %v1687, 6.0
        %v1704 = vmin.f32 %v1688, 6.0
        %v1705 = vmin.f32 %v1689, 6.0
        %v1706 = vmin.f32 %v1690, 6.0
        %v1707 = vmin.f32 %v1691, 6.0
        %v1708 = vmin.f32 %v1692, 6.0
        %v1709 = vmin.f32 %v1693, 6.0
        %v1710 = vmul.f32 %v1646, %v1694
        %v1711 = vmul.f32 %v1647, %v1695
        %v1712 = vmul.f32 %v1648, %v1696
        %v1713 = vmul.f32 %v1649, %v1697
        %v1714 = vmul.f32 %v1650, %v1698
        %v1715 = vmul.f32 %v1651, %v1699
        %v1716 = vmul.f32 %v1652, %v1700
        %v1717 = vmul.f32 %v1653, %v1701
        %v1718 = vmul.f32 %v1654, %v1702
        %v1719 = vmul.f32 %v1655, %v1703
        %v1720 = vmul.f32 %v1656, %v1704
        %v1721 = vmul.f32 %v1657, %v1705
        %v1722 = vmul.f32 %v1658, %v1706
        %v1723 = vmul.f32 %v1659, %v1707
        %v1724 = vmul.f32 %v1660, %v1708
        %v1725 = vmul.f32 %v1661, %v1709
        %v1726 = vmul.f32 %v1710, 0.16666667
        %v1727 = vmul.f32 %v1711, 0.16666667
        %v1728 = vmul.f32 %v1712, 0.16666667
        %v1729 = vmul.f32 %v1713, 0.16666667
        %v1730 = vmul.f32 %v1714, 0.16666667
        %v1731 = vmul.f32 %v1715, 0.16666667
        %v1732 = vmul.f32 %v1716, 0.16666667
        %v1733 = vmul.f32 %v1717, 0.16666667
        %v1734 = vmul.f32 %v1718, 0.16666667
        %v1735 = vmul.f32 %v1719, 0.16666667
        %v1736 = vmul.f32 %v1720, 0.16666667
        %v1737 = vmul.f32 %v1721, 0.16666667
        %v1738 = vmul.f32 %v1722, 0.16666667
        %v1739 = vmul.f32 %v1723, 0.16666667
        %v1740 = vmul.f32 %v1724, 0.16666667
        %v1741 = vmul.f32 %v1725, 0.16666667
        %v1742 = vsel %vm386, %v1726, 0.0
        %v1743 = vsel %vm386, %v1727, 0.0
        %v1744 = vadd.f32 %v1742, %v1743
        %v1745 = vsel %vm386, %v1728, 0.0
        %v1746 = vadd.f32 %v1744, %v1745
        %v1747 = vsel %vm386, %v1729, 0.0
        %v1748 = vadd.f32 %v1746, %v1747
        %v1749 = vsel %vm386, %v1730, 0.0
        %v1750 = vadd.f32 %v1748, %v1749
        %v1751 = vsel %vm386, %v1731, 0.0
        %v1752 = vadd.f32 %v1750, %v1751
        %v1753 = vsel %vm386, %v1732, 0.0
        %v1754 = vadd.f32 %v1752, %v1753
        %v1755 = vsel %vm386, %v1733, 0.0
        %v1756 = vadd.f32 %v1754, %v1755
        %v1757 = vsel %vm386, %v1734, 0.0
        %v1758 = vadd.f32 %v1756, %v1757
        %v1759 = vsel %vm386, %v1735, 0.0
        %v1760 = vadd.f32 %v1758, %v1759
        %v1761 = vsel %vm386, %v1736, 0.0
        %v1762 = vadd.f32 %v1760, %v1761
        %v1763 = vsel %vm386, %v1737, 0.0
        %v1764 = vadd.f32 %v1762, %v1763
        %v1765 = vsel %vm386, %v1738, 0.0
        %v1766 = vadd.f32 %v1764, %v1765
        %v1767 = vsel %vm386, %v1739, 0.0
        %v1768 = vadd.f32 %v1766, %v1767
        %v1769 = vsel %vm386, %v1740, 0.0
        %v1770 = vadd.f32 %v1768, %v1769
        %v1771 = vsel %vm386, %v1741, 0.0
        %v1772 = vadd.f32 %v1770, %v1771
        %v1773 = vrot.slane %v1772, 4
        %v1774 = vadd.f32 %v1772, %v1773
        %v1775 = vrot.slane %v1774, 2
        %v1776 = vadd.f32 %v1774, %v1775
        %v1777 = vrot.slane %v1776, 1
        %v1778 = vadd.f32 %v1776, %v1777
        %v1779 = vadd.f32 %v1135, %v1778
        %v1780 = vpack.c.bf16 %v1726, %v1726
        %v1781 = vpack.c.bf16 %v1727, %v1727
        %v1782 = vpack.c.bf16 %v1728, %v1728
        %v1783 = vpack.c.bf16 %v1729, %v1729
        %v1784 = vpack.c.bf16 %v1730, %v1730
        %v1785 = vpack.c.bf16 %v1731, %v1731
        %v1786 = vpack.c.bf16 %v1732, %v1732
        %v1787 = vpack.c.bf16 %v1733, %v1733
        %v1788 = vpack.c.bf16 %v1734, %v1734
        %v1789 = vpack.c.bf16 %v1735, %v1735
        %v1790 = vpack.c.bf16 %v1736, %v1736
        %v1791 = vpack.c.bf16 %v1737, %v1737
        %v1792 = vpack.c.bf16 %v1738, %v1738
        %v1793 = vpack.c.bf16 %v1739, %v1739
        %v1794 = vpack.c.bf16 %v1740, %v1740
        %v1795 = vpack.c.bf16 %v1741, %v1741
        %s1796 = scalar_lea.vmem [#allocation3], 64
        %1797 = vst.msk [vmem:[%s1796] sm:$0xf] %vm1152, %v1780
        %1798 = vst.msk [vmem:[%s1796 + $0x4] sm:$0xf] %vm1152, %v1781
        %1799 = vst.msk [vmem:[%s1796 + $0x8] sm:$0xf] %vm1152, %v1782
        %1800 = vst.msk [vmem:[%s1796 + $0xc] sm:$0xf] %vm1152, %v1783
        %1801 = vst.msk [vmem:[%s1796 + $0x10] sm:$0xf] %vm1152, %v1784
        %1802 = vst.msk [vmem:[%s1796 + $0x14] sm:$0xf] %vm1152, %v1785
        %1803 = vst.msk [vmem:[%s1796 + $0x18] sm:$0xf] %vm1152, %v1786
        %1804 = vst.msk [vmem:[%s1796 + $0x1c] sm:$0xf] %vm1152, %v1787
        %1805 = vst.msk [vmem:[%s1796 + $0x20] sm:$0xf] %vm1152, %v1788
        %1806 = vst.msk [vmem:[%s1796 + $0x24] sm:$0xf] %vm1152, %v1789
        %1807 = vst.msk [vmem:[%s1796 + $0x28] sm:$0xf] %vm1152, %v1790
        %1808 = vst.msk [vmem:[%s1796 + $0x2c] sm:$0xf] %vm1152, %v1791
        %1809 = vst.msk [vmem:[%s1796 + $0x30] sm:$0xf] %vm1152, %v1792
        %1810 = vst.msk [vmem:[%s1796 + $0x34] sm:$0xf] %vm1152, %v1793
        %1811 = vst.msk [vmem:[%s1796 + $0x38] sm:$0xf] %vm1152, %v1794
        %1812 = vst.msk [vmem:[%s1796 + $0x3c] sm:$0xf] %vm1152, %v1795
        %v1813 = vmul.f32 %v1779, 0.00390625
        %v1814 = vld [vmem:[%s4] sm:$0x3]
        %v1815 = vmul.f32 %v1814, %v1813
        %v1816 = vsel %vm389, %v1815, 0.0
        %1817 = vadd.xlane.f32.xlu0 %v1816
        %v1818 = vpop.xlane.xlu0 %1817
        %v1819 = vld [vmem:[%s5] sm:$0x1]
        %v1821 = vperm.slane %v1819, 0
        %v1822 = vlaneseq
        %v1823 = vshrl.u32 %v1822, 7
        %1825 = vset.pattern.permute.xlu0 %v1823
        %1826 = vperm.xlu0 %1825, %v1821
        %v1827 = vpop.permute.xlu0 %1826
        %v1829 = vadd.f32 %v1818, %v1827
        %v1830 = vmax.f32 %v1829, 0.0
        %v1831 = vld [vmem:[%s6] sm:$0xff]
        %1833 = vset.pattern.permute.xlu0 0
        %1834 = vperm.xlu0 %1833, %v1830
        %v1835 = vpop.permute.xlu0 %1834
        %v1836 = vlaneseq
        %v1837 = vand.u32 %v1836, 127
        %v1838 = vperm.slane %v1835, %v1837
        %vm1839 = vcmask 1042434
        %v1840 = vsel %vm1839, %v1838, %v1838
        %vm1841 = vcmask 1043459
        %v1842 = vsel %vm1841, %v1838, %v1840
        %vm1843 = vcmask 1044484
        %v1844 = vsel %vm1843, %v1838, %v1842
        %vm1845 = vcmask 1045509
        %v1846 = vsel %vm1845, %v1838, %v1844
        %vm1847 = vcmask 1046534
        %v1848 = vsel %vm1847, %v1838, %v1846
        %vm1849 = vcmask 1047559
        %v1850 = vsel %vm1849, %v1838, %v1848
        %v1852 = vmul.f32 %v1831, %v1850
        %vm1853 = vcmask 15360
        %v1854 = vsel %vm1853, %v1852, 0.0
        %1855 = vadd.xlane.f32.xlu0 %v1854
        %v1856 = vpop.xlane.xlu0 %1855
        %v1857 = vld [vmem:[%s7] sm:$0x1]
        %v1859 = vperm.slane %v1857, 0
        %v1860 = vlaneseq
        %v1861 = vshrl.u32 %v1860, 7
        %1863 = vset.pattern.permute.xlu0 %v1861
        %1864 = vperm.xlu0 %1863, %v1859
        %v1865 = vpop.permute.xlu0 %1864
        %v1867 = vadd.f32 %v1856, %v1865
        %v1868 = vadd.f32 %v1867, 3.0
        %v1869 = vmax.f32 %v1868, 0.0
        %v1870 = vmin.f32 %v1869, 6.0
        %v1871 = vmul.f32 %v1870, 0.16666667
        %v1872 = vld [vmem:[%s8] sm:$0xf]
        %v1873 = vunpack.c.l.bf16 %v1872
        %1875 = vset.pattern.permute.xlu0 0
        %1876 = vperm.xlu0 %1875, %v1871
        %v1877 = vpop.permute.xlu0 %1876
        %v1879 = vmul.f32 %v1873, %v1877
        %v1880 = vpack.c.bf16 %v1879, %v1879
        %v1881 = vld [vmem:[#allocation3] sm:$0xf]
        %v1882 = vld [vmem:[#allocation3 + $0x4] sm:$0xf]
        %v1883 = vld [vmem:[#allocation3 + $0x8] sm:$0xf]
        %v1884 = vld [vmem:[#allocation3 + $0xc] sm:$0xf]
        %v1885 = vld [vmem:[#allocation3 + $0x10] sm:$0xf]
        %v1886 = vld [vmem:[#allocation3 + $0x14] sm:$0xf]
        %v1887 = vld [vmem:[#allocation3 + $0x18] sm:$0xf]
        %v1888 = vld [vmem:[#allocation3 + $0x1c] sm:$0xf]
        %v1889 = vld [vmem:[#allocation3 + $0x20] sm:$0xf]
        %v1890 = vld [vmem:[#allocation3 + $0x24] sm:$0xf]
        %v1891 = vld [vmem:[#allocation3 + $0x28] sm:$0xf]
        %v1892 = vld [vmem:[#allocation3 + $0x2c] sm:$0xf]
        %v1893 = vld [vmem:[#allocation3 + $0x30] sm:$0xf]
        %v1894 = vld [vmem:[#allocation3 + $0x34] sm:$0xf]
        %v1895 = vld [vmem:[#allocation3 + $0x38] sm:$0xf]
        %v1896 = vld [vmem:[#allocation3 + $0x3c] sm:$0xf]
        %v1897 = vld [vmem:[#allocation3 + $0x40] sm:$0xf]
        %v1898 = vld [vmem:[#allocation3 + $0x44] sm:$0xf]
        %v1899 = vld [vmem:[#allocation3 + $0x48] sm:$0xf]
        %v1900 = vld [vmem:[#allocation3 + $0x4c] sm:$0xf]
        %v1901 = vld [vmem:[#allocation3 + $0x50] sm:$0xf]
        %v1902 = vld [vmem:[#allocation3 + $0x54] sm:$0xf]
        %v1903 = vld [vmem:[#allocation3 + $0x58] sm:$0xf]
        %v1904 = vld [vmem:[#allocation3 + $0x5c] sm:$0xf]
        %v1905 = vld [vmem:[#allocation3 + $0x60] sm:$0xf]
        %v1906 = vld [vmem:[#allocation3 + $0x64] sm:$0xf]
        %v1907 = vld [vmem:[#allocation3 + $0x68] sm:$0xf]
        %v1908 = vld [vmem:[#allocation3 + $0x6c] sm:$0xf]
        %v1909 = vld [vmem:[#allocation3 + $0x70] sm:$0xf]
        %v1910 = vld [vmem:[#allocation3 + $0x74] sm:$0xf]
        %v1911 = vld [vmem:[#allocation3 + $0x78] sm:$0xf]
        %v1912 = vld [vmem:[#allocation3 + $0x7c] sm:$0xf]
        %v1945 = vunpack.c.l.b16 %v1881
        %v1946 = vunpack.c.l.b16 %v1882
        %v1947 = vunpack.c.l.b16 %v1883
        %v1948 = vunpack.c.l.b16 %v1884
        %v1949 = vunpack.c.l.b16 %v1885
        %v1950 = vunpack.c.l.b16 %v1886
        %v1951 = vunpack.c.l.b16 %v1887
        %v1952 = vunpack.c.l.b16 %v1888
        %v1953 = vunpack.c.l.b16 %v1889
        %v1954 = vunpack.c.l.b16 %v1890
        %v1955 = vunpack.c.l.b16 %v1891
        %v1956 = vunpack.c.l.b16 %v1892
        %v1957 = vunpack.c.l.b16 %v1893
        %v1958 = vunpack.c.l.b16 %v1894
        %v1959 = vunpack.c.l.b16 %v1895
        %v1960 = vunpack.c.l.b16 %v1896
        %v1961 = vunpack.c.l.b16 %v1897
        %v1962 = vunpack.c.l.b16 %v1898
        %v1963 = vunpack.c.l.b16 %v1899
        %v1964 = vunpack.c.l.b16 %v1900
        %v1965 = vunpack.c.l.b16 %v1901
        %v1966 = vunpack.c.l.b16 %v1902
        %v1967 = vunpack.c.l.b16 %v1903
        %v1968 = vunpack.c.l.b16 %v1904
        %v1969 = vunpack.c.l.b16 %v1905
        %v1970 = vunpack.c.l.b16 %v1906
        %v1971 = vunpack.c.l.b16 %v1907
        %v1972 = vunpack.c.l.b16 %v1908
        %v1973 = vunpack.c.l.b16 %v1909
        %v1974 = vunpack.c.l.b16 %v1910
        %v1975 = vunpack.c.l.b16 %v1911
        %v1976 = vunpack.c.l.b16 %v1912
        %v1977 = vpack.c.b16 %v1946, %v1945
        %v1978 = vpack.c.b16 %v1948, %v1947
        %v1979 = vpack.c.b16 %v1950, %v1949
        %v1980 = vpack.c.b16 %v1952, %v1951
        %v1981 = vpack.c.b16 %v1954, %v1953
        %v1982 = vpack.c.b16 %v1956, %v1955
        %v1983 = vpack.c.b16 %v1958, %v1957
        %v1984 = vpack.c.b16 %v1960, %v1959
        %v1985 = vpack.c.b16 %v1962, %v1961
        %v1986 = vpack.c.b16 %v1964, %v1963
        %v1987 = vpack.c.b16 %v1966, %v1965
        %v1988 = vpack.c.b16 %v1968, %v1967
        %v1989 = vpack.c.b16 %v1970, %v1969
        %v1990 = vpack.c.b16 %v1972, %v1971
        %v1991 = vpack.c.b16 %v1974, %v1973
        %v1992 = vpack.c.b16 %v1976, %v1975
        %v1994 = vsel %vm386, %v1977, 0
        %v1997 = vsel %vm386, %v1978, 0
        %v2000 = vsel %vm386, %v1979, 0
        %v2003 = vsel %vm386, %v1980, 0
        %v2006 = vsel %vm386, %v1981, 0
        %v2009 = vsel %vm386, %v1982, 0
        %v2012 = vsel %vm386, %v1983, 0
        %v2015 = vsel %vm386, %v1984, 0
        %v2018 = vsel %vm386, %v1985, 0
        %v2021 = vsel %vm386, %v1986, 0
        %v2024 = vsel %vm386, %v1987, 0
        %v2027 = vsel %vm386, %v1988, 0
        %v2030 = vsel %vm386, %v1989, 0
        %v2033 = vsel %vm386, %v1990, 0
        %v2036 = vsel %vm386, %v1991, 0
        %v2039 = vsel %vm386, %v1992, 0
        %vm2041 = vcmask 1043456
        %v2043 = vsel %vm2041, %v1880, 0
        %2045 = vmatpush.bf16.msra.mxu0 0
        %2046 = vmatpush.bf16.msra.mxu0 0
        %2047 = vmatpush.bf16.msra.mxu0 0
        %2048 = vmatpush.bf16.msra.mxu0 0
        %2049 = vmatpush.bf16.msra.mxu0 0
        %2050 = vmatpush.bf16.msra.mxu0 0
        %2051 = vmatpush.bf16.msra.mxu0 0
        %2052 = vmatpush.bf16.msra.mxu0 %v2043
        %2053 = vmatmul.bf16.gmra.mxu0 %v1994
        %v2054 = vpop.f32.mrf.mxu0
        %v2055 = vadd.f32 0.0, %v2054
        %v2056 = vpop.f32.mrf.mxu0
        %v2057 = vadd.f32 0.0, %v2056
        %2058 = vmatmul.bf16.gmra.mxu0 %v1997
        %v2059 = vpop.f32.mrf.mxu0
        %v2060 = vadd.f32 0.0, %v2059
        %v2061 = vpop.f32.mrf.mxu0
        %v2062 = vadd.f32 0.0, %v2061
        %2063 = vmatmul.bf16.gmra.mxu0 %v2000
        %v2064 = vpop.f32.mrf.mxu0
        %v2065 = vadd.f32 0.0, %v2064
        %v2066 = vpop.f32.mrf.mxu0
        %v2067 = vadd.f32 0.0, %v2066
        %2068 = vmatmul.bf16.gmra.mxu0 %v2003
        %v2069 = vpop.f32.mrf.mxu0
        %v2070 = vadd.f32 0.0, %v2069
        %v2071 = vpop.f32.mrf.mxu0
        %v2072 = vadd.f32 0.0, %v2071
        %2073 = vmatmul.bf16.gmra.mxu0 %v2006
        %v2074 = vpop.f32.mrf.mxu0
        %v2075 = vadd.f32 0.0, %v2074
        %v2076 = vpop.f32.mrf.mxu0
        %v2077 = vadd.f32 0.0, %v2076
        %2078 = vmatmul.bf16.gmra.mxu0 %v2009
        %v2079 = vpop.f32.mrf.mxu0
        %v2080 = vadd.f32 0.0, %v2079
        %v2081 = vpop.f32.mrf.mxu0
        %v2082 = vadd.f32 0.0, %v2081
        %2083 = vmatmul.bf16.gmra.mxu0 %v2012
        %v2084 = vpop.f32.mrf.mxu0
        %v2085 = vadd.f32 0.0, %v2084
        %v2086 = vpop.f32.mrf.mxu0
        %v2087 = vadd.f32 0.0, %v2086
        %2088 = vmatmul.bf16.gmra.mxu0 %v2015
        %v2089 = vpop.f32.mrf.mxu0
        %v2090 = vadd.f32 0.0, %v2089
        %v2091 = vpop.f32.mrf.mxu0
        %v2092 = vadd.f32 0.0, %v2091
        %2093 = vmatmul.bf16.gmra.mxu0 %v2018
        %v2094 = vpop.f32.mrf.mxu0
        %v2095 = vadd.f32 0.0, %v2094
        %v2096 = vpop.f32.mrf.mxu0
        %v2097 = vadd.f32 0.0, %v2096
        %2098 = vmatmul.bf16.gmra.mxu0 %v2021
        %v2099 = vpop.f32.mrf.mxu0
        %v2100 = vadd.f32 0.0, %v2099
        %v2101 = vpop.f32.mrf.mxu0
        %v2102 = vadd.f32 0.0, %v2101
        %2103 = vmatmul.bf16.gmra.mxu0 %v2024
        %v2104 = vpop.f32.mrf.mxu0
        %v2105 = vadd.f32 0.0, %v2104
        %v2106 = vpop.f32.mrf.mxu0
        %v2107 = vadd.f32 0.0, %v2106
        %2108 = vmatmul.bf16.gmra.mxu0 %v2027
        %v2109 = vpop.f32.mrf.mxu0
        %v2110 = vadd.f32 0.0, %v2109
        %v2111 = vpop.f32.mrf.mxu0
        %v2112 = vadd.f32 0.0, %v2111
        %2113 = vmatmul.bf16.gmra.mxu0 %v2030
        %v2114 = vpop.f32.mrf.mxu0
        %v2115 = vadd.f32 0.0, %v2114
        %v2116 = vpop.f32.mrf.mxu0
        %v2117 = vadd.f32 0.0, %v2116
        %2118 = vmatmul.bf16.gmra.mxu0 %v2033
        %v2119 = vpop.f32.mrf.mxu0
        %v2120 = vadd.f32 0.0, %v2119
        %v2121 = vpop.f32.mrf.mxu0
        %v2122 = vadd.f32 0.0, %v2121
        %2123 = vmatmul.bf16.gmra.mxu0 %v2036
        %v2124 = vpop.f32.mrf.mxu0
        %v2125 = vadd.f32 0.0, %v2124
        %v2126 = vpop.f32.mrf.mxu0
        %v2127 = vadd.f32 0.0, %v2126
        %2128 = vmatmul.bf16.gmra.mxu0 %v2039
        %v2129 = vpop.f32.mrf.mxu0
        %v2130 = vadd.f32 0.0, %v2129
        %v2131 = vpop.f32.mrf.mxu0
        %v2132 = vadd.f32 0.0, %v2131
        %2133 = vdwg.mxu0
        %v2134 = vld [vmem:[%s9] sm:$0x1]
        %v2136 = vperm.slane %v2134, 0
        %v2138 = vmul.f32 %v2055, %v2136
        %v2139 = vmul.f32 %v2057, %v2136
        %v2140 = vmul.f32 %v2060, %v2136
        %v2141 = vmul.f32 %v2062, %v2136
        %v2142 = vmul.f32 %v2065, %v2136
        %v2143 = vmul.f32 %v2067, %v2136
        %v2144 = vmul.f32 %v2070, %v2136
        %v2145 = vmul.f32 %v2072, %v2136
        %v2146 = vmul.f32 %v2075, %v2136
        %v2147 = vmul.f32 %v2077, %v2136
        %v2148 = vmul.f32 %v2080, %v2136
        %v2149 = vmul.f32 %v2082, %v2136
        %v2150 = vmul.f32 %v2085, %v2136
        %v2151 = vmul.f32 %v2087, %v2136
        %v2152 = vmul.f32 %v2090, %v2136
        %v2153 = vmul.f32 %v2092, %v2136
        %v2154 = vmul.f32 %v2095, %v2136
        %v2155 = vmul.f32 %v2097, %v2136
        %v2156 = vmul.f32 %v2100, %v2136
        %v2157 = vmul.f32 %v2102, %v2136
        %v2158 = vmul.f32 %v2105, %v2136
        %v2159 = vmul.f32 %v2107, %v2136
        %v2160 = vmul.f32 %v2110, %v2136
        %v2161 = vmul.f32 %v2112, %v2136
        %v2162 = vmul.f32 %v2115, %v2136
        %v2163 = vmul.f32 %v2117, %v2136
        %v2164 = vmul.f32 %v2120, %v2136
        %v2165 = vmul.f32 %v2122, %v2136
        %v2166 = vmul.f32 %v2125, %v2136
        %v2167 = vmul.f32 %v2127, %v2136
        %v2168 = vmul.f32 %v2130, %v2136
        %v2169 = vmul.f32 %v2132, %v2136
        %v2170 = vld [vmem:[%s10] sm:$0x1]
        %v2172 = vperm.slane %v2170, 0
        %v2174 = vadd.f32 %v2138, %v2172
        %v2175 = vadd.f32 %v2139, %v2172
        %v2176 = vadd.f32 %v2140, %v2172
        %v2177 = vadd.f32 %v2141, %v2172
        %v2178 = vadd.f32 %v2142, %v2172
        %v2179 = vadd.f32 %v2143, %v2172
        %v2180 = vadd.f32 %v2144, %v2172
        %v2181 = vadd.f32 %v2145, %v2172
        %v2182 = vadd.f32 %v2146, %v2172
        %v2183 = vadd.f32 %v2147, %v2172
        %v2184 = vadd.f32 %v2148, %v2172
        %v2185 = vadd.f32 %v2149, %v2172
        %v2186 = vadd.f32 %v2150, %v2172
        %v2187 = vadd.f32 %v2151, %v2172
        %v2188 = vadd.f32 %v2152, %v2172
        %v2189 = vadd.f32 %v2153, %v2172
        %v2190 = vadd.f32 %v2154, %v2172
        %v2191 = vadd.f32 %v2155, %v2172
        %v2192 = vadd.f32 %v2156, %v2172
        %v2193 = vadd.f32 %v2157, %v2172
        %v2194 = vadd.f32 %v2158, %v2172
        %v2195 = vadd.f32 %v2159, %v2172
        %v2196 = vadd.f32 %v2160, %v2172
        %v2197 = vadd.f32 %v2161, %v2172
        %v2198 = vadd.f32 %v2162, %v2172
        %v2199 = vadd.f32 %v2163, %v2172
        %v2200 = vadd.f32 %v2164, %v2172
        %v2201 = vadd.f32 %v2165, %v2172
        %v2202 = vadd.f32 %v2166, %v2172
        %v2203 = vadd.f32 %v2167, %v2172
        %v2204 = vadd.f32 %v2168, %v2172
        %v2205 = vadd.f32 %v2169, %v2172
        %v2206 = vadd.f32 %v2174, 3.0
        %v2207 = vadd.f32 %v2175, 3.0
        %v2208 = vadd.f32 %v2176, 3.0
        %v2209 = vadd.f32 %v2177, 3.0
        %v2210 = vadd.f32 %v2178, 3.0
        %v2211 = vadd.f32 %v2179, 3.0
        %v2212 = vadd.f32 %v2180, 3.0
        %v2213 = vadd.f32 %v2181, 3.0
        %v2214 = vadd.f32 %v2182, 3.0
        %v2215 = vadd.f32 %v2183, 3.0
        %v2216 = vadd.f32 %v2184, 3.0
        %v2217 = vadd.f32 %v2185, 3.0
        %v2218 = vadd.f32 %v2186, 3.0
        %v2219 = vadd.f32 %v2187, 3.0
        %v2220 = vadd.f32 %v2188, 3.0
        %v2221 = vadd.f32 %v2189, 3.0
        %v2222 = vadd.f32 %v2190, 3.0
        %v2223 = vadd.f32 %v2191, 3.0
        %v2224 = vadd.f32 %v2192, 3.0
        %v2225 = vadd.f32 %v2193, 3.0
        %v2226 = vadd.f32 %v2194, 3.0
        %v2227 = vadd.f32 %v2195, 3.0
        %v2228 = vadd.f32 %v2196, 3.0
        %v2229 = vadd.f32 %v2197, 3.0
        %v2230 = vadd.f32 %v2198, 3.0
        %v2231 = vadd.f32 %v2199, 3.0
        %v2232 = vadd.f32 %v2200, 3.0
        %v2233 = vadd.f32 %v2201, 3.0
        %v2234 = vadd.f32 %v2202, 3.0
        %v2235 = vadd.f32 %v2203, 3.0
        %v2236 = vadd.f32 %v2204, 3.0
        %v2237 = vadd.f32 %v2205, 3.0
        %v2238 = vmax.f32 %v2206, 0.0
        %v2239 = vmax.f32 %v2207, 0.0
        %v2240 = vmax.f32 %v2208, 0.0
        %v2241 = vmax.f32 %v2209, 0.0
        %v2242 = vmax.f32 %v2210, 0.0
        %v2243 = vmax.f32 %v2211, 0.0
        %v2244 = vmax.f32 %v2212, 0.0
        %v2245 = vmax.f32 %v2213, 0.0
        %v2246 = vmax.f32 %v2214, 0.0
        %v2247 = vmax.f32 %v2215, 0.0
        %v2248 = vmax.f32 %v2216, 0.0
        %v2249 = vmax.f32 %v2217, 0.0
        %v2250 = vmax.f32 %v2218, 0.0
        %v2251 = vmax.f32 %v2219, 0.0
        %v2252 = vmax.f32 %v2220, 0.0
        %v2253 = vmax.f32 %v2221, 0.0
        %v2254 = vmax.f32 %v2222, 0.0
        %v2255 = vmax.f32 %v2223, 0.0
        %v2256 = vmax.f32 %v2224, 0.0
        %v2257 = vmax.f32 %v2225, 0.0
        %v2258 = vmax.f32 %v2226, 0.0
        %v2259 = vmax.f32 %v2227, 0.0
        %v2260 = vmax.f32 %v2228, 0.0
        %v2261 = vmax.f32 %v2229, 0.0
        %v2262 = vmax.f32 %v2230, 0.0
        %v2263 = vmax.f32 %v2231, 0.0
        %v2264 = vmax.f32 %v2232, 0.0
        %v2265 = vmax.f32 %v2233, 0.0
        %v2266 = vmax.f32 %v2234, 0.0
        %v2267 = vmax.f32 %v2235, 0.0
        %v2268 = vmax.f32 %v2236, 0.0
        %v2269 = vmax.f32 %v2237, 0.0
        %v2270 = vmin.f32 %v2238, 6.0
        %v2271 = vmin.f32 %v2239, 6.0
        %v2272 = vmin.f32 %v2240, 6.0
        %v2273 = vmin.f32 %v2241, 6.0
        %v2274 = vmin.f32 %v2242, 6.0
        %v2275 = vmin.f32 %v2243, 6.0
        %v2276 = vmin.f32 %v2244, 6.0
        %v2277 = vmin.f32 %v2245, 6.0
        %v2278 = vmin.f32 %v2246, 6.0
        %v2279 = vmin.f32 %v2247, 6.0
        %v2280 = vmin.f32 %v2248, 6.0
        %v2281 = vmin.f32 %v2249, 6.0
        %v2282 = vmin.f32 %v2250, 6.0
        %v2283 = vmin.f32 %v2251, 6.0
        %v2284 = vmin.f32 %v2252, 6.0
        %v2285 = vmin.f32 %v2253, 6.0
        %v2286 = vmin.f32 %v2254, 6.0
        %v2287 = vmin.f32 %v2255, 6.0
        %v2288 = vmin.f32 %v2256, 6.0
        %v2289 = vmin.f32 %v2257, 6.0
        %v2290 = vmin.f32 %v2258, 6.0
        %v2291 = vmin.f32 %v2259, 6.0
        %v2292 = vmin.f32 %v2260, 6.0
        %v2293 = vmin.f32 %v2261, 6.0
        %v2294 = vmin.f32 %v2262, 6.0
        %v2295 = vmin.f32 %v2263, 6.0
        %v2296 = vmin.f32 %v2264, 6.0
        %v2297 = vmin.f32 %v2265, 6.0
        %v2298 = vmin.f32 %v2266, 6.0
        %v2299 = vmin.f32 %v2267, 6.0
        %v2300 = vmin.f32 %v2268, 6.0
        %v2301 = vmin.f32 %v2269, 6.0
        %v2302 = vmul.f32 %v2174, %v2270
        %v2303 = vmul.f32 %v2175, %v2271
        %v2304 = vmul.f32 %v2176, %v2272
        %v2305 = vmul.f32 %v2177, %v2273
        %v2306 = vmul.f32 %v2178, %v2274
        %v2307 = vmul.f32 %v2179, %v2275
        %v2308 = vmul.f32 %v2180, %v2276
        %v2309 = vmul.f32 %v2181, %v2277
        %v2310 = vmul.f32 %v2182, %v2278
        %v2311 = vmul.f32 %v2183, %v2279
        %v2312 = vmul.f32 %v2184, %v2280
        %v2313 = vmul.f32 %v2185, %v2281
        %v2314 = vmul.f32 %v2186, %v2282
        %v2315 = vmul.f32 %v2187, %v2283
        %v2316 = vmul.f32 %v2188, %v2284
        %v2317 = vmul.f32 %v2189, %v2285
        %v2318 = vmul.f32 %v2190, %v2286
        %v2319 = vmul.f32 %v2191, %v2287
        %v2320 = vmul.f32 %v2192, %v2288
        %v2321 = vmul.f32 %v2193, %v2289
        %v2322 = vmul.f32 %v2194, %v2290
        %v2323 = vmul.f32 %v2195, %v2291
        %v2324 = vmul.f32 %v2196, %v2292
        %v2325 = vmul.f32 %v2197, %v2293
        %v2326 = vmul.f32 %v2198, %v2294
        %v2327 = vmul.f32 %v2199, %v2295
        %v2328 = vmul.f32 %v2200, %v2296
        %v2329 = vmul.f32 %v2201, %v2297
        %v2330 = vmul.f32 %v2202, %v2298
        %v2331 = vmul.f32 %v2203, %v2299
        %v2332 = vmul.f32 %v2204, %v2300
        %v2333 = vmul.f32 %v2205, %v2301
        %v2334 = vmul.f32 %v2302, 0.16666667
        %v2335 = vmul.f32 %v2303, 0.16666667
        %v2336 = vmul.f32 %v2304, 0.16666667
        %v2337 = vmul.f32 %v2305, 0.16666667
        %v2338 = vmul.f32 %v2306, 0.16666667
        %v2339 = vmul.f32 %v2307, 0.16666667
        %v2340 = vmul.f32 %v2308, 0.16666667
        %v2341 = vmul.f32 %v2309, 0.16666667
        %v2342 = vmul.f32 %v2310, 0.16666667
        %v2343 = vmul.f32 %v2311, 0.16666667
        %v2344 = vmul.f32 %v2312, 0.16666667
        %v2345 = vmul.f32 %v2313, 0.16666667
        %v2346 = vmul.f32 %v2314, 0.16666667
        %v2347 = vmul.f32 %v2315, 0.16666667
        %v2348 = vmul.f32 %v2316, 0.16666667
        %v2349 = vmul.f32 %v2317, 0.16666667
        %v2350 = vmul.f32 %v2318, 0.16666667
        %v2351 = vmul.f32 %v2319, 0.16666667
        %v2352 = vmul.f32 %v2320, 0.16666667
        %v2353 = vmul.f32 %v2321, 0.16666667
        %v2354 = vmul.f32 %v2322, 0.16666667
        %v2355 = vmul.f32 %v2323, 0.16666667
        %v2356 = vmul.f32 %v2324, 0.16666667
        %v2357 = vmul.f32 %v2325, 0.16666667
        %v2358 = vmul.f32 %v2326, 0.16666667
        %v2359 = vmul.f32 %v2327, 0.16666667
        %v2360 = vmul.f32 %v2328, 0.16666667
        %v2361 = vmul.f32 %v2329, 0.16666667
        %v2362 = vmul.f32 %v2330, 0.16666667
        %v2363 = vmul.f32 %v2331, 0.16666667
        %v2364 = vmul.f32 %v2332, 0.16666667
        %v2365 = vmul.f32 %v2333, 0.16666667
        %2366 = vxpose.xlu0.b32.start [1/16] %v2334, 128
        %2367 = vxpose.xlu0.b32.cont [2/16] %v2335, 128
        %2368 = vxpose.xlu0.b32.cont [3/16] %v2336, 128
        %2369 = vxpose.xlu0.b32.cont [4/16] %v2337, 128
        %2370 = vxpose.xlu0.b32.cont [5/16] %v2338, 128
        %2371 = vxpose.xlu0.b32.cont [6/16] %v2339, 128
        %2372 = vxpose.xlu0.b32.cont [7/16] %v2340, 128
        %2373 = vxpose.xlu0.b32.cont [8/16] %v2341, 128
        %2374 = vxpose.xlu0.b32.cont [9/16] %v2342, 128
        %2375 = vxpose.xlu0.b32.cont [10/16] %v2343, 128
        %2376 = vxpose.xlu0.b32.cont [11/16] %v2344, 128
        %2377 = vxpose.xlu0.b32.cont [12/16] %v2345, 128
        %2378 = vxpose.xlu0.b32.cont [13/16] %v2346, 128
        %2379 = vxpose.xlu0.b32.cont [14/16] %v2347, 128
        %2380 = vxpose.xlu0.b32.cont [15/16] %v2348, 128
        %2381 = vxpose.xlu0.b32.end [16/16] %v2349, 128
        %v2382 = vpop.trf.xlu0
        %v2383 = vpop.trf.xlu0
        %v2384 = vpop.trf.xlu0
        %v2385 = vpop.trf.xlu0
        %v2386 = vpop.trf.xlu0
        %v2387 = vpop.trf.xlu0
        %v2388 = vpop.trf.xlu0
        %v2389 = vpop.trf.xlu0
        %v2390 = vpop.trf.xlu0
        %v2391 = vpop.trf.xlu0
        %v2392 = vpop.trf.xlu0
        %v2393 = vpop.trf.xlu0
        %v2394 = vpop.trf.xlu0
        %v2395 = vpop.trf.xlu0
        %v2396 = vpop.trf.xlu0
        %v2397 = vpop.trf.xlu0
        %2398 = vxpose.xlu0.b32.start [1/16] %v2350, 128
        %2399 = vxpose.xlu0.b32.cont [2/16] %v2351, 128
        %2400 = vxpose.xlu0.b32.cont [3/16] %v2352, 128
        %2401 = vxpose.xlu0.b32.cont [4/16] %v2353, 128
        %2402 = vxpose.xlu0.b32.cont [5/16] %v2354, 128
        %2403 = vxpose.xlu0.b32.cont [6/16] %v2355, 128
        %2404 = vxpose.xlu0.b32.cont [7/16] %v2356, 128
        %2405 = vxpose.xlu0.b32.cont [8/16] %v2357, 128
        %2406 = vxpose.xlu0.b32.cont [9/16] %v2358, 128
        %2407 = vxpose.xlu0.b32.cont [10/16] %v2359, 128
        %2408 = vxpose.xlu0.b32.cont [11/16] %v2360, 128
        %2409 = vxpose.xlu0.b32.cont [12/16] %v2361, 128
        %2410 = vxpose.xlu0.b32.cont [13/16] %v2362, 128
        %2411 = vxpose.xlu0.b32.cont [14/16] %v2363, 128
        %2412 = vxpose.xlu0.b32.cont [15/16] %v2364, 128
        %2413 = vxpose.xlu0.b32.end [16/16] %v2365, 128
        %v2414 = vpop.trf.xlu0
        %v2415 = vpop.trf.xlu0
        %v2416 = vpop.trf.xlu0
        %v2417 = vpop.trf.xlu0
        %v2418 = vpop.trf.xlu0
        %v2419 = vpop.trf.xlu0
        %v2420 = vpop.trf.xlu0
        %v2421 = vpop.trf.xlu0
        %v2422 = vpop.trf.xlu0
        %v2423 = vpop.trf.xlu0
        %v2424 = vpop.trf.xlu0
        %v2425 = vpop.trf.xlu0
        %v2426 = vpop.trf.xlu0
        %v2427 = vpop.trf.xlu0
        %v2428 = vpop.trf.xlu0
        %v2429 = vpop.trf.xlu0
        %v2430 = vpack.c.bf16 %v2414, %v2382
        %v2431 = vpack.c.bf16 %v2415, %v2383
        %2432 = vst [vmem:[%s379] sm:$0xff] %v2430
        %2433 = vst [vmem:[%s379 + $0x8] sm:$0xff] %v2431
        %s2434 = sand.u32 %s269, 1
        %s2435 = scalar_lea.sflag [#allocation5], %s2434
        %s2436 = sand.u32 %s269, 1
        %s2437 = smul.addr %s2436, 16
        %s2438 = scalar_lea.vmem [#allocation4], %s2437
        // Predicated region
        $region65: #{tpu_custom_call.1} parent=63 // pred_check
          %p2439 = pneg %p279
        $region66: #{tpu_custom_call.1} parent=63 // pred_check_branch
          %2441 = sbr.rel (%p2439) target = $region68
        $region67: #{tpu_custom_call.1} parent=63 // pred_region
          %2443 = vsyncadd %s2435, 0
          %s2444 = smul.addr %s25, 4
          %s2445 = smul.addr %s2444, 4
          %s2446 = scalar_lea.hbm %s11, %s2445
          %s2447 = sshll.u32 %s2438, 4
          %s2448 = int_to_ptr.vmem [resolvable:$true] %s2447
          %s2449 = sshll.u32 %s2446, 4
          %s2450 = int_to_ptr.hbm [resolvable:$true] %s2449
          %2455 = dma.vmem_to_hbm [thread:$0]  %s2448, 256, %s2450, %s2435, 128, 128, 8
        $region68: #{tpu_custom_call.1} parent=63 // pred_fallthru
          _
      $region64: #{tpu_custom_call.1} parent=5 // pred_fallthru
        _
      %p2456 = scmp.le.s32.totalorder 2, %s20
      // Predicated region
      $region69: #{tpu_custom_call.1} parent=5 // pred_check
        %p2457 = pneg %p2456
      $region70: #{tpu_custom_call.1} parent=5 // pred_check_branch
        %2459 = sbr.rel (%p2457) target = $region72
      $region71: #{tpu_custom_call.1} parent=5 // pred_region
        %s2460 = ssub.s32 %s20, 2
        // Predicated region
        $region73: #{tpu_custom_call.1} parent=71 // pred_check
          %p2461 = pneg %p285
        $region74: #{tpu_custom_call.1} parent=71 // pred_check_branch
          %2463 = sbr.rel (%p2461) target = $region76
        $region75: #{tpu_custom_call.1} parent=71 // pred_region
          %s2464 = sand.u32 %s270, 1
          %s2465 = scalar_lea.sflag [#allocation5], %s2464
          %s2466 = sand.u32 %s270, 1
          %s2467 = smul.addr %s2466, 16
          %s2468 = scalar_lea.vmem [#allocation4], %s2467
          %2470 = dma.done %s2465, 256
        $region76: #{tpu_custom_call.1} parent=71 // pred_fallthru
          _
      $region72: #{tpu_custom_call.1} parent=5 // pred_fallthru
        _
    $region6: #{tpu_custom_call.1} parent=1 // loop_footer
      %s24 = sadd.s32 1, %s20
    $region7: #{tpu_custom_call.1} parent=1 // loop_footer_branch
      %19 = sbr.rel target = $region3
    $region8: #{tpu_custom_call.1} parent=1 // loop_exit
      _
    %2471 = vsyncpa [#allocation5], 1
    %s2472 = scalar_lea.sflag [#allocation5], 1
    %2473 = vsyncpa %s2472, 1

</llo_original>
